<compile_context>
chip_gen: v7x
topology: tpu7x:2x2x1
jax: 0.10.0
libtpu: 0.0.40
codegen_flags: <defaults>
</compile_context>

<pallas_src>
import functools

import jax
import jax.numpy as jnp
from jax.experimental import pallas as pl
from jax.experimental.pallas import tpu as pltpu

_BN_EPS = 1e-5
_LANE = 128


def _round_up(x, m):
    return ((x + m - 1) // m) * m


# ---------------------------------------------------------------------------
# Kernels
# ---------------------------------------------------------------------------
def _mm_stats_kernel(x_ref, w_ref, y_ref, sum_ref, sq_ref):
    """y_tile = x_tile @ w (bf16 MXU, f32 acc); accumulate per-channel sum/sumsq."""
    i = pl.program_id(0)
    y = jnp.dot(x_ref[...], w_ref[...], preferred_element_type=jnp.float32)
    y_ref[...] = y

    @pl.when(i == 0)
    def _():
        sum_ref[...] = jnp.zeros_like(sum_ref)
        sq_ref[...] = jnp.zeros_like(sq_ref)

    sum_ref[...] += jnp.sum(y, axis=0, keepdims=True)
    sq_ref[...] += jnp.sum(y * y, axis=0, keepdims=True)


def _bn_relu_conv3x3_stats_kernel(xp_ref, scale_ref, shift_ref, mask_ref, w_ref,
                                  y_ref, sum_ref, sq_ref, *, H, W, C):
    """Fused per-image: BN1-apply + ReLU on the spatially padded pre-BN block
    (halo re-zeroed with a static mask), then 3x3 conv (stride=1) via 9
    accumulated MXU matmuls from in-kernel shifted slices; accumulate BN2 stats.
    """
    n = pl.program_id(0)
    xp = xp_ref[0]                                        # (H+2, W+2, C) f32, pre-BN
    a = jnp.maximum(xp * scale_ref[...] + shift_ref[...], 0.0)
    a = (a * mask_ref[...]).astype(jnp.bfloat16)          # zero the 1-px halo

    acc = jnp.zeros((H * W, C), jnp.float32)
    for kh in range(3):
        for kw in range(3):
            patch = a[kh:kh + H, kw:kw + W, :].reshape(H * W, C)
            acc = acc + jnp.dot(patch, w_ref[kh * 3 + kw],
                                preferred_element_type=jnp.float32)
    y_ref[0] = acc

    @pl.when(n == 0)
    def _():
        sum_ref[...] = jnp.zeros_like(sum_ref)
        sq_ref[...] = jnp.zeros_like(sq_ref)

    sum_ref[...] += jnp.sum(acc, axis=0, keepdims=True)
    sq_ref[...] += jnp.sum(acc * acc, axis=0, keepdims=True)


def _bn_relu_mm_stats_kernel(y_ref, scale_ref, shift_ref, w_ref,
                             o_ref, sum_ref, sq_ref, *, m_true, tile_m, need_mask):
    """Fused: BN2-apply + ReLU on a pre-BN tile, matmul with w3 (bf16 MXU),
    accumulate BN3 stats.  Padded rows are masked so stats stay exact."""
    i = pl.program_id(0)
    a = jnp.maximum(y_ref[...] * scale_ref[...] + shift_ref[...], 0.0)
    if need_mask:
        row = jax.lax.broadcasted_iota(jnp.int32, a.shape, 0) + i * tile_m
        a = jnp.where(row < m_true, a, 0.0)
    y = jnp.dot(a.astype(jnp.bfloat16), w_ref[...],
                preferred_element_type=jnp.float32)
    o_ref[...] = y

    @pl.when(i == 0)
    def _():
        sum_ref[...] = jnp.zeros_like(sum_ref)
        sq_ref[...] = jnp.zeros_like(sq_ref)

    sum_ref[...] += jnp.sum(y, axis=0, keepdims=True)
    sq_ref[...] += jnp.sum(y * y, axis=0, keepdims=True)


def _bn_add_relu_kernel(y_ref, id_ref, scale_ref, shift_ref, o_ref):
    """o = relu(y * scale + shift + identity)."""
    v = y_ref[...] * scale_ref[...] + shift_ref[...] + id_ref[...]
    o_ref[...] = jnp.maximum(v, 0.0).astype(o_ref.dtype)


# ---------------------------------------------------------------------------
# Wrappers
# ---------------------------------------------------------------------------
def _bn_scale_shift(col_sum, col_sq, gamma, beta, m_true):
    """Fold batch-wide stats + affine into per-channel (scale, shift)."""
    mean = col_sum / m_true
    var = jnp.maximum(col_sq / m_true - mean * mean, 0.0)   # biased variance
    inv = jax.lax.rsqrt(var + _BN_EPS)
    scale = gamma * inv
    shift = beta - mean * scale
    return scale, shift


def _mm_stats(x_bf, w_bf, tile_m):
    m_pad, k = x_bf.shape
    c = w_bf.shape[1]
    grid = (m_pad // tile_m,)
    return pl.pallas_call(
        _mm_stats_kernel,
        out_shape=(jax.ShapeDtypeStruct((m_pad, c), jnp.float32),
                   jax.ShapeDtypeStruct((1, c), jnp.float32),
                   jax.ShapeDtypeStruct((1, c), jnp.float32)),
        grid=grid,
        in_specs=[pl.BlockSpec((tile_m, k), lambda i: (i, 0)),
                  pl.BlockSpec((k, c), lambda i: (0, 0))],
        out_specs=(pl.BlockSpec((tile_m, c), lambda i: (i, 0)),
                   pl.BlockSpec((1, c), lambda i: (0, 0)),
                   pl.BlockSpec((1, c), lambda i: (0, 0))),
        compiler_params=pltpu.CompilerParams(dimension_semantics=("arbitrary",)),
    )(x_bf, w_bf)


def _bn_add_relu_apply(y, identity, scale, shift, tile_m, out_dtype):
    m_pad, c = y.shape
    grid = (m_pad // tile_m,)
    return pl.pallas_call(
        _bn_add_relu_kernel,
        out_shape=jax.ShapeDtypeStruct((m_pad, c), out_dtype),
        grid=grid,
        in_specs=[pl.BlockSpec((tile_m, c), lambda i: (i, 0)),
                  pl.BlockSpec((tile_m, c), lambda i: (i, 0)),
                  pl.BlockSpec((1, c), lambda i: (0, 0)),
                  pl.BlockSpec((1, c), lambda i: (0, 0))],
        out_specs=pl.BlockSpec((tile_m, c), lambda i: (i, 0)),
        compiler_params=pltpu.CompilerParams(dimension_semantics=("parallel",)),
    )(y, identity, scale, shift)


def init_block_params(key, in_channels, intermediate_channels):
    """Deterministic synthetic parameters with the same shapes as the PyTorch module."""
    expansion = 4
    k1, k2, k3 = jax.random.split(key, 3)
    w1 = jax.random.normal(k1, (intermediate_channels, in_channels, 1, 1), jnp.float32) * 0.1
    w2 = jax.random.normal(k2, (intermediate_channels, intermediate_channels, 3, 3), jnp.float32) * 0.1
    w3 = jax.random.normal(k3, (intermediate_channels * expansion, intermediate_channels, 1, 1), jnp.float32) * 0.1
    return {
        "w1": w1, "w2": w2, "w3": w3,
        "g1": jnp.ones((intermediate_channels,), jnp.float32),
        "b1": jnp.zeros((intermediate_channels,), jnp.float32),
        "g2": jnp.ones((intermediate_channels,), jnp.float32),
        "b2": jnp.zeros((intermediate_channels,), jnp.float32),
        "g3": jnp.ones((intermediate_channels * expansion,), jnp.float32),
        "b3": jnp.zeros((intermediate_channels * expansion,), jnp.float32),
    }


@functools.partial(jax.jit, static_argnames=("stride",))
def resnet_block_forward(x_nchw, params, stride=1):
    """Forward pass of the bottleneck block (identity_downsample=None)."""
    N, Cin, H, W = x_nchw.shape
    w1, w2, w3 = params["w1"], params["w2"], params["w3"]
    Cmid, Cout = w1.shape[0], w3.shape[0]
    assert stride == 1 and Cin == Cout, "identity_downsample=None configuration only"

    cp_in = _round_up(Cin, _LANE)
    cp_mid = _round_up(Cmid, _LANE)
    cp_out = _round_up(Cout, _LANE)

    M = N * H * W
    tile_m = min(512, _round_up(M, 8))
    m_pad = _round_up(M, tile_m)
    Hp, Wp = H + 2, W + 2

    # ---- layout: NCHW -> NHWC -> (M, C), pad rows & channels (zeros) --------
    x_nhwc = jnp.transpose(x_nchw, (0, 2, 3, 1)).astype(jnp.float32)
    x2d = x_nhwc.reshape(M, Cin)
    x2d_bf = jnp.pad(x2d, ((0, m_pad - M), (0, cp_in - Cin))).astype(jnp.bfloat16)
    id2d = jnp.pad(x2d, ((0, m_pad - M), (0, cp_out - Cin)))          # residual, f32

    # ---- weights / BN affine, channel-padded, bf16 for MXU ------------------
    w1_p = jnp.pad(jnp.transpose(w1[:, :, 0, 0], (1, 0)),
                   ((0, cp_in - Cin), (0, cp_mid - Cmid))).astype(jnp.bfloat16)
    w2_taps = jnp.transpose(w2, (2, 3, 1, 0)).reshape(9, Cmid, Cmid)  # (tap, cin, cout)
    w2_p = jnp.pad(w2_taps, ((0, 0), (0, cp_mid - Cmid), (0, cp_mid - Cmid))).astype(jnp.bfloat16)
    w3_p = jnp.pad(jnp.transpose(w3[:, :, 0, 0], (1, 0)),
                   ((0, cp_mid - Cmid), (0, cp_out - Cout))).astype(jnp.bfloat16)

    g1 = jnp.pad(params["g1"], (0, cp_mid - Cmid)).reshape(1, cp_mid)
    b1 = jnp.pad(params["b1"], (0, cp_mid - Cmid)).reshape(1, cp_mid)
    g2 = jnp.pad(params["g2"], (0, cp_mid - Cmid)).reshape(1, cp_mid)
    b2 = jnp.pad(params["b2"], (0, cp_mid - Cmid)).reshape(1, cp_mid)
    g3 = jnp.pad(params["g3"], (0, cp_out - Cout)).reshape(1, cp_out)
    b3 = jnp.pad(params["b3"], (0, cp_out - Cout)).reshape(1, cp_out)

    # ---- conv1 (1x1) + BN1 stats --------------------------------------------
    y1, s1, q1 = _mm_stats(x2d_bf, w1_p, tile_m)
    scale1, shift1 = _bn_scale_shift(s1, q1, g1, b1, M)

    # ---- fused: BN1-apply + ReLU + conv2 (3x3, pad=1) + BN2 stats -----------
    # pre-BN conv1 output, spatially halo-padded (halo is re-zeroed in-kernel
    # AFTER BN+ReLU so that zero padding applies to the post-activation).
    y1_sp = jnp.pad(y1[:M].reshape(N, H, W, cp_mid), ((0, 0), (1, 1), (1, 1), (0, 0)))
    halo_mask = jnp.pad(jnp.ones((H, W, 1), jnp.float32), ((1, 1), (1, 1), (0, 0)))
    y2, s2, q2 = pl.pallas_call(
        functools.partial(_bn_relu_conv3x3_stats_kernel, H=H, W=W, C=cp_mid),
        out_shape=(jax.ShapeDtypeStruct((N, H * W, cp_mid), jnp.float32),
                   jax.ShapeDtypeStruct((1, cp_mid), jnp.float32),
                   jax.ShapeDtypeStruct((1, cp_mid), jnp.float32)),
        grid=(N,),
        in_specs=[pl.BlockSpec((1, Hp, Wp, cp_mid), lambda n: (n, 0, 0, 0)),
                  pl.BlockSpec((1, cp_mid), lambda n: (0, 0)),
                  pl.BlockSpec((1, cp_mid), lambda n: (0, 0)),
                  pl.BlockSpec((Hp, Wp, 1), lambda n: (0, 0, 0)),
                  pl.BlockSpec((9, cp_mid, cp_mid), lambda n: (0, 0, 0))],
        out_specs=(pl.BlockSpec((1, H * W, cp_mid), lambda n: (n, 0, 0)),
                   pl.BlockSpec((1, cp_mid), lambda n: (0, 0)),
                   pl.BlockSpec((1, cp_mid), lambda n: (0, 0))),
        compiler_params=pltpu.CompilerParams(dimension_semantics=("arbitrary",)),
    )(y1_sp, scale1, shift1, halo_mask, w2_p)
    scale2, shift2 = _bn_scale_shift(s2, q2, g2, b2, M)

    # ---- fused: BN2-apply + ReLU + conv3 (1x1) + BN3 stats ------------------
    y2_flat = jnp.pad(y2.reshape(M, cp_mid), ((0, m_pad - M), (0, 0)))
    y3, s3, q3 = pl.pallas_call(
        functools.partial(_bn_relu_mm_stats_kernel, m_true=M, tile_m=tile_m,
                          need_mask=(m_pad > M)),
        out_shape=(jax.ShapeDtypeStruct((m_pad, cp_out), jnp.float32),
                   jax.ShapeDtypeStruct((1, cp_out), jnp.float32),
                   jax.ShapeDtypeStruct((1, cp_out), jnp.float32)),
        grid=(m_pad // tile_m,),
        in_specs=[pl.BlockSpec((tile_m, cp_mid), lambda i: (i, 0)),
                  pl.BlockSpec((1, cp_mid), lambda i: (0, 0)),
                  pl.BlockSpec((1, cp_mid), lambda i: (0, 0)),
                  pl.BlockSpec((cp_mid, cp_out), lambda i: (0, 0))],
        out_specs=(pl.BlockSpec((tile_m, cp_out), lambda i: (i, 0)),
                   pl.BlockSpec((1, cp_out), lambda i: (0, 0)),
                   pl.BlockSpec((1, cp_out), lambda i: (0, 0))),
        compiler_params=pltpu.CompilerParams(dimension_semantics=("arbitrary",)),
    )(y2_flat, scale2, shift2, w3_p)
    scale3, shift3 = _bn_scale_shift(s3, q3, g3, b3, M)

    # ---- BN3-apply + residual add + ReLU ------------------------------------
    out2d = _bn_add_relu_apply(y3, id2d, scale3, shift3, tile_m, jnp.float32)

    out = out2d[:M, :Cout].reshape(N, H, W, Cout)
    return jnp.transpose(out, (0, 3, 1, 2))                           # back to NCHW


if __name__ == "__main__":
    key = jax.random.PRNGKey(0)
    kx, kp = jax.random.split(key)

    intermediate_channels = 8
    in_channels = 4 * intermediate_channels  # 32 -> identity_downsample is None
    N, H, W = 2, 8, 8

    x = jax.random.normal(kx, (N, in_channels, H, W), jnp.float32)
    params = init_block_params(kp, in_channels, intermediate_channels)

    out = resnet_block_forward(x, params, stride=1)
    out = jax.block_until_ready(out)

    assert out.shape == (N, 4 * intermediate_channels, H, W)
    assert bool(jnp.all(out >= 0.0)) and bool(jnp.all(jnp.isfinite(out)))
    print("KERNEL_OK")
</pallas_src>

<mosaic_0001>
module attributes {stable_mosaic.version = 11 : i64} {
  func.func @_mm_stats_kernel(%arg0: i32, %arg1: memref<128x128xbf16, #tpu.memory_space<vmem>>, %arg2: memref<128x128xbf16, #tpu.memory_space<vmem>>, %arg3: memref<128x128xf32, #tpu.memory_space<vmem>>, %arg4: memref<1x128xf32, #tpu.memory_space<vmem>>, %arg5: memref<1x128xf32, #tpu.memory_space<vmem>>) attributes {dimension_semantics = [#tpu.dimension_semantics<arbitrary>], iteration_bounds = array<i64: 1>, scalar_prefetch = 0 : i64, scratch_operands = 0 : i64, tpu.core_type = #tpu.core_type<tc>, window_params = [{transform_indices = @transform_0, window_bounds = array<i64: 128, 128>}, {pipeline_mode = #tpu.pipeline_mode<synchronous>, transform_indices = @transform_1, window_bounds = array<i64: 128, 128>}, {transform_indices = @transform_2, window_bounds = array<i64: 128, 128>}, {pipeline_mode = #tpu.pipeline_mode<synchronous>, transform_indices = @transform_3, window_bounds = array<i64: 1, 128>}, {pipeline_mode = #tpu.pipeline_mode<synchronous>, transform_indices = @transform_4, window_bounds = array<i64: 1, 128>}]} {
    %c0 = arith.constant 0 : index
    %c0_0 = arith.constant 0 : index
    %0 = vector.load %arg1[%c0, %c0_0] : memref<128x128xbf16, #tpu.memory_space<vmem>>, vector<128x128xbf16>
    %c0_1 = arith.constant 0 : index
    %c0_2 = arith.constant 0 : index
    %1 = vector.load %arg2[%c0_1, %c0_2] : memref<128x128xbf16, #tpu.memory_space<vmem>>, vector<128x128xbf16>
    %cst = arith.constant dense<0.000000e+00> : vector<128x128xf32>
    %2 = tpu.matmul %0, %1, %cst {dimension_numbers = #tpu.dot_dimension_numbers<[1], [0], [0], [1], [0, 0, 1, 1], [], []>} : vector<128x128xbf16>, vector<128x128xbf16>, vector<128x128xf32> -> vector<128x128xf32>
    %c0_3 = arith.constant 0 : index
    %c0_4 = arith.constant 0 : index
    %3 = vector.load %arg3[%c0_3, %c0_4] : memref<128x128xf32, #tpu.memory_space<vmem>>, vector<128x128xf32>
    tpu.vector_store %arg3[%c0_3, %c0_4], %2 {strides = array<i32>} : memref<128x128xf32, #tpu.memory_space<vmem>>, vector<128x128xf32>,
    %c0_i32 = arith.constant 0 : i32
    %4 = arith.cmpi eq, %arg0, %c0_i32 : i32
    %5 = arith.extui %4 : i1 to i32
    %c0_i32_5 = arith.constant 0 : i32
    %6 = arith.cmpi ne, %5, %c0_i32_5 : i32
    scf.if %6 {
      %cst_16 = arith.constant 0.000000e+00 : f32
      %18 = vector.broadcast %cst_16 : f32 to vector<1x128xf32>
      %c0_17 = arith.constant 0 : index
      %c0_18 = arith.constant 0 : index
      %19 = vector.load %arg4[%c0_17, %c0_18] : memref<1x128xf32, #tpu.memory_space<vmem>>, vector<1x128xf32>
      tpu.vector_store %arg4[%c0_17, %c0_18], %18 {strides = array<i32>} : memref<1x128xf32, #tpu.memory_space<vmem>>, vector<1x128xf32>,
      %cst_19 = arith.constant 0.000000e+00 : f32
      %20 = vector.broadcast %cst_19 : f32 to vector<1x128xf32>
      %c0_20 = arith.constant 0 : index
      %c0_21 = arith.constant 0 : index
      %21 = vector.load %arg5[%c0_20, %c0_21] : memref<1x128xf32, #tpu.memory_space<vmem>>, vector<1x128xf32>
      tpu.vector_store %arg5[%c0_20, %c0_21], %20 {strides = array<i32>} : memref<1x128xf32, #tpu.memory_space<vmem>>, vector<1x128xf32>,
    } else {
    }
    %c0_6 = arith.constant 0 : index
    %c0_7 = arith.constant 0 : index
    %7 = vector.load %arg4[%c0_6, %c0_7] : memref<1x128xf32, #tpu.memory_space<vmem>>, vector<1x128xf32>
    %cst_8 = arith.constant dense<0.000000e+00> : vector<128xf32>
    %8 = vector.multi_reduction <add>, %2, %cst_8 [0] : vector<128x128xf32> to vector<128xf32>
    %9 = vector.shape_cast %8 : vector<128xf32> to vector<1x128xf32>
    %10 = arith.addf %7, %9 : vector<1x128xf32>
    %c0_9 = arith.constant 0 : index
    %c0_10 = arith.constant 0 : index
    %11 = vector.load %arg4[%c0_9, %c0_10] : memref<1x128xf32, #tpu.memory_space<vmem>>, vector<1x128xf32>
    tpu.vector_store %arg4[%c0_9, %c0_10], %10 {strides = array<i32>} : memref<1x128xf32, #tpu.memory_space<vmem>>, vector<1x128xf32>,
    %c0_11 = arith.constant 0 : index
    %c0_12 = arith.constant 0 : index
    %12 = vector.load %arg5[%c0_11, %c0_12] : memref<1x128xf32, #tpu.memory_space<vmem>>, vector<1x128xf32>
    %13 = arith.mulf %2, %2 : vector<128x128xf32>
    %cst_13 = arith.constant dense<0.000000e+00> : vector<128xf32>
    %14 = vector.multi_reduction <add>, %13, %cst_13 [0] : vector<128x128xf32> to vector<128xf32>
    %15 = vector.shape_cast %14 : vector<128xf32> to vector<1x128xf32>
    %16 = arith.addf %12, %15 : vector<1x128xf32>
    %c0_14 = arith.constant 0 : index
    %c0_15 = arith.constant 0 : index
    %17 = vector.load %arg5[%c0_14, %c0_15] : memref<1x128xf32, #tpu.memory_space<vmem>>, vector<1x128xf32>
    tpu.vector_store %arg5[%c0_14, %c0_15], %16 {strides = array<i32>} : memref<1x128xf32, #tpu.memory_space<vmem>>, vector<1x128xf32>,
    return
  }
  func.func @transform_0(%arg0: i32) -> (i32, i32) {
    %c0_i32 = arith.constant 0 : i32
    %c0_i32_0 = arith.constant 0 : i32
    return %arg0, %c0_i32 : i32, i32
  }
  func.func @transform_1(%arg0: i32) -> (i32, i32) {
    %c0_i32 = arith.constant 0 : i32
    %c0_i32_0 = arith.constant 0 : i32
    %c0_i32_1 = arith.constant 0 : i32
    return %c0_i32, %c0_i32_0 : i32, i32
  }
  func.func @transform_2(%arg0: i32) -> (i32, i32) {
    %c0_i32 = arith.constant 0 : i32
    %c0_i32_0 = arith.constant 0 : i32
    return %arg0, %c0_i32 : i32, i32
  }
  func.func @transform_3(%arg0: i32) -> (i32, i32) {
    %c0_i32 = arith.constant 0 : i32
    %c0_i32_0 = arith.constant 0 : i32
    %c0_i32_1 = arith.constant 0 : i32
    return %c0_i32, %c0_i32_0 : i32, i32
  }
  func.func @transform_4(%arg0: i32) -> (i32, i32) {
    %c0_i32 = arith.constant 0 : i32
    %c0_i32_0 = arith.constant 0 : i32
    %c0_i32_1 = arith.constant 0 : i32
    return %c0_i32, %c0_i32_0 : i32, i32
  }
}

module attributes {stable_mosaic.version = 11 : i64} {
  func.func @_bn_relu_conv3x3_stats_kernel(%arg0: i32, %arg1: memref<1x10x10x128xf32, #tpu.memory_space<vmem>>, %arg2: memref<1x128xf32, #tpu.memory_space<vmem>>, %arg3: memref<1x128xf32, #tpu.memory_space<vmem>>, %arg4: memref<10x10x1xf32, #tpu.memory_space<vmem>>, %arg5: memref<9x128x128xbf16, #tpu.memory_space<vmem>>, %arg6: memref<1x64x128xf32, #tpu.memory_space<vmem>>, %arg7: memref<1x128xf32, #tpu.memory_space<vmem>>, %arg8: memref<1x128xf32, #tpu.memory_space<vmem>>) attributes {dimension_semantics = [#tpu.dimension_semantics<arbitrary>], iteration_bounds = array<i64: 2>, scalar_prefetch = 0 : i64, scratch_operands = 0 : i64, tpu.core_type = #tpu.core_type<tc>, window_params = [{transform_indices = @transform_0, window_bounds = array<i64: 1, 10, 10, 128>}, {pipeline_mode = #tpu.pipeline_mode<synchronous>, transform_indices = @transform_1, window_bounds = array<i64: 1, 128>}, {pipeline_mode = #tpu.pipeline_mode<synchronous>, transform_indices = @transform_2, window_bounds = array<i64: 1, 128>}, {pipeline_mode = #tpu.pipeline_mode<synchronous>, transform_indices = @transform_3, window_bounds = array<i64: 10, 10, 1>}, {pipeline_mode = #tpu.pipeline_mode<synchronous>, transform_indices = @transform_4, window_bounds = array<i64: 9, 128, 128>}, {transform_indices = @transform_5, window_bounds = array<i64: 1, 64, 128>}, {pipeline_mode = #tpu.pipeline_mode<synchronous>, transform_indices = @transform_6, window_bounds = array<i64: 1, 128>}, {pipeline_mode = #tpu.pipeline_mode<synchronous>, transform_indices = @transform_7, window_bounds = array<i64: 1, 128>}]} {
    %c0 = arith.constant 0 : index
    %c0_0 = arith.constant 0 : index
    %c0_1 = arith.constant 0 : index
    %c0_2 = arith.constant 0 : index
    %0 = vector.load %arg1[%c0, %c0_0, %c0_1, %c0_2] : memref<1x10x10x128xf32, #tpu.memory_space<vmem>>, vector<1x10x10x128xf32>
    %1 = vector.shape_cast %0 : vector<1x10x10x128xf32> to vector<10x10x128xf32>
    %c0_3 = arith.constant 0 : index
    %c0_4 = arith.constant 0 : index
    %2 = vector.load %arg2[%c0_3, %c0_4] : memref<1x128xf32, #tpu.memory_space<vmem>>, vector<1x128xf32>
    %3 = vector.shape_cast %2 : vector<1x128xf32> to vector<1x1x128xf32>
    %4 = vector.broadcast %3 : vector<1x1x128xf32> to vector<10x10x128xf32>
    %5 = arith.mulf %1, %4 : vector<10x10x128xf32>
    %c0_5 = arith.constant 0 : index
    %c0_6 = arith.constant 0 : index
    %6 = vector.load %arg3[%c0_5, %c0_6] : memref<1x128xf32, #tpu.memory_space<vmem>>, vector<1x128xf32>
    %7 = vector.shape_cast %6 : vector<1x128xf32> to vector<1x1x128xf32>
    %8 = vector.broadcast %7 : vector<1x1x128xf32> to vector<10x10x128xf32>
    %9 = arith.addf %5, %8 : vector<10x10x128xf32>
    %cst = arith.constant 0.000000e+00 : f32
    %10 = vector.broadcast %cst : f32 to vector<10x10x128xf32>
    %11 = arith.maximumf %9, %10 : vector<10x10x128xf32>
    %c0_7 = arith.constant 0 : index
    %c0_8 = arith.constant 0 : index
    %c0_9 = arith.constant 0 : index
    %12 = vector.load %arg4[%c0_7, %c0_8, %c0_9] : memref<10x10x1xf32, #tpu.memory_space<vmem>>, vector<10x10x1xf32>
    %13 = vector.broadcast %12 : vector<10x10x1xf32> to vector<10x10x128xf32>
    %14 = arith.mulf %11, %13 : vector<10x10x128xf32>
    %15 = arith.truncf %14 : vector<10x10x128xf32> to vector<10x10x128xbf16>
    %cst_10 = arith.constant 0.000000e+00 : f32
    %16 = vector.broadcast %cst_10 : f32 to vector<64x128xf32>
    %17 = vector.extract_strided_slice %15 {offsets = [0, 0, 0], sizes = [8, 8, 128], strides = [1, 1, 1]} : vector<10x10x128xbf16> to vector<8x8x128xbf16>
    %18 = vector.shape_cast %17 : vector<8x8x128xbf16> to vector<64x128xbf16>
    %c0_11 = arith.constant 0 : index
    %c0_12 = arith.constant 0 : index
    %c0_13 = arith.constant 0 : index
    %19 = vector.load %arg5[%c0_11, %c0_12, %c0_13] : memref<9x128x128xbf16, #tpu.memory_space<vmem>>, vector<1x128x128xbf16>
    %20 = vector.shape_cast %19 : vector<1x128x128xbf16> to vector<128x128xbf16>
    %cst_14 = arith.constant dense<0.000000e+00> : vector<64x128xf32>
    %21 = tpu.matmul %18, %20, %cst_14 {dimension_numbers = #tpu.dot_dimension_numbers<[1], [0], [0], [1], [0, 0, 1, 1], [], []>} : vector<64x128xbf16>, vector<128x128xbf16>, vector<64x128xf32> -> vector<64x128xf32>
    %22 = arith.addf %16, %21 : vector<64x128xf32>
    %23 = vector.extract_strided_slice %15 {offsets = [0, 1, 0], sizes = [8, 8, 128], strides = [1, 1, 1]} : vector<10x10x128xbf16> to vector<8x8x128xbf16>
    %24 = vector.shape_cast %23 : vector<8x8x128xbf16> to vector<64x128xbf16>
    %c1 = arith.constant 1 : index
    %c0_15 = arith.constant 0 : index
    %c0_16 = arith.constant 0 : index
    %25 = vector.load %arg5[%c1, %c0_15, %c0_16] : memref<9x128x128xbf16, #tpu.memory_space<vmem>>, vector<1x128x128xbf16>
    %26 = vector.shape_cast %25 : vector<1x128x128xbf16> to vector<128x128xbf16>
    %cst_17 = arith.constant dense<0.000000e+00> : vector<64x128xf32>
    %27 = tpu.matmul %24, %26, %cst_17 {dimension_numbers = #tpu.dot_dimension_numbers<[1], [0], [0], [1], [0, 0, 1, 1], [], []>} : vector<64x128xbf16>, vector<128x128xbf16>, vector<64x128xf32> -> vector<64x128xf32>
    %28 = arith.addf %22, %27 : vector<64x128xf32>
    %29 = vector.extract_strided_slice %15 {offsets = [0, 2, 0], sizes = [8, 8, 128], strides = [1, 1, 1]} : vector<10x10x128xbf16> to vector<8x8x128xbf16>
    %30 = vector.shape_cast %29 : vector<8x8x128xbf16> to vector<64x128xbf16>
    %c2 = arith.constant 2 : index
    %c0_18 = arith.constant 0 : index
    %c0_19 = arith.constant 0 : index
    %31 = vector.load %arg5[%c2, %c0_18, %c0_19] : memref<9x128x128xbf16, #tpu.memory_space<vmem>>, vector<1x128x128xbf16>
    %32 = vector.shape_cast %31 : vector<1x128x128xbf16> to vector<128x128xbf16>
    %cst_20 = arith.constant dense<0.000000e+00> : vector<64x128xf32>
    %33 = tpu.matmul %30, %32, %cst_20 {dimension_numbers = #tpu.dot_dimension_numbers<[1], [0], [0], [1], [0, 0, 1, 1], [], []>} : vector<64x128xbf16>, vector<128x128xbf16>, vector<64x128xf32> -> vector<64x128xf32>
    %34 = arith.addf %28, %33 : vector<64x128xf32>
    %35 = vector.extract_strided_slice %15 {offsets = [1, 0, 0], sizes = [8, 8, 128], strides = [1, 1, 1]} : vector<10x10x128xbf16> to vector<8x8x128xbf16>
    %36 = vector.shape_cast %35 : vector<8x8x128xbf16> to vector<64x128xbf16>
    %c3 = arith.constant 3 : index
    %c0_21 = arith.constant 0 : index
    %c0_22 = arith.constant 0 : index
    %37 = vector.load %arg5[%c3, %c0_21, %c0_22] : memref<9x128x128xbf16, #tpu.memory_space<vmem>>, vector<1x128x128xbf16>
    %38 = vector.shape_cast %37 : vector<1x128x128xbf16> to vector<128x128xbf16>
    %cst_23 = arith.constant dense<0.000000e+00> : vector<64x128xf32>
    %39 = tpu.matmul %36, %38, %cst_23 {dimension_numbers = #tpu.dot_dimension_numbers<[1], [0], [0], [1], [0, 0, 1, 1], [], []>} : vector<64x128xbf16>, vector<128x128xbf16>, vector<64x128xf32> -> vector<64x128xf32>
    %40 = arith.addf %34, %39 : vector<64x128xf32>
    %41 = vector.extract_strided_slice %15 {offsets = [1, 1, 0], sizes = [8, 8, 128], strides = [1, 1, 1]} : vector<10x10x128xbf16> to vector<8x8x128xbf16>
    %42 = vector.shape_cast %41 : vector<8x8x128xbf16> to vector<64x128xbf16>
    %c4 = arith.constant 4 : index
    %c0_24 = arith.constant 0 : index
    %c0_25 = arith.constant 0 : index
    %43 = vector.load %arg5[%c4, %c0_24, %c0_25] : memref<9x128x128xbf16, #tpu.memory_space<vmem>>, vector<1x128x128xbf16>
    %44 = vector.shape_cast %43 : vector<1x128x128xbf16> to vector<128x128xbf16>
    %cst_26 = arith.constant dense<0.000000e+00> : vector<64x128xf32>
    %45 = tpu.matmul %42, %44, %cst_26 {dimension_numbers = #tpu.dot_dimension_numbers<[1], [0], [0], [1], [0, 0, 1, 1], [], []>} : vector<64x128xbf16>, vector<128x128xbf16>, vector<64x128xf32> -> vector<64x128xf32>
    %46 = arith.addf %40, %45 : vector<64x128xf32>
    %47 = vector.extract_strided_slice %15 {offsets = [1, 2, 0], sizes = [8, 8, 128], strides = [1, 1, 1]} : vector<10x10x128xbf16> to vector<8x8x128xbf16>
    %48 = vector.shape_cast %47 : vector<8x8x128xbf16> to vector<64x128xbf16>
    %c5 = arith.constant 5 : index
    %c0_27 = arith.constant 0 : index
    %c0_28 = arith.constant 0 : index
    %49 = vector.load %arg5[%c5, %c0_27, %c0_28] : memref<9x128x128xbf16, #tpu.memory_space<vmem>>, vector<1x128x128xbf16>
    %50 = vector.shape_cast %49 : vector<1x128x128xbf16> to vector<128x128xbf16>
    %cst_29 = arith.constant dense<0.000000e+00> : vector<64x128xf32>
    %51 = tpu.matmul %48, %50, %cst_29 {dimension_numbers = #tpu.dot_dimension_numbers<[1], [0], [0], [1], [0, 0, 1, 1], [], []>} : vector<64x128xbf16>, vector<128x128xbf16>, vector<64x128xf32> -> vector<64x128xf32>
    %52 = arith.addf %46, %51 : vector<64x128xf32>
    %53 = vector.extract_strided_slice %15 {offsets = [2, 0, 0], sizes = [8, 8, 128], strides = [1, 1, 1]} : vector<10x10x128xbf16> to vector<8x8x128xbf16>
    %54 = vector.shape_cast %53 : vector<8x8x128xbf16> to vector<64x128xbf16>
    %c6 = arith.constant 6 : index
    %c0_30 = arith.constant 0 : index
    %c0_31 = arith.constant 0 : index
    %55 = vector.load %arg5[%c6, %c0_30, %c0_31] : memref<9x128x128xbf16, #tpu.memory_space<vmem>>, vector<1x128x128xbf16>
    %56 = vector.shape_cast %55 : vector<1x128x128xbf16> to vector<128x128xbf16>
    %cst_32 = arith.constant dense<0.000000e+00> : vector<64x128xf32>
    %57 = tpu.matmul %54, %56, %cst_32 {dimension_numbers = #tpu.dot_dimension_numbers<[1], [0], [0], [1], [0, 0, 1, 1], [], []>} : vector<64x128xbf16>, vector<128x128xbf16>, vector<64x128xf32> -> vector<64x128xf32>
    %58 = arith.addf %52, %57 : vector<64x128xf32>
    %59 = vector.extract_strided_slice %15 {offsets = [2, 1, 0], sizes = [8, 8, 128], strides = [1, 1, 1]} : vector<10x10x128xbf16> to vector<8x8x128xbf16>
    %60 = vector.shape_cast %59 : vector<8x8x128xbf16> to vector<64x128xbf16>
    %c7 = arith.constant 7 : index
    %c0_33 = arith.constant 0 : index
    %c0_34 = arith.constant 0 : index
    %61 = vector.load %arg5[%c7, %c0_33, %c0_34] : memref<9x128x128xbf16, #tpu.memory_space<vmem>>, vector<1x128x128xbf16>
    %62 = vector.shape_cast %61 : vector<1x128x128xbf16> to vector<128x128xbf16>
    %cst_35 = arith.constant dense<0.000000e+00> : vector<64x128xf32>
    %63 = tpu.matmul %60, %62, %cst_35 {dimension_numbers = #tpu.dot_dimension_numbers<[1], [0], [0], [1], [0, 0, 1, 1], [], []>} : vector<64x128xbf16>, vector<128x128xbf16>, vector<64x128xf32> -> vector<64x128xf32>
    %64 = arith.addf %58, %63 : vector<64x128xf32>
    %65 = vector.extract_strided_slice %15 {offsets = [2, 2, 0], sizes = [8, 8, 128], strides = [1, 1, 1]} : vector<10x10x128xbf16> to vector<8x8x128xbf16>
    %66 = vector.shape_cast %65 : vector<8x8x128xbf16> to vector<64x128xbf16>
    %c8 = arith.constant 8 : index
    %c0_36 = arith.constant 0 : index
    %c0_37 = arith.constant 0 : index
    %67 = vector.load %arg5[%c8, %c0_36, %c0_37] : memref<9x128x128xbf16, #tpu.memory_space<vmem>>, vector<1x128x128xbf16>
    %68 = vector.shape_cast %67 : vector<1x128x128xbf16> to vector<128x128xbf16>
    %cst_38 = arith.constant dense<0.000000e+00> : vector<64x128xf32>
    %69 = tpu.matmul %66, %68, %cst_38 {dimension_numbers = #tpu.dot_dimension_numbers<[1], [0], [0], [1], [0, 0, 1, 1], [], []>} : vector<64x128xbf16>, vector<128x128xbf16>, vector<64x128xf32> -> vector<64x128xf32>
    %70 = arith.addf %64, %69 : vector<64x128xf32>
    %c0_39 = arith.constant 0 : index
    %c0_40 = arith.constant 0 : index
    %c0_41 = arith.constant 0 : index
    %71 = vector.load %arg6[%c0_39, %c0_40, %c0_41] : memref<1x64x128xf32, #tpu.memory_space<vmem>>, vector<1x64x128xf32>
    %72 = vector.shape_cast %71 : vector<1x64x128xf32> to vector<64x128xf32>
    %73 = vector.shape_cast %70 : vector<64x128xf32> to vector<1x64x128xf32>
    tpu.vector_store %arg6[%c0_39, %c0_40, %c0_41], %73 {strides = array<i32>} : memref<1x64x128xf32, #tpu.memory_space<vmem>>, vector<1x64x128xf32>,
    %c0_i32 = arith.constant 0 : i32
    %74 = arith.cmpi eq, %arg0, %c0_i32 : i32
    %75 = arith.extui %74 : i1 to i32
    %c0_i32_42 = arith.constant 0 : i32
    %76 = arith.cmpi ne, %75, %c0_i32_42 : i32
    scf.if %76 {
      %cst_53 = arith.constant 0.000000e+00 : f32
      %88 = vector.broadcast %cst_53 : f32 to vector<1x128xf32>
      %c0_54 = arith.constant 0 : index
      %c0_55 = arith.constant 0 : index
      %89 = vector.load %arg7[%c0_54, %c0_55] : memref<1x128xf32, #tpu.memory_space<vmem>>, vector<1x128xf32>
      tpu.vector_store %arg7[%c0_54, %c0_55], %88 {strides = array<i32>} : memref<1x128xf32, #tpu.memory_space<vmem>>, vector<1x128xf32>,
      %cst_56 = arith.constant 0.000000e+00 : f32
      %90 = vector.broadcast %cst_56 : f32 to vector<1x128xf32>
      %c0_57 = arith.constant 0 : index
      %c0_58 = arith.constant 0 : index
      %91 = vector.load %arg8[%c0_57, %c0_58] : memref<1x128xf32, #tpu.memory_space<vmem>>, vector<1x128xf32>
      tpu.vector_store %arg8[%c0_57, %c0_58], %90 {strides = array<i32>} : memref<1x128xf32, #tpu.memory_space<vmem>>, vector<1x128xf32>,
    } else {
    }
    %c0_43 = arith.constant 0 : index
    %c0_44 = arith.constant 0 : index
    %77 = vector.load %arg7[%c0_43, %c0_44] : memref<1x128xf32, #tpu.memory_space<vmem>>, vector<1x128xf32>
    %cst_45 = arith.constant dense<0.000000e+00> : vector<128xf32>
    %78 = vector.multi_reduction <add>, %70, %cst_45 [0] : vector<64x128xf32> to vector<128xf32>
    %79 = vector.shape_cast %78 : vector<128xf32> to vector<1x128xf32>
    %80 = arith.addf %77, %79 : vector<1x128xf32>
    %c0_46 = arith.constant 0 : index
    %c0_47 = arith.constant 0 : index
    %81 = vector.load %arg7[%c0_46, %c0_47] : memref<1x128xf32, #tpu.memory_space<vmem>>, vector<1x128xf32>
    tpu.vector_store %arg7[%c0_46, %c0_47], %80 {strides = array<i32>} : memref<1x128xf32, #tpu.memory_space<vmem>>, vector<1x128xf32>,
    %c0_48 = arith.constant 0 : index
    %c0_49 = arith.constant 0 : index
    %82 = vector.load %arg8[%c0_48, %c0_49] : memref<1x128xf32, #tpu.memory_space<vmem>>, vector<1x128xf32>
    %83 = arith.mulf %70, %70 : vector<64x128xf32>
    %cst_50 = arith.constant dense<0.000000e+00> : vector<128xf32>
    %84 = vector.multi_reduction <add>, %83, %cst_50 [0] : vector<64x128xf32> to vector<128xf32>
    %85 = vector.shape_cast %84 : vector<128xf32> to vector<1x128xf32>
    %86 = arith.addf %82, %85 : vector<1x128xf32>
    %c0_51 = arith.constant 0 : index
    %c0_52 = arith.constant 0 : index
    %87 = vector.load %arg8[%c0_51, %c0_52] : memref<1x128xf32, #tpu.memory_space<vmem>>, vector<1x128xf32>
    tpu.vector_store %arg8[%c0_51, %c0_52], %86 {strides = array<i32>} : memref<1x128xf32, #tpu.memory_space<vmem>>, vector<1x128xf32>,
    return
  }
  func.func @transform_0(%arg0: i32) -> (i32, i32, i32, i32) {
    %c0_i32 = arith.constant 0 : i32
    %c0_i32_0 = arith.constant 0 : i32
    %c0_i32_1 = arith.constant 0 : i32
    %c0_i32_2 = arith.constant 0 : i32
    return %arg0, %c0_i32, %c0_i32_0, %c0_i32_1 : i32, i32, i32, i32
  }
  func.func @transform_1(%arg0: i32) -> (i32, i32) {
    %c0_i32 = arith.constant 0 : i32
    %c0_i32_0 = arith.constant 0 : i32
    %c0_i32_1 = arith.constant 0 : i32
    return %c0_i32, %c0_i32_0 : i32, i32
  }
  func.func @transform_2(%arg0: i32) -> (i32, i32) {
    %c0_i32 = arith.constant 0 : i32
    %c0_i32_0 = arith.constant 0 : i32
    %c0_i32_1 = arith.constant 0 : i32
    return %c0_i32, %c0_i32_0 : i32, i32
  }
  func.func @transform_3(%arg0: i32) -> (i32, i32, i32) {
    %c0_i32 = arith.constant 0 : i32
    %c0_i32_0 = arith.constant 0 : i32
    %c0_i32_1 = arith.constant 0 : i32
    %c0_i32_2 = arith.constant 0 : i32
    return %c0_i32, %c0_i32_0, %c0_i32_1 : i32, i32, i32
  }
  func.func @transform_4(%arg0: i32) -> (i32, i32, i32) {
    %c0_i32 = arith.constant 0 : i32
    %c0_i32_0 = arith.constant 0 : i32
    %c0_i32_1 = arith.constant 0 : i32
    %c0_i32_2 = arith.constant 0 : i32
    return %c0_i32, %c0_i32_0, %c0_i32_1 : i32, i32, i32
  }
  func.func @transform_5(%arg0: i32) -> (i32, i32, i32) {
    %c0_i32 = arith.constant 0 : i32
    %c0_i32_0 = arith.constant 0 : i32
    %c0_i32_1 = arith.constant 0 : i32
    return %arg0, %c0_i32, %c0_i32_0 : i32, i32, i32
  }
  func.func @transform_6(%arg0: i32) -> (i32, i32) {
    %c0_i32 = arith.constant 0 : i32
    %c0_i32_0 = arith.constant 0 : i32
    %c0_i32_1 = arith.constant 0 : i32
    return %c0_i32, %c0_i32_0 : i32, i32
  }
  func.func @transform_7(%arg0: i32) -> (i32, i32) {
    %c0_i32 = arith.constant 0 : i32
    %c0_i32_0 = arith.constant 0 : i32
    %c0_i32_1 = arith.constant 0 : i32
    return %c0_i32, %c0_i32_0 : i32, i32
  }
}

module attributes {stable_mosaic.version = 11 : i64} {
  func.func @_bn_relu_mm_stats_kernel(%arg0: i32, %arg1: memref<128x128xf32, #tpu.memory_space<vmem>>, %arg2: memref<1x128xf32, #tpu.memory_space<vmem>>, %arg3: memref<1x128xf32, #tpu.memory_space<vmem>>, %arg4: memref<128x128xbf16, #tpu.memory_space<vmem>>, %arg5: memref<128x128xf32, #tpu.memory_space<vmem>>, %arg6: memref<1x128xf32, #tpu.memory_space<vmem>>, %arg7: memref<1x128xf32, #tpu.memory_space<vmem>>) attributes {dimension_semantics = [#tpu.dimension_semantics<arbitrary>], iteration_bounds = array<i64: 1>, scalar_prefetch = 0 : i64, scratch_operands = 0 : i64, tpu.core_type = #tpu.core_type<tc>, window_params = [{transform_indices = @transform_0, window_bounds = array<i64: 128, 128>}, {pipeline_mode = #tpu.pipeline_mode<synchronous>, transform_indices = @transform_1, window_bounds = array<i64: 1, 128>}, {pipeline_mode = #tpu.pipeline_mode<synchronous>, transform_indices = @transform_2, window_bounds = array<i64: 1, 128>}, {pipeline_mode = #tpu.pipeline_mode<synchronous>, transform_indices = @transform_3, window_bounds = array<i64: 128, 128>}, {transform_indices = @transform_4, window_bounds = array<i64: 128, 128>}, {pipeline_mode = #tpu.pipeline_mode<synchronous>, transform_indices = @transform_5, window_bounds = array<i64: 1, 128>}, {pipeline_mode = #tpu.pipeline_mode<synchronous>, transform_indices = @transform_6, window_bounds = array<i64: 1, 128>}]} {
    %c0 = arith.constant 0 : index
    %c0_0 = arith.constant 0 : index
    %0 = vector.load %arg1[%c0, %c0_0] : memref<128x128xf32, #tpu.memory_space<vmem>>, vector<128x128xf32>
    %c0_1 = arith.constant 0 : index
    %c0_2 = arith.constant 0 : index
    %1 = vector.load %arg2[%c0_1, %c0_2] : memref<1x128xf32, #tpu.memory_space<vmem>>, vector<1x128xf32>
    %2 = vector.broadcast %1 : vector<1x128xf32> to vector<128x128xf32>
    %3 = arith.mulf %0, %2 : vector<128x128xf32>
    %c0_3 = arith.constant 0 : index
    %c0_4 = arith.constant 0 : index
    %4 = vector.load %arg3[%c0_3, %c0_4] : memref<1x128xf32, #tpu.memory_space<vmem>>, vector<1x128xf32>
    %5 = vector.broadcast %4 : vector<1x128xf32> to vector<128x128xf32>
    %6 = arith.addf %3, %5 : vector<128x128xf32>
    %cst = arith.constant 0.000000e+00 : f32
    %7 = vector.broadcast %cst : f32 to vector<128x128xf32>
    %8 = arith.maximumf %6, %7 : vector<128x128xf32>
    %9 = arith.truncf %8 : vector<128x128xf32> to vector<128x128xbf16>
    %c0_5 = arith.constant 0 : index
    %c0_6 = arith.constant 0 : index
    %10 = vector.load %arg4[%c0_5, %c0_6] : memref<128x128xbf16, #tpu.memory_space<vmem>>, vector<128x128xbf16>
    %cst_7 = arith.constant dense<0.000000e+00> : vector<128x128xf32>
    %11 = tpu.matmul %9, %10, %cst_7 {dimension_numbers = #tpu.dot_dimension_numbers<[1], [0], [0], [1], [0, 0, 1, 1], [], []>} : vector<128x128xbf16>, vector<128x128xbf16>, vector<128x128xf32> -> vector<128x128xf32>
    %c0_8 = arith.constant 0 : index
    %c0_9 = arith.constant 0 : index
    %12 = vector.load %arg5[%c0_8, %c0_9] : memref<128x128xf32, #tpu.memory_space<vmem>>, vector<128x128xf32>
    tpu.vector_store %arg5[%c0_8, %c0_9], %11 {strides = array<i32>} : memref<128x128xf32, #tpu.memory_space<vmem>>, vector<128x128xf32>,
    %c0_i32 = arith.constant 0 : i32
    %13 = arith.cmpi eq, %arg0, %c0_i32 : i32
    %14 = arith.extui %13 : i1 to i32
    %c0_i32_10 = arith.constant 0 : i32
    %15 = arith.cmpi ne, %14, %c0_i32_10 : i32
    scf.if %15 {
      %cst_21 = arith.constant 0.000000e+00 : f32
      %27 = vector.broadcast %cst_21 : f32 to vector<1x128xf32>
      %c0_22 = arith.constant 0 : index
      %c0_23 = arith.constant 0 : index
      %28 = vector.load %arg6[%c0_22, %c0_23] : memref<1x128xf32, #tpu.memory_space<vmem>>, vector<1x128xf32>
      tpu.vector_store %arg6[%c0_22, %c0_23], %27 {strides = array<i32>} : memref<1x128xf32, #tpu.memory_space<vmem>>, vector<1x128xf32>,
      %cst_24 = arith.constant 0.000000e+00 : f32
      %29 = vector.broadcast %cst_24 : f32 to vector<1x128xf32>
      %c0_25 = arith.constant 0 : index
      %c0_26 = arith.constant 0 : index
      %30 = vector.load %arg7[%c0_25, %c0_26] : memref<1x128xf32, #tpu.memory_space<vmem>>, vector<1x128xf32>
      tpu.vector_store %arg7[%c0_25, %c0_26], %29 {strides = array<i32>} : memref<1x128xf32, #tpu.memory_space<vmem>>, vector<1x128xf32>,
    } else {
    }
    %c0_11 = arith.constant 0 : index
    %c0_12 = arith.constant 0 : index
    %16 = vector.load %arg6[%c0_11, %c0_12] : memref<1x128xf32, #tpu.memory_space<vmem>>, vector<1x128xf32>
    %cst_13 = arith.constant dense<0.000000e+00> : vector<128xf32>
    %17 = vector.multi_reduction <add>, %11, %cst_13 [0] : vector<128x128xf32> to vector<128xf32>
    %18 = vector.shape_cast %17 : vector<128xf32> to vector<1x128xf32>
    %19 = arith.addf %16, %18 : vector<1x128xf32>
    %c0_14 = arith.constant 0 : index
    %c0_15 = arith.constant 0 : index
    %20 = vector.load %arg6[%c0_14, %c0_15] : memref<1x128xf32, #tpu.memory_space<vmem>>, vector<1x128xf32>
    tpu.vector_store %arg6[%c0_14, %c0_15], %19 {strides = array<i32>} : memref<1x128xf32, #tpu.memory_space<vmem>>, vector<1x128xf32>,
    %c0_16 = arith.constant 0 : index
    %c0_17 = arith.constant 0 : index
    %21 = vector.load %arg7[%c0_16, %c0_17] : memref<1x128xf32, #tpu.memory_space<vmem>>, vector<1x128xf32>
    %22 = arith.mulf %11, %11 : vector<128x128xf32>
    %cst_18 = arith.constant dense<0.000000e+00> : vector<128xf32>
    %23 = vector.multi_reduction <add>, %22, %cst_18 [0] : vector<128x128xf32> to vector<128xf32>
    %24 = vector.shape_cast %23 : vector<128xf32> to vector<1x128xf32>
    %25 = arith.addf %21, %24 : vector<1x128xf32>
    %c0_19 = arith.constant 0 : index
    %c0_20 = arith.constant 0 : index
    %26 = vector.load %arg7[%c0_19, %c0_20] : memref<1x128xf32, #tpu.memory_space<vmem>>, vector<1x128xf32>
    tpu.vector_store %arg7[%c0_19, %c0_20], %25 {strides = array<i32>} : memref<1x128xf32, #tpu.memory_space<vmem>>, vector<1x128xf32>,
    return
  }
  func.func @transform_0(%arg0: i32) -> (i32, i32) {
    %c0_i32 = arith.constant 0 : i32
    %c0_i32_0 = arith.constant 0 : i32
    return %arg0, %c0_i32 : i32, i32
  }
  func.func @transform_1(%arg0: i32) -> (i32, i32) {
    %c0_i32 = arith.constant 0 : i32
    %c0_i32_0 = arith.constant 0 : i32
    %c0_i32_1 = arith.constant 0 : i32
    return %c0_i32, %c0_i32_0 : i32, i32
  }
  func.func @transform_2(%arg0: i32) -> (i32, i32) {
    %c0_i32 = arith.constant 0 : i32
    %c0_i32_0 = arith.constant 0 : i32
    %c0_i32_1 = arith.constant 0 : i32
    return %c0_i32, %c0_i32_0 : i32, i32
  }
  func.func @transform_3(%arg0: i32) -> (i32, i32) {
    %c0_i32 = arith.constant 0 : i32
    %c0_i32_0 = arith.constant 0 : i32
    %c0_i32_1 = arith.constant 0 : i32
    return %c0_i32, %c0_i32_0 : i32, i32
  }
  func.func @transform_4(%arg0: i32) -> (i32, i32) {
    %c0_i32 = arith.constant 0 : i32
    %c0_i32_0 = arith.constant 0 : i32
    return %arg0, %c0_i32 : i32, i32
  }
  func.func @transform_5(%arg0: i32) -> (i32, i32) {
    %c0_i32 = arith.constant 0 : i32
    %c0_i32_0 = arith.constant 0 : i32
    %c0_i32_1 = arith.constant 0 : i32
    return %c0_i32, %c0_i32_0 : i32, i32
  }
  func.func @transform_6(%arg0: i32) -> (i32, i32) {
    %c0_i32 = arith.constant 0 : i32
    %c0_i32_0 = arith.constant 0 : i32
    %c0_i32_1 = arith.constant 0 : i32
    return %c0_i32, %c0_i32_0 : i32, i32
  }
}

module attributes {stable_mosaic.version = 11 : i64} {
  func.func @_bn_add_relu_kernel(%arg0: i32, %arg1: memref<128x128xf32, #tpu.memory_space<vmem>>, %arg2: memref<128x128xf32, #tpu.memory_space<vmem>>, %arg3: memref<1x128xf32, #tpu.memory_space<vmem>>, %arg4: memref<1x128xf32, #tpu.memory_space<vmem>>, %arg5: memref<128x128xf32, #tpu.memory_space<vmem>>) attributes {dimension_semantics = [#tpu.dimension_semantics<parallel>], iteration_bounds = array<i64: 1>, scalar_prefetch = 0 : i64, scratch_operands = 0 : i64, tpu.core_type = #tpu.core_type<tc>, window_params = [{transform_indices = @transform_0, window_bounds = array<i64: 128, 128>}, {transform_indices = @transform_1, window_bounds = array<i64: 128, 128>}, {pipeline_mode = #tpu.pipeline_mode<synchronous>, transform_indices = @transform_2, window_bounds = array<i64: 1, 128>}, {pipeline_mode = #tpu.pipeline_mode<synchronous>, transform_indices = @transform_3, window_bounds = array<i64: 1, 128>}, {transform_indices = @transform_4, window_bounds = array<i64: 128, 128>}]} {
    %c0 = arith.constant 0 : index
    %c0_0 = arith.constant 0 : index
    %0 = vector.load %arg1[%c0, %c0_0] : memref<128x128xf32, #tpu.memory_space<vmem>>, vector<128x128xf32>
    %c0_1 = arith.constant 0 : index
    %c0_2 = arith.constant 0 : index
    %1 = vector.load %arg3[%c0_1, %c0_2] : memref<1x128xf32, #tpu.memory_space<vmem>>, vector<1x128xf32>
    %2 = vector.broadcast %1 : vector<1x128xf32> to vector<128x128xf32>
    %3 = arith.mulf %0, %2 : vector<128x128xf32>
    %c0_3 = arith.constant 0 : index
    %c0_4 = arith.constant 0 : index
    %4 = vector.load %arg4[%c0_3, %c0_4] : memref<1x128xf32, #tpu.memory_space<vmem>>, vector<1x128xf32>
    %5 = vector.broadcast %4 : vector<1x128xf32> to vector<128x128xf32>
    %6 = arith.addf %3, %5 : vector<128x128xf32>
    %c0_5 = arith.constant 0 : index
    %c0_6 = arith.constant 0 : index
    %7 = vector.load %arg2[%c0_5, %c0_6] : memref<128x128xf32, #tpu.memory_space<vmem>>, vector<128x128xf32>
    %8 = arith.addf %6, %7 : vector<128x128xf32>
    %cst = arith.constant 0.000000e+00 : f32
    %9 = vector.broadcast %cst : f32 to vector<128x128xf32>
    %10 = arith.maximumf %8, %9 : vector<128x128xf32>
    %c0_7 = arith.constant 0 : index
    %c0_8 = arith.constant 0 : index
    %11 = vector.load %arg5[%c0_7, %c0_8] : memref<128x128xf32, #tpu.memory_space<vmem>>, vector<128x128xf32>
    tpu.vector_store %arg5[%c0_7, %c0_8], %10 {strides = array<i32>} : memref<128x128xf32, #tpu.memory_space<vmem>>, vector<128x128xf32>,
    return
  }
  func.func @transform_0(%arg0: i32) -> (i32, i32) {
    %c0_i32 = arith.constant 0 : i32
    %c0_i32_0 = arith.constant 0 : i32
    return %arg0, %c0_i32 : i32, i32
  }
  func.func @transform_1(%arg0: i32) -> (i32, i32) {
    %c0_i32 = arith.constant 0 : i32
    %c0_i32_0 = arith.constant 0 : i32
    return %arg0, %c0_i32 : i32, i32
  }
  func.func @transform_2(%arg0: i32) -> (i32, i32) {
    %c0_i32 = arith.constant 0 : i32
    %c0_i32_0 = arith.constant 0 : i32
    %c0_i32_1 = arith.constant 0 : i32
    return %c0_i32, %c0_i32_0 : i32, i32
  }
  func.func @transform_3(%arg0: i32) -> (i32, i32) {
    %c0_i32 = arith.constant 0 : i32
    %c0_i32_0 = arith.constant 0 : i32
    %c0_i32_1 = arith.constant 0 : i32
    return %c0_i32, %c0_i32_0 : i32, i32
  }
  func.func @transform_4(%arg0: i32) -> (i32, i32) {
    %c0_i32 = arith.constant 0 : i32
    %c0_i32_0 = arith.constant 0 : i32
    return %arg0, %c0_i32 : i32, i32
  }
}

</mosaic_0001>

<llo_original>
// kernel: resnet_block_forward.4
$region0: #{resnet_block_forward.4}
  #allocation0 [shape = 'u32[]', space=smem, size = 0x4, offset = 0x4, fixed_abs, tag = 'smem constant byte address 0x4 - core index']
  #allocation1 [shape = 'u32[144,128]{1,0:T(1,128)}', space=vmem, size = 0x12000, scoped, tag = 'internal scratch']
  %s0 = inlined_call_operand.vmem [shape: bf16[128,128], index: 0, kind: input, shape index: {}]
  %s1 = inlined_call_operand.vmem [shape: bf16[128,128], index: 1, kind: input, shape index: {}]
  %s2 = inlined_call_operand.vmem [shape: f32[128,128], index: 2, kind: output, shape index: {0}]
  %s3 = inlined_call_operand.vmem [shape: f32[1,128], index: 3, kind: output, shape index: {1}]
  %s4 = inlined_call_operand.vmem [shape: f32[1,128], index: 4, kind: output, shape index: {2}]
  %5 = xla_tuple %s2, %s3, %s4
  %s6 = sld [smem:[#allocation0]]
  $region38: #{resnet_block_forward.4} parent=0
    _
  %s8 = ssub.s32 1, %s6
  %s9 = scalar_select 0, %s8, %s6
  // Predicated region
  $region2: #{resnet_block_forward.4} parent=0 // pred_check
    _
  $region3: #{resnet_block_forward.4} parent=0 // pred_check_branch
    %11 = sbr.rel (0) target = $region5
  $region4: #{resnet_block_forward.4} parent=0 // pred_region
    _
  $region5: #{resnet_block_forward.4} parent=0 // pred_fallthru
    _
  // Predicated region
  $region6: #{resnet_block_forward.4} parent=0 // pred_check
    _
  $region7: #{resnet_block_forward.4} parent=0 // pred_check_branch
    %13 = sbr.rel (0) target = $region9
  $region8: #{resnet_block_forward.4} parent=0 // pred_region
    _
  $region9: #{resnet_block_forward.4} parent=0 // pred_fallthru
    _
  %v15 = vld [vmem:[%s0] sm:$0xf]
  %v16 = vld [vmem:[%s0 + $0x4] sm:$0xf]
  %v17 = vld [vmem:[%s0 + $0x8] sm:$0xf]
  %v18 = vld [vmem:[%s0 + $0xc] sm:$0xf]
  %v19 = vld [vmem:[%s0 + $0x10] sm:$0xf]
  %v20 = vld [vmem:[%s0 + $0x14] sm:$0xf]
  %v21 = vld [vmem:[%s0 + $0x18] sm:$0xf]
  %v22 = vld [vmem:[%s0 + $0x1c] sm:$0xf]
  %v23 = vld [vmem:[%s0 + $0x20] sm:$0xf]
  %v24 = vld [vmem:[%s0 + $0x24] sm:$0xf]
  %v25 = vld [vmem:[%s0 + $0x28] sm:$0xf]
  %v26 = vld [vmem:[%s0 + $0x2c] sm:$0xf]
  %v27 = vld [vmem:[%s0 + $0x30] sm:$0xf]
  %v28 = vld [vmem:[%s0 + $0x34] sm:$0xf]
  %v29 = vld [vmem:[%s0 + $0x38] sm:$0xf]
  %v30 = vld [vmem:[%s0 + $0x3c] sm:$0xf]
  %v31 = vld [vmem:[%s1] sm:$0xf]
  %v32 = vld [vmem:[%s1 + $0x4] sm:$0xf]
  %v33 = vld [vmem:[%s1 + $0x8] sm:$0xf]
  %v34 = vld [vmem:[%s1 + $0xc] sm:$0xf]
  %v35 = vld [vmem:[%s1 + $0x10] sm:$0xf]
  %v36 = vld [vmem:[%s1 + $0x14] sm:$0xf]
  %v37 = vld [vmem:[%s1 + $0x18] sm:$0xf]
  %v38 = vld [vmem:[%s1 + $0x1c] sm:$0xf]
  %v39 = vld [vmem:[%s1 + $0x20] sm:$0xf]
  %v40 = vld [vmem:[%s1 + $0x24] sm:$0xf]
  %v41 = vld [vmem:[%s1 + $0x28] sm:$0xf]
  %v42 = vld [vmem:[%s1 + $0x2c] sm:$0xf]
  %v43 = vld [vmem:[%s1 + $0x30] sm:$0xf]
  %v44 = vld [vmem:[%s1 + $0x34] sm:$0xf]
  %v45 = vld [vmem:[%s1 + $0x38] sm:$0xf]
  %v46 = vld [vmem:[%s1 + $0x3c] sm:$0xf]
  %v63 = vunpack.c.l.b16 %v15
  %v64 = vunpack.c.l.b16 %v16
  %v65 = vunpack.c.l.b16 %v17
  %v66 = vunpack.c.l.b16 %v18
  %v67 = vunpack.c.l.b16 %v19
  %v68 = vunpack.c.l.b16 %v20
  %v69 = vunpack.c.l.b16 %v21
  %v70 = vunpack.c.l.b16 %v22
  %v71 = vunpack.c.l.b16 %v23
  %v72 = vunpack.c.l.b16 %v24
  %v73 = vunpack.c.l.b16 %v25
  %v74 = vunpack.c.l.b16 %v26
  %v75 = vunpack.c.l.b16 %v27
  %v76 = vunpack.c.l.b16 %v28
  %v77 = vunpack.c.l.b16 %v29
  %v78 = vunpack.c.l.b16 %v30
  %v79 = vpack.c.b16 %v64, %v63
  %v80 = vpack.c.b16 %v66, %v65
  %v81 = vpack.c.b16 %v68, %v67
  %v82 = vpack.c.b16 %v70, %v69
  %v83 = vpack.c.b16 %v72, %v71
  %v84 = vpack.c.b16 %v74, %v73
  %v85 = vpack.c.b16 %v76, %v75
  %v86 = vpack.c.b16 %v78, %v77
  %v111 = vunpack.c.l.b16 %v31
  %v112 = vunpack.c.l.b16 %v32
  %v113 = vunpack.c.l.b16 %v33
  %v114 = vunpack.c.l.b16 %v34
  %v115 = vunpack.c.l.b16 %v35
  %v116 = vunpack.c.l.b16 %v36
  %v117 = vunpack.c.l.b16 %v37
  %v118 = vunpack.c.l.b16 %v38
  %v119 = vunpack.c.l.b16 %v39
  %v120 = vunpack.c.l.b16 %v40
  %v121 = vunpack.c.l.b16 %v41
  %v122 = vunpack.c.l.b16 %v42
  %v123 = vunpack.c.l.b16 %v43
  %v124 = vunpack.c.l.b16 %v44
  %v125 = vunpack.c.l.b16 %v45
  %v126 = vunpack.c.l.b16 %v46
  %v127 = vpack.c.b16 %v112, %v111
  %v128 = vpack.c.b16 %v114, %v113
  %v129 = vpack.c.b16 %v116, %v115
  %v130 = vpack.c.b16 %v118, %v117
  %v131 = vpack.c.b16 %v120, %v119
  %v132 = vpack.c.b16 %v122, %v121
  %v133 = vpack.c.b16 %v124, %v123
  %v134 = vpack.c.b16 %v126, %v125
  %143 = vmatprep.subr.bf16.mxu0 0
  %144 = vmatpush1.bf16.msra.mxu0 %v127
  %145 = vmatprep.subr.bf16.mxu0 0
  %146 = vmatpush1.bf16.msra.mxu0 %v128
  %147 = vmatprep.subr.bf16.mxu0 0
  %148 = vmatpush1.bf16.msra.mxu0 %v129
  %149 = vmatprep.subr.bf16.mxu0 0
  %150 = vmatpush1.bf16.msra.mxu0 %v130
  %151 = vmatprep.subr.bf16.mxu0 0
  %152 = vmatpush1.bf16.msra.mxu0 %v131
  %153 = vmatprep.subr.bf16.mxu0 0
  %154 = vmatpush1.bf16.msra.mxu0 %v132
  %155 = vmatprep.subr.bf16.mxu0 0
  %156 = vmatpush1.bf16.msra.mxu0 %v133
  %157 = vmatprep.subr.bf16.mxu0 0
  %158 = vmatpush1.bf16.msra.mxu0 %v134
  %159 = vmatprep.subr.bf16.mxu0 0
  %160 = vmatpush1.bf16.msra.mxu0 0
  %161 = vmatprep.subr.bf16.mxu0 0
  %162 = vmatpush1.bf16.msra.mxu0 0
  %163 = vmatprep.subr.bf16.mxu0 0
  %164 = vmatpush1.bf16.msra.mxu0 0
  %165 = vmatprep.subr.bf16.mxu0 0
  %166 = vmatpush1.bf16.msra.mxu0 0
  %167 = vmatprep.subr.bf16.mxu0 0
  %168 = vmatpush1.bf16.msra.mxu0 0
  %169 = vmatprep.subr.bf16.mxu0 0
  %170 = vmatpush1.bf16.msra.mxu0 0
  %171 = vmatprep.subr.bf16.mxu0 0
  %172 = vmatpush1.bf16.msra.mxu0 0
  %173 = vmatprep.subr.bf16.mxu0 0
  %174 = vmatpush1.bf16.msra.mxu0 0
  %175 = vmatprep.mubr.bf16.mxu0 0
  %176 = vmatmul.mubr.bf16.gmra.mrb[0].mxu0 %v79
  %v177 = vpop.f32.mrb[0].mxu0
  %v178 = vadd.f32 0.0, %v177
  %v179 = vpop.f32.mrb[0].mxu0
  %v180 = vpop.f32.mrb[0].mxu0
  %v181 = vadd.f32 0.0, %v180
  %v182 = vpop.f32.mrb[0].mxu0
  %183 = vmatprep.mubr.bf16.mxu0 0
  %184 = vmatmul.mubr.bf16.gmra.mrb[0].mxu0 %v80
  %v185 = vpop.f32.mrb[0].mxu0
  %v186 = vadd.f32 0.0, %v185
  %v187 = vpop.f32.mrb[0].mxu0
  %v188 = vpop.f32.mrb[0].mxu0
  %v189 = vadd.f32 0.0, %v188
  %v190 = vpop.f32.mrb[0].mxu0
  %191 = vmatprep.mubr.bf16.mxu0 0
  %192 = vmatmul.mubr.bf16.gmra.mrb[0].mxu0 %v81
  %v193 = vpop.f32.mrb[0].mxu0
  %v194 = vadd.f32 0.0, %v193
  %v195 = vpop.f32.mrb[0].mxu0
  %v196 = vpop.f32.mrb[0].mxu0
  %v197 = vadd.f32 0.0, %v196
  %v198 = vpop.f32.mrb[0].mxu0
  %199 = vmatprep.mubr.bf16.mxu0 0
  %200 = vmatmul.mubr.bf16.gmra.mrb[0].mxu0 %v82
  %v201 = vpop.f32.mrb[0].mxu0
  %v202 = vadd.f32 0.0, %v201
  %v203 = vpop.f32.mrb[0].mxu0
  %v204 = vpop.f32.mrb[0].mxu0
  %v205 = vadd.f32 0.0, %v204
  %v206 = vpop.f32.mrb[0].mxu0
  %207 = vmatprep.mubr.bf16.mxu0 0
  %208 = vmatmul.mubr.bf16.gmra.mrb[0].mxu0 %v83
  %v209 = vpop.f32.mrb[0].mxu0
  %v210 = vadd.f32 0.0, %v209
  %v211 = vpop.f32.mrb[0].mxu0
  %v212 = vpop.f32.mrb[0].mxu0
  %v213 = vadd.f32 0.0, %v212
  %v214 = vpop.f32.mrb[0].mxu0
  %215 = vmatprep.mubr.bf16.mxu0 0
  %216 = vmatmul.mubr.bf16.gmra.mrb[0].mxu0 %v84
  %v217 = vpop.f32.mrb[0].mxu0
  %v218 = vadd.f32 0.0, %v217
  %v219 = vpop.f32.mrb[0].mxu0
  %v220 = vpop.f32.mrb[0].mxu0
  %v221 = vadd.f32 0.0, %v220
  %v222 = vpop.f32.mrb[0].mxu0
  %223 = vmatprep.mubr.bf16.mxu0 0
  %224 = vmatmul.mubr.bf16.gmra.mrb[0].mxu0 %v85
  %v225 = vpop.f32.mrb[0].mxu0
  %v226 = vadd.f32 0.0, %v225
  %v227 = vpop.f32.mrb[0].mxu0
  %v228 = vpop.f32.mrb[0].mxu0
  %v229 = vadd.f32 0.0, %v228
  %v230 = vpop.f32.mrb[0].mxu0
  %231 = vmatprep.mubr.bf16.mxu0 0
  %232 = vmatmul.mubr.bf16.gmra.mrb[0].mxu0 %v86
  %v233 = vpop.f32.mrb[0].mxu0
  %v234 = vadd.f32 0.0, %v233
  %v235 = vpop.f32.mrb[0].mxu0
  %v236 = vpop.f32.mrb[0].mxu0
  %v237 = vadd.f32 0.0, %v236
  %v238 = vpop.f32.mrb[0].mxu0
  %239 = vdwg.mxu0
  %240 = vst [vmem:[%s2] sm:$0xff] %v178
  %241 = vst [vmem:[%s2 + $0x8] sm:$0xff] %v181
  %242 = vst [vmem:[%s2 + $0x10] sm:$0xff] %v186
  %243 = vst [vmem:[%s2 + $0x18] sm:$0xff] %v189
  %244 = vst [vmem:[%s2 + $0x20] sm:$0xff] %v194
  %245 = vst [vmem:[%s2 + $0x28] sm:$0xff] %v197
  %246 = vst [vmem:[%s2 + $0x30] sm:$0xff] %v202
  %247 = vst [vmem:[%s2 + $0x38] sm:$0xff] %v205
  %248 = vst [vmem:[%s2 + $0x40] sm:$0xff] %v210
  %249 = vst [vmem:[%s2 + $0x48] sm:$0xff] %v213
  %250 = vst [vmem:[%s2 + $0x50] sm:$0xff] %v218
  %251 = vst [vmem:[%s2 + $0x58] sm:$0xff] %v221
  %252 = vst [vmem:[%s2 + $0x60] sm:$0xff] %v226
  %253 = vst [vmem:[%s2 + $0x68] sm:$0xff] %v229
  %254 = vst [vmem:[%s2 + $0x70] sm:$0xff] %v234
  %255 = vst [vmem:[%s2 + $0x78] sm:$0xff] %v237
  %p256 = scmp.eq.s32.totalorder 0, 0
  // Predicated region
  $region10: #{resnet_block_forward.4} parent=0 // pred_check
    %p257 = pneg %p256
  $region11: #{resnet_block_forward.4} parent=0 // pred_check_branch
    %259 = sbr.rel (%p257) target = $region13
  $region12: #{resnet_block_forward.4} parent=0 // pred_region
    %260 = vst [vmem:[%s3] sm:$0x1] 0.0
    %261 = vst [vmem:[%s4] sm:$0x1] 0.0
  $region13: #{resnet_block_forward.4} parent=0 // pred_fallthru
    _
  %v262 = vld [vmem:[%s3] sm:$0x1]
  %v263 = vadd.f32 %v178, %v181
  %v264 = vadd.f32 %v263, %v186
  %v265 = vadd.f32 %v264, %v189
  %v266 = vadd.f32 %v265, %v194
  %v267 = vadd.f32 %v266, %v197
  %v268 = vadd.f32 %v267, %v202
  %v269 = vadd.f32 %v268, %v205
  %v270 = vadd.f32 %v269, %v210
  %v271 = vadd.f32 %v270, %v213
  %v272 = vadd.f32 %v271, %v218
  %v273 = vadd.f32 %v272, %v221
  %v274 = vadd.f32 %v273, %v226
  %v275 = vadd.f32 %v274, %v229
  %v276 = vadd.f32 %v275, %v234
  %v277 = vadd.f32 %v276, %v237
  %v278 = vrot.slane %v277, 4
  %v279 = vadd.f32 %v277, %v278
  %v280 = vrot.slane %v279, 2
  %v281 = vadd.f32 %v279, %v280
  %v282 = vrot.slane %v281, 1
  %v283 = vadd.f32 %v281, %v282
  %v284 = vadd.f32 %v262, %v283
  %285 = vst [vmem:[%s3] sm:$0x1] %v284
  %v286 = vld [vmem:[%s4] sm:$0x1]
  %v287 = vmul.f32 %v178, %v178
  %v288 = vmul.f32 %v181, %v181
  %v289 = vmul.f32 %v186, %v186
  %v290 = vmul.f32 %v189, %v189
  %v291 = vmul.f32 %v194, %v194
  %v292 = vmul.f32 %v197, %v197
  %v293 = vmul.f32 %v202, %v202
  %v294 = vmul.f32 %v205, %v205
  %v295 = vmul.f32 %v210, %v210
  %v296 = vmul.f32 %v213, %v213
  %v297 = vmul.f32 %v218, %v218
  %v298 = vmul.f32 %v221, %v221
  %v299 = vmul.f32 %v226, %v226
  %v300 = vmul.f32 %v229, %v229
  %v301 = vmul.f32 %v234, %v234
  %v302 = vmul.f32 %v237, %v237
  %v303 = vadd.f32 %v287, %v288
  %v304 = vadd.f32 %v303, %v289
  %v305 = vadd.f32 %v304, %v290
  %v306 = vadd.f32 %v305, %v291
  %v307 = vadd.f32 %v306, %v292
  %v308 = vadd.f32 %v307, %v293
  %v309 = vadd.f32 %v308, %v294
  %v310 = vadd.f32 %v309, %v295
  %v311 = vadd.f32 %v310, %v296
  %v312 = vadd.f32 %v311, %v297
  %v313 = vadd.f32 %v312, %v298
  %v314 = vadd.f32 %v313, %v299
  %v315 = vadd.f32 %v314, %v300
  %v316 = vadd.f32 %v315, %v301
  %v317 = vadd.f32 %v316, %v302
  %v318 = vrot.slane %v317, 4
  %v319 = vadd.f32 %v317, %v318
  %v320 = vrot.slane %v319, 2
  %v321 = vadd.f32 %v319, %v320
  %v322 = vrot.slane %v321, 1
  %v323 = vadd.f32 %v321, %v322
  %v324 = vadd.f32 %v286, %v323
  %325 = vst [vmem:[%s4] sm:$0x1] %v324
  // Predicated region
  $region14: #{resnet_block_forward.4} parent=0 // pred_check
    _
  $region15: #{resnet_block_forward.4} parent=0 // pred_check_branch
    %327 = sbr.rel (0) target = $region17
  $region16: #{resnet_block_forward.4} parent=0 // pred_region
    _
  $region17: #{resnet_block_forward.4} parent=0 // pred_fallthru
    _
  // Predicated region
  $region18: #{resnet_block_forward.4} parent=0 // pred_check
    _
  $region19: #{resnet_block_forward.4} parent=0 // pred_check_branch
    %329 = sbr.rel (0) target = $region21
  $region20: #{resnet_block_forward.4} parent=0 // pred_region
    _
  $region21: #{resnet_block_forward.4} parent=0 // pred_fallthru
    _
  // Predicated region
  $region22: #{resnet_block_forward.4} parent=0 // pred_check
    _
  $region23: #{resnet_block_forward.4} parent=0 // pred_check_branch
    %331 = sbr.rel (0) target = $region25
  $region24: #{resnet_block_forward.4} parent=0 // pred_region
    _
  $region25: #{resnet_block_forward.4} parent=0 // pred_fallthru
    _
  // Predicated region
  $region26: #{resnet_block_forward.4} parent=0 // pred_check
    _
  $region27: #{resnet_block_forward.4} parent=0 // pred_check_branch
    %333 = sbr.rel (0) target = $region29
  $region28: #{resnet_block_forward.4} parent=0 // pred_region
    _
  $region29: #{resnet_block_forward.4} parent=0 // pred_fallthru
    _
  // Predicated region
  $region30: #{resnet_block_forward.4} parent=0 // pred_check
    _
  $region31: #{resnet_block_forward.4} parent=0 // pred_check_branch
    %335 = sbr.rel (0) target = $region33
  $region32: #{resnet_block_forward.4} parent=0 // pred_region
    _
  $region33: #{resnet_block_forward.4} parent=0 // pred_fallthru
    _
  // Predicated region
  $region34: #{resnet_block_forward.4} parent=0 // pred_check
    _
  $region35: #{resnet_block_forward.4} parent=0 // pred_check_branch
    %337 = sbr.rel (0) target = $region37
  $region36: #{resnet_block_forward.4} parent=0 // pred_region
    _
  $region37: #{resnet_block_forward.4} parent=0 // pred_fallthru
    _

// kernel: resnet_block_forward.7
$region0: #{resnet_block_forward.7}
  #allocation0 [shape = 'u32[]', space=smem, size = 0x4, offset = 0x4, fixed_abs, tag = 'smem constant byte address 0x4 - core index']
  #allocation1 [shape = 'u32[144,128]{1,0:T(1,128)}', space=vmem, size = 0x12000, scoped, tag = 'internal scratch']
  %s0 = inlined_call_operand.vmem [shape: f32[128,128], index: 0, kind: input, shape index: {}]
  %s1 = inlined_call_operand.vmem [shape: f32[128,128], index: 1, kind: input, shape index: {}]
  %s2 = inlined_call_operand.vmem [shape: f32[1,128], index: 2, kind: input, shape index: {}]
  %s3 = inlined_call_operand.vmem [shape: f32[1,128], index: 3, kind: input, shape index: {}]
  %s4 = inlined_call_operand.hbm [shape: f32[128,128], index: 4, kind: output, shape index: {}]
  %s5 = sld [smem:[#allocation0]]
  $region26: #{resnet_block_forward.7} parent=0
    _
  %s7 = ssub.s32 1, %s5
  %s8 = scalar_select 0, %s7, %s5
  $region1: #{resnet_block_forward.7} parent=0
    #allocation2 [shape = 'u8[65536]{0}', space=vmem, size = 0x10000, scoped, tag = 'output window, operand 0, single buffered']
    #allocation3 [shape = 's32[1]{0}', space=sflag, size = 0x4, scoped, tag = 'scoped memory for resnet_block_forward.7']
    %9 = vsyncpa [#allocation3], 0
    // Predicated region
    $region2: #{resnet_block_forward.7} parent=1 // pred_check
      _
    $region3: #{resnet_block_forward.7} parent=1 // pred_check_branch
      %11 = sbr.rel (0) target = $region5
    $region4: #{resnet_block_forward.7} parent=1 // pred_region
      _
    $region5: #{resnet_block_forward.7} parent=1 // pred_fallthru
      _
    // Predicated region
    $region6: #{resnet_block_forward.7} parent=1 // pred_check
      _
    $region7: #{resnet_block_forward.7} parent=1 // pred_check_branch
      %13 = sbr.rel (0) target = $region9
    $region8: #{resnet_block_forward.7} parent=1 // pred_region
      _
    $region9: #{resnet_block_forward.7} parent=1 // pred_fallthru
      _
    // Predicated region
    $region10: #{resnet_block_forward.7} parent=1 // pred_check
      _
    $region11: #{resnet_block_forward.7} parent=1 // pred_check_branch
      %15 = sbr.rel (0) target = $region13
    $region12: #{resnet_block_forward.7} parent=1 // pred_region
      _
    $region13: #{resnet_block_forward.7} parent=1 // pred_fallthru
      _
    // Predicated region
    $region14: #{resnet_block_forward.7} parent=1 // pred_check
      _
    $region15: #{resnet_block_forward.7} parent=1 // pred_check_branch
      %17 = sbr.rel (0) target = $region17
    $region16: #{resnet_block_forward.7} parent=1 // pred_region
      _
    $region17: #{resnet_block_forward.7} parent=1 // pred_fallthru
      _
    %v18 = vld [vmem:[%s0] sm:$0xff]
    %v19 = vld [vmem:[%s0 + $0x8] sm:$0xff]
    %v20 = vld [vmem:[%s0 + $0x10] sm:$0xff]
    %v21 = vld [vmem:[%s0 + $0x18] sm:$0xff]
    %v22 = vld [vmem:[%s0 + $0x20] sm:$0xff]
    %v23 = vld [vmem:[%s0 + $0x28] sm:$0xff]
    %v24 = vld [vmem:[%s0 + $0x30] sm:$0xff]
    %v25 = vld [vmem:[%s0 + $0x38] sm:$0xff]
    %v26 = vld [vmem:[%s0 + $0x40] sm:$0xff]
    %v27 = vld [vmem:[%s0 + $0x48] sm:$0xff]
    %v28 = vld [vmem:[%s0 + $0x50] sm:$0xff]
    %v29 = vld [vmem:[%s0 + $0x58] sm:$0xff]
    %v30 = vld [vmem:[%s0 + $0x60] sm:$0xff]
    %v31 = vld [vmem:[%s0 + $0x68] sm:$0xff]
    %v32 = vld [vmem:[%s0 + $0x70] sm:$0xff]
    %v33 = vld [vmem:[%s0 + $0x78] sm:$0xff]
    %v34 = vld [vmem:[%s2] sm:$0x1]
    %v36 = vlaneseq
    %v37 = vshrl.u32 %v36, 7
    %v38 = vsub.s32 0, %v37
    %v39 = vrot.slane %v34, %v38
    %v41 = vmul.f32 %v18, %v39
    %v42 = vmul.f32 %v19, %v39
    %v43 = vmul.f32 %v20, %v39
    %v44 = vmul.f32 %v21, %v39
    %v45 = vmul.f32 %v22, %v39
    %v46 = vmul.f32 %v23, %v39
    %v47 = vmul.f32 %v24, %v39
    %v48 = vmul.f32 %v25, %v39
    %v49 = vmul.f32 %v26, %v39
    %v50 = vmul.f32 %v27, %v39
    %v51 = vmul.f32 %v28, %v39
    %v52 = vmul.f32 %v29, %v39
    %v53 = vmul.f32 %v30, %v39
    %v54 = vmul.f32 %v31, %v39
    %v55 = vmul.f32 %v32, %v39
    %v56 = vmul.f32 %v33, %v39
    %v57 = vld [vmem:[%s3] sm:$0x1]
    %v59 = vlaneseq
    %v60 = vshrl.u32 %v59, 7
    %v61 = vsub.s32 0, %v60
    %v62 = vrot.slane %v57, %v61
    %v64 = vadd.f32 %v41, %v62
    %v65 = vadd.f32 %v42, %v62
    %v66 = vadd.f32 %v43, %v62
    %v67 = vadd.f32 %v44, %v62
    %v68 = vadd.f32 %v45, %v62
    %v69 = vadd.f32 %v46, %v62
    %v70 = vadd.f32 %v47, %v62
    %v71 = vadd.f32 %v48, %v62
    %v72 = vadd.f32 %v49, %v62
    %v73 = vadd.f32 %v50, %v62
    %v74 = vadd.f32 %v51, %v62
    %v75 = vadd.f32 %v52, %v62
    %v76 = vadd.f32 %v53, %v62
    %v77 = vadd.f32 %v54, %v62
    %v78 = vadd.f32 %v55, %v62
    %v79 = vadd.f32 %v56, %v62
    %v80 = vld [vmem:[%s1] sm:$0xff]
    %v81 = vld [vmem:[%s1 + $0x8] sm:$0xff]
    %v82 = vld [vmem:[%s1 + $0x10] sm:$0xff]
    %v83 = vld [vmem:[%s1 + $0x18] sm:$0xff]
    %v84 = vld [vmem:[%s1 + $0x20] sm:$0xff]
    %v85 = vld [vmem:[%s1 + $0x28] sm:$0xff]
    %v86 = vld [vmem:[%s1 + $0x30] sm:$0xff]
    %v87 = vld [vmem:[%s1 + $0x38] sm:$0xff]
    %v88 = vld [vmem:[%s1 + $0x40] sm:$0xff]
    %v89 = vld [vmem:[%s1 + $0x48] sm:$0xff]
    %v90 = vld [vmem:[%s1 + $0x50] sm:$0xff]
    %v91 = vld [vmem:[%s1 + $0x58] sm:$0xff]
    %v92 = vld [vmem:[%s1 + $0x60] sm:$0xff]
    %v93 = vld [vmem:[%s1 + $0x68] sm:$0xff]
    %v94 = vld [vmem:[%s1 + $0x70] sm:$0xff]
    %v95 = vld [vmem:[%s1 + $0x78] sm:$0xff]
    %v96 = vadd.f32 %v64, %v80
    %v97 = vadd.f32 %v65, %v81
    %v98 = vadd.f32 %v66, %v82
    %v99 = vadd.f32 %v67, %v83
    %v100 = vadd.f32 %v68, %v84
    %v101 = vadd.f32 %v69, %v85
    %v102 = vadd.f32 %v70, %v86
    %v103 = vadd.f32 %v71, %v87
    %v104 = vadd.f32 %v72, %v88
    %v105 = vadd.f32 %v73, %v89
    %v106 = vadd.f32 %v74, %v90
    %v107 = vadd.f32 %v75, %v91
    %v108 = vadd.f32 %v76, %v92
    %v109 = vadd.f32 %v77, %v93
    %v110 = vadd.f32 %v78, %v94
    %v111 = vadd.f32 %v79, %v95
    %v112 = vmax.f32 %v96, 0.0
    %v113 = vmax.f32 %v97, 0.0
    %v114 = vmax.f32 %v98, 0.0
    %v115 = vmax.f32 %v99, 0.0
    %v116 = vmax.f32 %v100, 0.0
    %v117 = vmax.f32 %v101, 0.0
    %v118 = vmax.f32 %v102, 0.0
    %v119 = vmax.f32 %v103, 0.0
    %v120 = vmax.f32 %v104, 0.0
    %v121 = vmax.f32 %v105, 0.0
    %v122 = vmax.f32 %v106, 0.0
    %v123 = vmax.f32 %v107, 0.0
    %v124 = vmax.f32 %v108, 0.0
    %v125 = vmax.f32 %v109, 0.0
    %v126 = vmax.f32 %v110, 0.0
    %v127 = vmax.f32 %v111, 0.0
    %128 = vst [vmem:[#allocation2] sm:$0xff] %v112
    %129 = vst [vmem:[#allocation2 + $0x8] sm:$0xff] %v113
    %130 = vst [vmem:[#allocation2 + $0x10] sm:$0xff] %v114
    %131 = vst [vmem:[#allocation2 + $0x18] sm:$0xff] %v115
    %132 = vst [vmem:[#allocation2 + $0x20] sm:$0xff] %v116
    %133 = vst [vmem:[#allocation2 + $0x28] sm:$0xff] %v117
    %134 = vst [vmem:[#allocation2 + $0x30] sm:$0xff] %v118
    %135 = vst [vmem:[#allocation2 + $0x38] sm:$0xff] %v119
    %136 = vst [vmem:[#allocation2 + $0x40] sm:$0xff] %v120
    %137 = vst [vmem:[#allocation2 + $0x48] sm:$0xff] %v121
    %138 = vst [vmem:[#allocation2 + $0x50] sm:$0xff] %v122
    %139 = vst [vmem:[#allocation2 + $0x58] sm:$0xff] %v123
    %140 = vst [vmem:[#allocation2 + $0x60] sm:$0xff] %v124
    %141 = vst [vmem:[#allocation2 + $0x68] sm:$0xff] %v125
    %142 = vst [vmem:[#allocation2 + $0x70] sm:$0xff] %v126
    %143 = vst [vmem:[#allocation2 + $0x78] sm:$0xff] %v127
    // Predicated region
    $region18: #{resnet_block_forward.7} parent=1 // pred_check
      _
    $region19: #{resnet_block_forward.7} parent=1 // pred_check_branch
      %145 = sbr.rel (0) target = $region21
    $region20: #{resnet_block_forward.7} parent=1 // pred_region
      %s147 = ssub.s32 2048, 2048
      %148 = vsyncadd [#allocation3], %s147
      %s149 = sshll.u32 [#allocation2], 4
      %s150 = int_to_ptr.vmem [resolvable:$true] %s149
      %155 = dma.vmem_to_hbm [thread:$0]  %s150, 2048, %s4, [#allocation3], 128, 128, 8
    $region21: #{resnet_block_forward.7} parent=1 // pred_fallthru
      _
    // Predicated region
    $region22: #{resnet_block_forward.7} parent=1 // pred_check
      _
    $region23: #{resnet_block_forward.7} parent=1 // pred_check_branch
      %157 = sbr.rel (0) target = $region25
    $region24: #{resnet_block_forward.7} parent=1 // pred_region
      %158 = dma.done [#allocation3], 2048
    $region25: #{resnet_block_forward.7} parent=1 // pred_fallthru
      _
    %159 = vsyncpa [#allocation3], 1

// kernel: resnet_block_forward.6
$region0: #{resnet_block_forward.6}
  #allocation0 [shape = 'u32[]', space=smem, size = 0x4, offset = 0x4, fixed_abs, tag = 'smem constant byte address 0x4 - core index']
  #allocation1 [shape = 'u32[144,128]{1,0:T(1,128)}', space=vmem, size = 0x12000, scoped, tag = 'internal scratch']
  %s0 = inlined_call_operand.vmem [shape: f32[128,128], index: 0, kind: input, shape index: {}]
  %s1 = inlined_call_operand.vmem [shape: f32[1,128], index: 1, kind: input, shape index: {}]
  %s2 = inlined_call_operand.vmem [shape: f32[1,128], index: 2, kind: input, shape index: {}]
  %s3 = inlined_call_operand.vmem [shape: bf16[128,128], index: 3, kind: input, shape index: {}]
  %s4 = inlined_call_operand.vmem [shape: f32[128,128], index: 4, kind: output, shape index: {0}]
  %s5 = inlined_call_operand.vmem [shape: f32[1,128], index: 5, kind: output, shape index: {1}]
  %s6 = inlined_call_operand.vmem [shape: f32[1,128], index: 6, kind: output, shape index: {2}]
  %7 = xla_tuple %s4, %s5, %s6
  %s8 = sld [smem:[#allocation0]]
  $region46: #{resnet_block_forward.6} parent=0
    _
  %s10 = ssub.s32 1, %s8
  %s11 = scalar_select 0, %s10, %s8
  // Predicated region
  $region2: #{resnet_block_forward.6} parent=0 // pred_check
    _
  $region3: #{resnet_block_forward.6} parent=0 // pred_check_branch
    %13 = sbr.rel (0) target = $region5
  $region4: #{resnet_block_forward.6} parent=0 // pred_region
    _
  $region5: #{resnet_block_forward.6} parent=0 // pred_fallthru
    _
  // Predicated region
  $region6: #{resnet_block_forward.6} parent=0 // pred_check
    _
  $region7: #{resnet_block_forward.6} parent=0 // pred_check_branch
    %15 = sbr.rel (0) target = $region9
  $region8: #{resnet_block_forward.6} parent=0 // pred_region
    _
  $region9: #{resnet_block_forward.6} parent=0 // pred_fallthru
    _
  // Predicated region
  $region10: #{resnet_block_forward.6} parent=0 // pred_check
    _
  $region11: #{resnet_block_forward.6} parent=0 // pred_check_branch
    %17 = sbr.rel (0) target = $region13
  $region12: #{resnet_block_forward.6} parent=0 // pred_region
    _
  $region13: #{resnet_block_forward.6} parent=0 // pred_fallthru
    _
  // Predicated region
  $region14: #{resnet_block_forward.6} parent=0 // pred_check
    _
  $region15: #{resnet_block_forward.6} parent=0 // pred_check_branch
    %19 = sbr.rel (0) target = $region17
  $region16: #{resnet_block_forward.6} parent=0 // pred_region
    _
  $region17: #{resnet_block_forward.6} parent=0 // pred_fallthru
    _
  %v21 = vld [vmem:[%s0] sm:$0xff]
  %v22 = vld [vmem:[%s0 + $0x8] sm:$0xff]
  %v23 = vld [vmem:[%s0 + $0x10] sm:$0xff]
  %v24 = vld [vmem:[%s0 + $0x18] sm:$0xff]
  %v25 = vld [vmem:[%s0 + $0x20] sm:$0xff]
  %v26 = vld [vmem:[%s0 + $0x28] sm:$0xff]
  %v27 = vld [vmem:[%s0 + $0x30] sm:$0xff]
  %v28 = vld [vmem:[%s0 + $0x38] sm:$0xff]
  %v29 = vld [vmem:[%s0 + $0x40] sm:$0xff]
  %v30 = vld [vmem:[%s0 + $0x48] sm:$0xff]
  %v31 = vld [vmem:[%s0 + $0x50] sm:$0xff]
  %v32 = vld [vmem:[%s0 + $0x58] sm:$0xff]
  %v33 = vld [vmem:[%s0 + $0x60] sm:$0xff]
  %v34 = vld [vmem:[%s0 + $0x68] sm:$0xff]
  %v35 = vld [vmem:[%s0 + $0x70] sm:$0xff]
  %v36 = vld [vmem:[%s0 + $0x78] sm:$0xff]
  %v37 = vld [vmem:[%s1] sm:$0x1]
  %v39 = vlaneseq
  %v40 = vshrl.u32 %v39, 7
  %v41 = vsub.s32 0, %v40
  %v42 = vrot.slane %v37, %v41
  %v44 = vmul.f32 %v21, %v42
  %v45 = vmul.f32 %v22, %v42
  %v46 = vmul.f32 %v23, %v42
  %v47 = vmul.f32 %v24, %v42
  %v48 = vmul.f32 %v25, %v42
  %v49 = vmul.f32 %v26, %v42
  %v50 = vmul.f32 %v27, %v42
  %v51 = vmul.f32 %v28, %v42
  %v52 = vmul.f32 %v29, %v42
  %v53 = vmul.f32 %v30, %v42
  %v54 = vmul.f32 %v31, %v42
  %v55 = vmul.f32 %v32, %v42
  %v56 = vmul.f32 %v33, %v42
  %v57 = vmul.f32 %v34, %v42
  %v58 = vmul.f32 %v35, %v42
  %v59 = vmul.f32 %v36, %v42
  %v60 = vld [vmem:[%s2] sm:$0x1]
  %v62 = vlaneseq
  %v63 = vshrl.u32 %v62, 7
  %v64 = vsub.s32 0, %v63
  %v65 = vrot.slane %v60, %v64
  %v67 = vadd.f32 %v44, %v65
  %v68 = vadd.f32 %v45, %v65
  %v69 = vadd.f32 %v46, %v65
  %v70 = vadd.f32 %v47, %v65
  %v71 = vadd.f32 %v48, %v65
  %v72 = vadd.f32 %v49, %v65
  %v73 = vadd.f32 %v50, %v65
  %v74 = vadd.f32 %v51, %v65
  %v75 = vadd.f32 %v52, %v65
  %v76 = vadd.f32 %v53, %v65
  %v77 = vadd.f32 %v54, %v65
  %v78 = vadd.f32 %v55, %v65
  %v79 = vadd.f32 %v56, %v65
  %v80 = vadd.f32 %v57, %v65
  %v81 = vadd.f32 %v58, %v65
  %v82 = vadd.f32 %v59, %v65
  %v83 = vmax.f32 %v67, 0.0
  %v84 = vmax.f32 %v68, 0.0
  %v85 = vmax.f32 %v69, 0.0
  %v86 = vmax.f32 %v70, 0.0
  %v87 = vmax.f32 %v71, 0.0
  %v88 = vmax.f32 %v72, 0.0
  %v89 = vmax.f32 %v73, 0.0
  %v90 = vmax.f32 %v74, 0.0
  %v91 = vmax.f32 %v75, 0.0
  %v92 = vmax.f32 %v76, 0.0
  %v93 = vmax.f32 %v77, 0.0
  %v94 = vmax.f32 %v78, 0.0
  %v95 = vmax.f32 %v79, 0.0
  %v96 = vmax.f32 %v80, 0.0
  %v97 = vmax.f32 %v81, 0.0
  %v98 = vmax.f32 %v82, 0.0
  %v99 = vpack.c.bf16 %v84, %v83
  %v100 = vpack.c.bf16 %v86, %v85
  %v101 = vpack.c.bf16 %v88, %v87
  %v102 = vpack.c.bf16 %v90, %v89
  %v103 = vpack.c.bf16 %v92, %v91
  %v104 = vpack.c.bf16 %v94, %v93
  %v105 = vpack.c.bf16 %v96, %v95
  %v106 = vpack.c.bf16 %v98, %v97
  %v107 = vld [vmem:[%s3] sm:$0xf]
  %v108 = vld [vmem:[%s3 + $0x4] sm:$0xf]
  %v109 = vld [vmem:[%s3 + $0x8] sm:$0xf]
  %v110 = vld [vmem:[%s3 + $0xc] sm:$0xf]
  %v111 = vld [vmem:[%s3 + $0x10] sm:$0xf]
  %v112 = vld [vmem:[%s3 + $0x14] sm:$0xf]
  %v113 = vld [vmem:[%s3 + $0x18] sm:$0xf]
  %v114 = vld [vmem:[%s3 + $0x1c] sm:$0xf]
  %v115 = vld [vmem:[%s3 + $0x20] sm:$0xf]
  %v116 = vld [vmem:[%s3 + $0x24] sm:$0xf]
  %v117 = vld [vmem:[%s3 + $0x28] sm:$0xf]
  %v118 = vld [vmem:[%s3 + $0x2c] sm:$0xf]
  %v119 = vld [vmem:[%s3 + $0x30] sm:$0xf]
  %v120 = vld [vmem:[%s3 + $0x34] sm:$0xf]
  %v121 = vld [vmem:[%s3 + $0x38] sm:$0xf]
  %v122 = vld [vmem:[%s3 + $0x3c] sm:$0xf]
  %v139 = vunpack.c.l.b16 %v107
  %v140 = vunpack.c.l.b16 %v108
  %v141 = vunpack.c.l.b16 %v109
  %v142 = vunpack.c.l.b16 %v110
  %v143 = vunpack.c.l.b16 %v111
  %v144 = vunpack.c.l.b16 %v112
  %v145 = vunpack.c.l.b16 %v113
  %v146 = vunpack.c.l.b16 %v114
  %v147 = vunpack.c.l.b16 %v115
  %v148 = vunpack.c.l.b16 %v116
  %v149 = vunpack.c.l.b16 %v117
  %v150 = vunpack.c.l.b16 %v118
  %v151 = vunpack.c.l.b16 %v119
  %v152 = vunpack.c.l.b16 %v120
  %v153 = vunpack.c.l.b16 %v121
  %v154 = vunpack.c.l.b16 %v122
  %v155 = vpack.c.b16 %v140, %v139
  %v156 = vpack.c.b16 %v142, %v141
  %v157 = vpack.c.b16 %v144, %v143
  %v158 = vpack.c.b16 %v146, %v145
  %v159 = vpack.c.b16 %v148, %v147
  %v160 = vpack.c.b16 %v150, %v149
  %v161 = vpack.c.b16 %v152, %v151
  %v162 = vpack.c.b16 %v154, %v153
  %171 = vmatprep.subr.bf16.mxu0 0
  %172 = vmatpush1.bf16.msra.mxu0 %v155
  %173 = vmatprep.subr.bf16.mxu0 0
  %174 = vmatpush1.bf16.msra.mxu0 %v156
  %175 = vmatprep.subr.bf16.mxu0 0
  %176 = vmatpush1.bf16.msra.mxu0 %v157
  %177 = vmatprep.subr.bf16.mxu0 0
  %178 = vmatpush1.bf16.msra.mxu0 %v158
  %179 = vmatprep.subr.bf16.mxu0 0
  %180 = vmatpush1.bf16.msra.mxu0 %v159
  %181 = vmatprep.subr.bf16.mxu0 0
  %182 = vmatpush1.bf16.msra.mxu0 %v160
  %183 = vmatprep.subr.bf16.mxu0 0
  %184 = vmatpush1.bf16.msra.mxu0 %v161
  %185 = vmatprep.subr.bf16.mxu0 0
  %186 = vmatpush1.bf16.msra.mxu0 %v162
  %187 = vmatprep.subr.bf16.mxu0 0
  %188 = vmatpush1.bf16.msra.mxu0 0
  %189 = vmatprep.subr.bf16.mxu0 0
  %190 = vmatpush1.bf16.msra.mxu0 0
  %191 = vmatprep.subr.bf16.mxu0 0
  %192 = vmatpush1.bf16.msra.mxu0 0
  %193 = vmatprep.subr.bf16.mxu0 0
  %194 = vmatpush1.bf16.msra.mxu0 0
  %195 = vmatprep.subr.bf16.mxu0 0
  %196 = vmatpush1.bf16.msra.mxu0 0
  %197 = vmatprep.subr.bf16.mxu0 0
  %198 = vmatpush1.bf16.msra.mxu0 0
  %199 = vmatprep.subr.bf16.mxu0 0
  %200 = vmatpush1.bf16.msra.mxu0 0
  %201 = vmatprep.subr.bf16.mxu0 0
  %202 = vmatpush1.bf16.msra.mxu0 0
  %203 = vmatprep.mubr.bf16.mxu0 0
  %204 = vmatmul.mubr.bf16.gmra.mrb[0].mxu0 %v99
  %v205 = vpop.f32.mrb[0].mxu0
  %v206 = vadd.f32 0.0, %v205
  %v207 = vpop.f32.mrb[0].mxu0
  %v208 = vpop.f32.mrb[0].mxu0
  %v209 = vadd.f32 0.0, %v208
  %v210 = vpop.f32.mrb[0].mxu0
  %211 = vmatprep.mubr.bf16.mxu0 0
  %212 = vmatmul.mubr.bf16.gmra.mrb[0].mxu0 %v100
  %v213 = vpop.f32.mrb[0].mxu0
  %v214 = vadd.f32 0.0, %v213
  %v215 = vpop.f32.mrb[0].mxu0
  %v216 = vpop.f32.mrb[0].mxu0
  %v217 = vadd.f32 0.0, %v216
  %v218 = vpop.f32.mrb[0].mxu0
  %219 = vmatprep.mubr.bf16.mxu0 0
  %220 = vmatmul.mubr.bf16.gmra.mrb[0].mxu0 %v101
  %v221 = vpop.f32.mrb[0].mxu0
  %v222 = vadd.f32 0.0, %v221
  %v223 = vpop.f32.mrb[0].mxu0
  %v224 = vpop.f32.mrb[0].mxu0
  %v225 = vadd.f32 0.0, %v224
  %v226 = vpop.f32.mrb[0].mxu0
  %227 = vmatprep.mubr.bf16.mxu0 0
  %228 = vmatmul.mubr.bf16.gmra.mrb[0].mxu0 %v102
  %v229 = vpop.f32.mrb[0].mxu0
  %v230 = vadd.f32 0.0, %v229
  %v231 = vpop.f32.mrb[0].mxu0
  %v232 = vpop.f32.mrb[0].mxu0
  %v233 = vadd.f32 0.0, %v232
  %v234 = vpop.f32.mrb[0].mxu0
  %235 = vmatprep.mubr.bf16.mxu0 0
  %236 = vmatmul.mubr.bf16.gmra.mrb[0].mxu0 %v103
  %v237 = vpop.f32.mrb[0].mxu0
  %v238 = vadd.f32 0.0, %v237
  %v239 = vpop.f32.mrb[0].mxu0
  %v240 = vpop.f32.mrb[0].mxu0
  %v241 = vadd.f32 0.0, %v240
  %v242 = vpop.f32.mrb[0].mxu0
  %243 = vmatprep.mubr.bf16.mxu0 0
  %244 = vmatmul.mubr.bf16.gmra.mrb[0].mxu0 %v104
  %v245 = vpop.f32.mrb[0].mxu0
  %v246 = vadd.f32 0.0, %v245
  %v247 = vpop.f32.mrb[0].mxu0
  %v248 = vpop.f32.mrb[0].mxu0
  %v249 = vadd.f32 0.0, %v248
  %v250 = vpop.f32.mrb[0].mxu0
  %251 = vmatprep.mubr.bf16.mxu0 0
  %252 = vmatmul.mubr.bf16.gmra.mrb[0].mxu0 %v105
  %v253 = vpop.f32.mrb[0].mxu0
  %v254 = vadd.f32 0.0, %v253
  %v255 = vpop.f32.mrb[0].mxu0
  %v256 = vpop.f32.mrb[0].mxu0
  %v257 = vadd.f32 0.0, %v256
  %v258 = vpop.f32.mrb[0].mxu0
  %259 = vmatprep.mubr.bf16.mxu0 0
  %260 = vmatmul.mubr.bf16.gmra.mrb[0].mxu0 %v106
  %v261 = vpop.f32.mrb[0].mxu0
  %v262 = vadd.f32 0.0, %v261
  %v263 = vpop.f32.mrb[0].mxu0
  %v264 = vpop.f32.mrb[0].mxu0
  %v265 = vadd.f32 0.0, %v264
  %v266 = vpop.f32.mrb[0].mxu0
  %267 = vdwg.mxu0
  %268 = vst [vmem:[%s4] sm:$0xff] %v206
  %269 = vst [vmem:[%s4 + $0x8] sm:$0xff] %v209
  %270 = vst [vmem:[%s4 + $0x10] sm:$0xff] %v214
  %271 = vst [vmem:[%s4 + $0x18] sm:$0xff] %v217
  %272 = vst [vmem:[%s4 + $0x20] sm:$0xff] %v222
  %273 = vst [vmem:[%s4 + $0x28] sm:$0xff] %v225
  %274 = vst [vmem:[%s4 + $0x30] sm:$0xff] %v230
  %275 = vst [vmem:[%s4 + $0x38] sm:$0xff] %v233
  %276 = vst [vmem:[%s4 + $0x40] sm:$0xff] %v238
  %277 = vst [vmem:[%s4 + $0x48] sm:$0xff] %v241
  %278 = vst [vmem:[%s4 + $0x50] sm:$0xff] %v246
  %279 = vst [vmem:[%s4 + $0x58] sm:$0xff] %v249
  %280 = vst [vmem:[%s4 + $0x60] sm:$0xff] %v254
  %281 = vst [vmem:[%s4 + $0x68] sm:$0xff] %v257
  %282 = vst [vmem:[%s4 + $0x70] sm:$0xff] %v262
  %283 = vst [vmem:[%s4 + $0x78] sm:$0xff] %v265
  %p284 = scmp.eq.s32.totalorder 0, 0
  // Predicated region
  $region18: #{resnet_block_forward.6} parent=0 // pred_check
    %p285 = pneg %p284
  $region19: #{resnet_block_forward.6} parent=0 // pred_check_branch
    %287 = sbr.rel (%p285) target = $region21
  $region20: #{resnet_block_forward.6} parent=0 // pred_region
    %288 = vst [vmem:[%s5] sm:$0x1] 0.0
    %289 = vst [vmem:[%s6] sm:$0x1] 0.0
  $region21: #{resnet_block_forward.6} parent=0 // pred_fallthru
    _
  %v290 = vld [vmem:[%s5] sm:$0x1]
  %v291 = vadd.f32 %v206, %v209
  %v292 = vadd.f32 %v291, %v214
  %v293 = vadd.f32 %v292, %v217
  %v294 = vadd.f32 %v293, %v222
  %v295 = vadd.f32 %v294, %v225
  %v296 = vadd.f32 %v295, %v230
  %v297 = vadd.f32 %v296, %v233
  %v298 = vadd.f32 %v297, %v238
  %v299 = vadd.f32 %v298, %v241
  %v300 = vadd.f32 %v299, %v246
  %v301 = vadd.f32 %v300, %v249
  %v302 = vadd.f32 %v301, %v254
  %v303 = vadd.f32 %v302, %v257
  %v304 = vadd.f32 %v303, %v262
  %v305 = vadd.f32 %v304, %v265
  %v306 = vrot.slane %v305, 4
  %v307 = vadd.f32 %v305, %v306
  %v308 = vrot.slane %v307, 2
  %v309 = vadd.f32 %v307, %v308
  %v310 = vrot.slane %v309, 1
  %v311 = vadd.f32 %v309, %v310
  %v312 = vadd.f32 %v290, %v311
  %313 = vst [vmem:[%s5] sm:$0x1] %v312
  %v314 = vld [vmem:[%s6] sm:$0x1]
  %v315 = vmul.f32 %v206, %v206
  %v316 = vmul.f32 %v209, %v209
  %v317 = vmul.f32 %v214, %v214
  %v318 = vmul.f32 %v217, %v217
  %v319 = vmul.f32 %v222, %v222
  %v320 = vmul.f32 %v225, %v225
  %v321 = vmul.f32 %v230, %v230
  %v322 = vmul.f32 %v233, %v233
  %v323 = vmul.f32 %v238, %v238
  %v324 = vmul.f32 %v241, %v241
  %v325 = vmul.f32 %v246, %v246
  %v326 = vmul.f32 %v249, %v249
  %v327 = vmul.f32 %v254, %v254
  %v328 = vmul.f32 %v257, %v257
  %v329 = vmul.f32 %v262, %v262
  %v330 = vmul.f32 %v265, %v265
  %v331 = vadd.f32 %v315, %v316
  %v332 = vadd.f32 %v331, %v317
  %v333 = vadd.f32 %v332, %v318
  %v334 = vadd.f32 %v333, %v319
  %v335 = vadd.f32 %v334, %v320
  %v336 = vadd.f32 %v335, %v321
  %v337 = vadd.f32 %v336, %v322
  %v338 = vadd.f32 %v337, %v323
  %v339 = vadd.f32 %v338, %v324
  %v340 = vadd.f32 %v339, %v325
  %v341 = vadd.f32 %v340, %v326
  %v342 = vadd.f32 %v341, %v327
  %v343 = vadd.f32 %v342, %v328
  %v344 = vadd.f32 %v343, %v329
  %v345 = vadd.f32 %v344, %v330
  %v346 = vrot.slane %v345, 4
  %v347 = vadd.f32 %v345, %v346
  %v348 = vrot.slane %v347, 2
  %v349 = vadd.f32 %v347, %v348
  %v350 = vrot.slane %v349, 1
  %v351 = vadd.f32 %v349, %v350
  %v352 = vadd.f32 %v314, %v351
  %353 = vst [vmem:[%s6] sm:$0x1] %v352
  // Predicated region
  $region22: #{resnet_block_forward.6} parent=0 // pred_check
    _
  $region23: #{resnet_block_forward.6} parent=0 // pred_check_branch
    %355 = sbr.rel (0) target = $region25
  $region24: #{resnet_block_forward.6} parent=0 // pred_region
    _
  $region25: #{resnet_block_forward.6} parent=0 // pred_fallthru
    _
  // Predicated region
  $region26: #{resnet_block_forward.6} parent=0 // pred_check
    _
  $region27: #{resnet_block_forward.6} parent=0 // pred_check_branch
    %357 = sbr.rel (0) target = $region29
  $region28: #{resnet_block_forward.6} parent=0 // pred_region
    _
  $region29: #{resnet_block_forward.6} parent=0 // pred_fallthru
    _
  // Predicated region
  $region30: #{resnet_block_forward.6} parent=0 // pred_check
    _
  $region31: #{resnet_block_forward.6} parent=0 // pred_check_branch
    %359 = sbr.rel (0) target = $region33
  $region32: #{resnet_block_forward.6} parent=0 // pred_region
    _
  $region33: #{resnet_block_forward.6} parent=0 // pred_fallthru
    _
  // Predicated region
  $region34: #{resnet_block_forward.6} parent=0 // pred_check
    _
  $region35: #{resnet_block_forward.6} parent=0 // pred_check_branch
    %361 = sbr.rel (0) target = $region37
  $region36: #{resnet_block_forward.6} parent=0 // pred_region
    _
  $region37: #{resnet_block_forward.6} parent=0 // pred_fallthru
    _
  // Predicated region
  $region38: #{resnet_block_forward.6} parent=0 // pred_check
    _
  $region39: #{resnet_block_forward.6} parent=0 // pred_check_branch
    %363 = sbr.rel (0) target = $region41
  $region40: #{resnet_block_forward.6} parent=0 // pred_region
    _
  $region41: #{resnet_block_forward.6} parent=0 // pred_fallthru
    _
  // Predicated region
  $region42: #{resnet_block_forward.6} parent=0 // pred_check
    _
  $region43: #{resnet_block_forward.6} parent=0 // pred_check_branch
    %365 = sbr.rel (0) target = $region45
  $region44: #{resnet_block_forward.6} parent=0 // pred_region
    _
  $region45: #{resnet_block_forward.6} parent=0 // pred_fallthru
    _

// kernel: resnet_block_forward.5
$region0: #{resnet_block_forward.5}
  #allocation0 [shape = 'u32[]', space=smem, size = 0x4, offset = 0x4, fixed_abs, tag = 'smem constant byte address 0x4 - core index']
  #allocation1 [shape = 'u32[144,128]{1,0:T(1,128)}', space=vmem, size = 0x12000, scoped, tag = 'internal scratch']
  %s0 = inlined_call_operand.vmem [shape: f32[2,10,10,128], index: 0, kind: input, shape index: {}]
  %s1 = inlined_call_operand.vmem [shape: f32[1,128], index: 1, kind: input, shape index: {}]
  %s2 = inlined_call_operand.vmem [shape: f32[1,128], index: 2, kind: input, shape index: {}]
  %s3 = inlined_call_operand.vmem [shape: f32[10,10,1], index: 3, kind: input, shape index: {}]
  %s4 = inlined_call_operand.vmem [shape: bf16[9,128,128], index: 4, kind: input, shape index: {}]
  %s5 = inlined_call_operand.vmem [shape: f32[2,64,128], index: 5, kind: output, shape index: {0}]
  %s6 = inlined_call_operand.vmem [shape: f32[1,128], index: 6, kind: output, shape index: {1}]
  %s7 = inlined_call_operand.vmem [shape: f32[1,128], index: 7, kind: output, shape index: {2}]
  %8 = xla_tuple %s5, %s6, %s7
  %s9 = sld [smem:[#allocation0]]
  $region73: #{resnet_block_forward.5} parent=0
    _
  %s11 = ssub.s32 1, %s9
  %s12 = scalar_select 0, %s11, %s9
  loop: start=0, step=1, limit=4
  $region2: #{resnet_block_forward.5} parent=0 // loop_pre_header
    _
  $region3: #{resnet_block_forward.5} parent=0 // loop_header
    %s14 = sphi 0, %s18
    %p15 = scmp.ge.s32.totalorder %s14, 4
    %s24 = sphi 0, %s26
    %s27 = sphi 0, %s24
    %s28 = sphi 0, %s27
    %s44 = sphi 0, %s28
    %s48 = sphi 0, %s48
    %s50 = sphi 0, %s48
    %s51 = sphi 0, %s50
    %s65 = sphi 0, %s51
    %s69 = sphi 0, %s69
    %s71 = sphi 0, %s69
    %s72 = sphi 0, %s71
    %s86 = sphi 0, %s72
    %s90 = sphi 0, %s90
    %s92 = sphi 0, %s90
    %s93 = sphi 0, %s92
    %s107 = sphi 0, %s93
    %s111 = sphi 0, %s111
    %s113 = sphi 0, %s111
    %s114 = sphi 0, %s113
    %s128 = sphi 0, %s114
    %s134 = sphi 0, %s136
    %s137 = sphi 0, %s134
    %s138 = sphi 0, %s137
    %s154 = sphi 0, %s138
    %s158 = sphi 0, %s158
    %s160 = sphi 0, %s158
    %s161 = sphi 0, %s160
    %s175 = sphi 0, %s161
    %s179 = sphi 0, %s179
    %s181 = sphi 0, %s179
    %s182 = sphi 0, %s181
    %s196 = sphi 0, %s182
  $region4: #{resnet_block_forward.5} parent=0 // loop_header_branch
    %17 = sbr.rel (%p15) target = $region8
  $region5: #{resnet_block_forward.5} parent=0 // loop_body
    %s19 = ssub.s32 %s14, 1
    %s20 = ssub.s32 %s14, 2
    %s21 = sadd.s32 %s14, 1
    %s22 = ssub.s32 %s14, %s21
    %p23 = scmp.eq.s32.totalorder %s22, 0
    %s25 = sadd.s32 %s24, 1
    %s26 = scalar_select %p23, %s24, %s25
    %p29 = pneg %p23
    %p30 = scmp.eq.s32.totalorder %s14, 1
    %p31 = por %p29, %p30
    %p32 = scmp.ne.s32.totalorder %s24, %s27
    %p33 = scmp.eq.s32.totalorder %s14, 0
    %p34 = por %p32, %p33
    %p35 = scmp.ne.s32.totalorder %s24, %s27
    %p36 = scmp.eq.s32.totalorder %s19, 1
    %p37 = por %p35, %p36
    %p38 = scmp.ne.s32.totalorder %s27, %s28
    %p39 = scmp.eq.s32.totalorder %s19, 0
    %p40 = por %p38, %p39
    %p41 = scmp.ne.s32.totalorder %s27, %s28
    %p42 = scmp.eq.s32.totalorder %s20, 1
    %p43 = por %p41, %p42
    %p45 = scmp.ne.s32.totalorder %s28, %s44
    %p46 = scmp.eq.s32.totalorder %s20, 0
    %p47 = por %p45, %p46
    %s49 = sadd.s32 %s48, 1
    %p52 = scmp.eq.s32.totalorder %s14, 1
    %p53 = scmp.ne.s32.totalorder %s48, %s50
    %p54 = scmp.eq.s32.totalorder %s14, 0
    %p55 = por %p53, %p54
    %p56 = scmp.ne.s32.totalorder %s48, %s50
    %p57 = scmp.eq.s32.totalorder %s19, 1
    %p58 = por %p56, %p57
    %p59 = scmp.ne.s32.totalorder %s50, %s51
    %p60 = scmp.eq.s32.totalorder %s19, 0
    %p61 = por %p59, %p60
    %p62 = scmp.ne.s32.totalorder %s50, %s51
    %p63 = scmp.eq.s32.totalorder %s20, 1
    %p64 = por %p62, %p63
    %p66 = scmp.ne.s32.totalorder %s51, %s65
    %p67 = scmp.eq.s32.totalorder %s20, 0
    %p68 = por %p66, %p67
    %s70 = sadd.s32 %s69, 1
    %p73 = scmp.eq.s32.totalorder %s14, 1
    %p74 = scmp.ne.s32.totalorder %s69, %s71
    %p75 = scmp.eq.s32.totalorder %s14, 0
    %p76 = por %p74, %p75
    %p77 = scmp.ne.s32.totalorder %s69, %s71
    %p78 = scmp.eq.s32.totalorder %s19, 1
    %p79 = por %p77, %p78
    %p80 = scmp.ne.s32.totalorder %s71, %s72
    %p81 = scmp.eq.s32.totalorder %s19, 0
    %p82 = por %p80, %p81
    %p83 = scmp.ne.s32.totalorder %s71, %s72
    %p84 = scmp.eq.s32.totalorder %s20, 1
    %p85 = por %p83, %p84
    %p87 = scmp.ne.s32.totalorder %s72, %s86
    %p88 = scmp.eq.s32.totalorder %s20, 0
    %p89 = por %p87, %p88
    %s91 = sadd.s32 %s90, 1
    %p94 = scmp.eq.s32.totalorder %s14, 1
    %p95 = scmp.ne.s32.totalorder %s90, %s92
    %p96 = scmp.eq.s32.totalorder %s14, 0
    %p97 = por %p95, %p96
    %p98 = scmp.ne.s32.totalorder %s90, %s92
    %p99 = scmp.eq.s32.totalorder %s19, 1
    %p100 = por %p98, %p99
    %p101 = scmp.ne.s32.totalorder %s92, %s93
    %p102 = scmp.eq.s32.totalorder %s19, 0
    %p103 = por %p101, %p102
    %p104 = scmp.ne.s32.totalorder %s92, %s93
    %p105 = scmp.eq.s32.totalorder %s20, 1
    %p106 = por %p104, %p105
    %p108 = scmp.ne.s32.totalorder %s93, %s107
    %p109 = scmp.eq.s32.totalorder %s20, 0
    %p110 = por %p108, %p109
    %s112 = sadd.s32 %s111, 1
    %p115 = scmp.eq.s32.totalorder %s14, 1
    %p116 = scmp.ne.s32.totalorder %s111, %s113
    %p117 = scmp.eq.s32.totalorder %s14, 0
    %p118 = por %p116, %p117
    %p119 = scmp.ne.s32.totalorder %s111, %s113
    %p120 = scmp.eq.s32.totalorder %s19, 1
    %p121 = por %p119, %p120
    %p122 = scmp.ne.s32.totalorder %s113, %s114
    %p123 = scmp.eq.s32.totalorder %s19, 0
    %p124 = por %p122, %p123
    %p125 = scmp.ne.s32.totalorder %s113, %s114
    %p126 = scmp.eq.s32.totalorder %s20, 1
    %p127 = por %p125, %p126
    %p129 = scmp.ne.s32.totalorder %s114, %s128
    %p130 = scmp.eq.s32.totalorder %s20, 0
    %p131 = por %p129, %p130
    %s132 = ssub.s32 %s14, %s21
    %p133 = scmp.eq.s32.totalorder %s132, 0
    %s135 = sadd.s32 %s134, 1
    %s136 = scalar_select %p133, %s134, %s135
    %p139 = pneg %p133
    %p140 = scmp.eq.s32.totalorder %s14, 1
    %p141 = por %p139, %p140
    %p142 = scmp.ne.s32.totalorder %s134, %s137
    %p143 = scmp.eq.s32.totalorder %s14, 0
    %p144 = por %p142, %p143
    %p145 = scmp.ne.s32.totalorder %s134, %s137
    %p146 = scmp.eq.s32.totalorder %s19, 1
    %p147 = por %p145, %p146
    %p148 = scmp.ne.s32.totalorder %s137, %s138
    %p149 = scmp.eq.s32.totalorder %s19, 0
    %p150 = por %p148, %p149
    %p151 = scmp.ne.s32.totalorder %s137, %s138
    %p152 = scmp.eq.s32.totalorder %s20, 1
    %p153 = por %p151, %p152
    %p155 = scmp.ne.s32.totalorder %s138, %s154
    %p156 = scmp.eq.s32.totalorder %s20, 0
    %p157 = por %p155, %p156
    %s159 = sadd.s32 %s158, 1
    %p162 = scmp.eq.s32.totalorder %s14, 1
    %p163 = scmp.ne.s32.totalorder %s158, %s160
    %p164 = scmp.eq.s32.totalorder %s14, 0
    %p165 = por %p163, %p164
    %p166 = scmp.ne.s32.totalorder %s158, %s160
    %p167 = scmp.eq.s32.totalorder %s19, 1
    %p168 = por %p166, %p167
    %p169 = scmp.ne.s32.totalorder %s160, %s161
    %p170 = scmp.eq.s32.totalorder %s19, 0
    %p171 = por %p169, %p170
    %p172 = scmp.ne.s32.totalorder %s160, %s161
    %p173 = scmp.eq.s32.totalorder %s20, 1
    %p174 = por %p172, %p173
    %p176 = scmp.ne.s32.totalorder %s161, %s175
    %p177 = scmp.eq.s32.totalorder %s20, 0
    %p178 = por %p176, %p177
    %s180 = sadd.s32 %s179, 1
    %p183 = scmp.eq.s32.totalorder %s14, 1
    %p184 = scmp.ne.s32.totalorder %s179, %s181
    %p185 = scmp.eq.s32.totalorder %s14, 0
    %p186 = por %p184, %p185
    %p187 = scmp.ne.s32.totalorder %s179, %s181
    %p188 = scmp.eq.s32.totalorder %s19, 1
    %p189 = por %p187, %p188
    %p190 = scmp.ne.s32.totalorder %s181, %s182
    %p191 = scmp.eq.s32.totalorder %s19, 0
    %p192 = por %p190, %p191
    %p193 = scmp.ne.s32.totalorder %s181, %s182
    %p194 = scmp.eq.s32.totalorder %s20, 1
    %p195 = por %p193, %p194
    %p197 = scmp.ne.s32.totalorder %s182, %s196
    %p198 = scmp.eq.s32.totalorder %s20, 0
    %p199 = por %p197, %p198
    %p200 = scmp.le.s32.totalorder 1, %s14
    %p201 = scmp.lt.s32.totalorder %s14, 3
    %p202 = pnand %p200, %p201
    %p203 = pneg %p202
    // Predicated region
    $region9: #{resnet_block_forward.5} parent=5 // pred_check
      _
    $region10: #{resnet_block_forward.5} parent=5 // pred_check_branch
      %205 = sbr.rel (%p202) target = $region12
    $region11: #{resnet_block_forward.5} parent=5 // pred_region
      %s206 = ssub.s32 %s14, 1
      // Predicated region
      $region13: #{resnet_block_forward.5} parent=11 // pred_check
        %p207 = pneg %p61
      $region14: #{resnet_block_forward.5} parent=11 // pred_check_branch
        %209 = sbr.rel (%p207) target = $region16
      $region15: #{resnet_block_forward.5} parent=11 // pred_region
        _
      $region16: #{resnet_block_forward.5} parent=11 // pred_fallthru
        _
      // Predicated region
      $region17: #{resnet_block_forward.5} parent=11 // pred_check
        %p210 = pneg %p82
      $region18: #{resnet_block_forward.5} parent=11 // pred_check_branch
        %212 = sbr.rel (%p210) target = $region20
      $region19: #{resnet_block_forward.5} parent=11 // pred_region
        _
      $region20: #{resnet_block_forward.5} parent=11 // pred_fallthru
        _
      // Predicated region
      $region21: #{resnet_block_forward.5} parent=11 // pred_check
        %p213 = pneg %p103
      $region22: #{resnet_block_forward.5} parent=11 // pred_check_branch
        %215 = sbr.rel (%p213) target = $region24
      $region23: #{resnet_block_forward.5} parent=11 // pred_region
        _
      $region24: #{resnet_block_forward.5} parent=11 // pred_fallthru
        _
      // Predicated region
      $region25: #{resnet_block_forward.5} parent=11 // pred_check
        %p216 = pneg %p124
      $region26: #{resnet_block_forward.5} parent=11 // pred_check_branch
        %218 = sbr.rel (%p216) target = $region28
      $region27: #{resnet_block_forward.5} parent=11 // pred_region
        _
      $region28: #{resnet_block_forward.5} parent=11 // pred_fallthru
        _
    $region12: #{resnet_block_forward.5} parent=5 // pred_fallthru
      _
    %p219 = scmp.lt.s32.totalorder %s14, 2
    // Predicated region
    $region29: #{resnet_block_forward.5} parent=5 // pred_check
      %p220 = pneg %p219
    $region30: #{resnet_block_forward.5} parent=5 // pred_check_branch
      %222 = sbr.rel (%p220) target = $region32
    $region31: #{resnet_block_forward.5} parent=5 // pred_region
      // Predicated region
      $region33: #{resnet_block_forward.5} parent=31 // pred_check
        %p223 = pneg %p34
      $region34: #{resnet_block_forward.5} parent=31 // pred_check_branch
        %225 = sbr.rel (%p223) target = $region36
      $region35: #{resnet_block_forward.5} parent=31 // pred_region
        %p226 = scmp.lt.s32.totalorder %s14, 1
        %s227 = scalar_select %p226, %s14, 1
        %s228 = smul.addr %s227, 20
        %s229 = smul.addr %s228, 8
        %s230 = scalar_lea.vmem %s0, %s229
      $region36: #{resnet_block_forward.5} parent=31 // pred_fallthru
        _
    $region32: #{resnet_block_forward.5} parent=5 // pred_fallthru
      _
    %p231 = scmp.le.s32.totalorder 1, %s14
    %p232 = scmp.lt.s32.totalorder %s14, 3
    %p233 = pnand %p231, %p232
    %p234 = pneg %p233
    // Predicated region
    $region37: #{resnet_block_forward.5} parent=5 // pred_check
      _
    $region38: #{resnet_block_forward.5} parent=5 // pred_check_branch
      %236 = sbr.rel (%p233) target = $region40
    $region39: #{resnet_block_forward.5} parent=5 // pred_region
      %s237 = ssub.s32 %s14, 1
      %p238 = scmp.lt.s32.totalorder %s19, 1
      %s239 = scalar_select %p238, %s19, 1
      %s240 = smul.addr %s239, 20
      %s241 = smul.addr %s240, 8
      %s242 = scalar_lea.vmem %s0, %s241
      %p243 = pneg %p40
      %p244 = pneg %p37
      %p245 = pneg %p61
      %p246 = pneg %p58
      %p247 = pneg %p82
      %p248 = pneg %p79
      %p249 = pneg %p103
      %p250 = pneg %p100
      %p251 = pneg %p124
      %p252 = pneg %p121
      %p253 = pneg %p150
      %p254 = pneg %p147
      %p255 = scmp.lt.s32.totalorder %s19, 1
      %s256 = scalar_select %p255, %s19, 1
      %s257 = smul.addr %s256, 8
      %s258 = smul.addr %s257, 8
      %s259 = scalar_lea.vmem %s5, %s258
      %p260 = pneg %p171
      %p261 = pneg %p168
      %p262 = pneg %p192
      %p263 = pneg %p189
      %p264 = scmp.lt.s32.totalorder %s19, 1
      %s265 = scalar_select %p264, %s19, 1
      %s266 = smul.addr %s265, 20
      %s267 = smul.addr %s266, 8
      %s268 = scalar_lea.vmem %s0, %s267
      %p269 = scmp.lt.s32.totalorder %s19, 1
      %s270 = scalar_select %p269, %s19, 1
      %s271 = smul.addr %s270, 8
      %s272 = smul.addr %s271, 8
      %s273 = scalar_lea.vmem %s5, %s272
      %v275 = vld [vmem:[%s268] sm:$0xff]
      %v276 = vld [vmem:[%s268 + $0x8] sm:$0x3]
      %v277 = vld [vmem:[%s268 + $0x10] sm:$0xff]
      %v278 = vld [vmem:[%s268 + $0x18] sm:$0x3]
      %v279 = vld [vmem:[%s268 + $0x20] sm:$0xff]
      %v280 = vld [vmem:[%s268 + $0x28] sm:$0x3]
      %v281 = vld [vmem:[%s268 + $0x30] sm:$0xff]
      %v282 = vld [vmem:[%s268 + $0x38] sm:$0x3]
      %v283 = vld [vmem:[%s268 + $0x40] sm:$0xff]
      %v284 = vld [vmem:[%s268 + $0x48] sm:$0x3]
      %v285 = vld [vmem:[%s268 + $0x50] sm:$0xff]
      %v286 = vld [vmem:[%s268 + $0x58] sm:$0x3]
      %v287 = vld [vmem:[%s268 + $0x60] sm:$0xff]
      %v288 = vld [vmem:[%s268 + $0x68] sm:$0x3]
      %v289 = vld [vmem:[%s268 + $0x70] sm:$0xff]
      %v290 = vld [vmem:[%s268 + $0x78] sm:$0x3]
      %v291 = vld [vmem:[%s268 + $0x80] sm:$0xff]
      %v292 = vld [vmem:[%s268 + $0x88] sm:$0x3]
      %v293 = vld [vmem:[%s268 + $0x90] sm:$0xff]
      %v294 = vld [vmem:[%s268 + $0x98] sm:$0x3]
      %v295 = vld [vmem:[%s1] sm:$0x1]
      %v297 = vlaneseq
      %v298 = vshrl.u32 %v297, 7
      %v299 = vsub.s32 0, %v298
      %v300 = vrot.slane %v295, %v299
      %v302 = vmul.f32 %v275, %v300
      %v303 = vmul.f32 %v276, %v300
      %v304 = vmul.f32 %v277, %v300
      %v305 = vmul.f32 %v278, %v300
      %v306 = vmul.f32 %v279, %v300
      %v307 = vmul.f32 %v280, %v300
      %v308 = vmul.f32 %v281, %v300
      %v309 = vmul.f32 %v282, %v300
      %v310 = vmul.f32 %v283, %v300
      %v311 = vmul.f32 %v284, %v300
      %v312 = vmul.f32 %v285, %v300
      %v313 = vmul.f32 %v286, %v300
      %v314 = vmul.f32 %v287, %v300
      %v315 = vmul.f32 %v288, %v300
      %v316 = vmul.f32 %v289, %v300
      %v317 = vmul.f32 %v290, %v300
      %v318 = vmul.f32 %v291, %v300
      %v319 = vmul.f32 %v292, %v300
      %v320 = vmul.f32 %v293, %v300
      %v321 = vmul.f32 %v294, %v300
      %v322 = vld [vmem:[%s2] sm:$0x1]
      %v324 = vlaneseq
      %v325 = vshrl.u32 %v324, 7
      %v326 = vsub.s32 0, %v325
      %v327 = vrot.slane %v322, %v326
      %v329 = vadd.f32 %v302, %v327
      %v330 = vadd.f32 %v303, %v327
      %v331 = vadd.f32 %v304, %v327
      %v332 = vadd.f32 %v305, %v327
      %v333 = vadd.f32 %v306, %v327
      %v334 = vadd.f32 %v307, %v327
      %v335 = vadd.f32 %v308, %v327
      %v336 = vadd.f32 %v309, %v327
      %v337 = vadd.f32 %v310, %v327
      %v338 = vadd.f32 %v311, %v327
      %v339 = vadd.f32 %v312, %v327
      %v340 = vadd.f32 %v313, %v327
      %v341 = vadd.f32 %v314, %v327
      %v342 = vadd.f32 %v315, %v327
      %v343 = vadd.f32 %v316, %v327
      %v344 = vadd.f32 %v317, %v327
      %v345 = vadd.f32 %v318, %v327
      %v346 = vadd.f32 %v319, %v327
      %v347 = vadd.f32 %v320, %v327
      %v348 = vadd.f32 %v321, %v327
      %v349 = vmax.f32 %v329, 0.0
      %v350 = vmax.f32 %v330, 0.0
      %v351 = vmax.f32 %v331, 0.0
      %v352 = vmax.f32 %v332, 0.0
      %v353 = vmax.f32 %v333, 0.0
      %v354 = vmax.f32 %v334, 0.0
      %v355 = vmax.f32 %v335, 0.0
      %v356 = vmax.f32 %v336, 0.0
      %v357 = vmax.f32 %v337, 0.0
      %v358 = vmax.f32 %v338, 0.0
      %v359 = vmax.f32 %v339, 0.0
      %v360 = vmax.f32 %v340, 0.0
      %v361 = vmax.f32 %v341, 0.0
      %v362 = vmax.f32 %v342, 0.0
      %v363 = vmax.f32 %v343, 0.0
      %v364 = vmax.f32 %v344, 0.0
      %v365 = vmax.f32 %v345, 0.0
      %v366 = vmax.f32 %v346, 0.0
      %v367 = vmax.f32 %v347, 0.0
      %v368 = vmax.f32 %v348, 0.0
      %v369 = vld [vmem:[%s3] sm:$0xff]
      %v370 = vld [vmem:[%s3 + $0x8] sm:$0x3]
      %v371 = vld [vmem:[%s3 + $0x10] sm:$0xff]
      %v372 = vld [vmem:[%s3 + $0x18] sm:$0x3]
      %v373 = vld [vmem:[%s3 + $0x20] sm:$0xff]
      %v374 = vld [vmem:[%s3 + $0x28] sm:$0x3]
      %v375 = vld [vmem:[%s3 + $0x30] sm:$0xff]
      %v376 = vld [vmem:[%s3 + $0x38] sm:$0x3]
      %v377 = vld [vmem:[%s3 + $0x40] sm:$0xff]
      %v378 = vld [vmem:[%s3 + $0x48] sm:$0x3]
      %v379 = vld [vmem:[%s3 + $0x50] sm:$0xff]
      %v380 = vld [vmem:[%s3 + $0x58] sm:$0x3]
      %v381 = vld [vmem:[%s3 + $0x60] sm:$0xff]
      %v382 = vld [vmem:[%s3 + $0x68] sm:$0x3]
      %v383 = vld [vmem:[%s3 + $0x70] sm:$0xff]
      %v384 = vld [vmem:[%s3 + $0x78] sm:$0x3]
      %v385 = vld [vmem:[%s3 + $0x80] sm:$0xff]
      %v386 = vld [vmem:[%s3 + $0x88] sm:$0x3]
      %v387 = vld [vmem:[%s3 + $0x90] sm:$0xff]
      %v388 = vld [vmem:[%s3 + $0x98] sm:$0x3]
      %390 = vset.pattern.permute.xlu0 0
      %391 = vperm.xlu0 %390, %v369
      %v392 = vpop.permute.xlu0 %391
      %395 = vset.pattern.permute.xlu0 0
      %396 = vperm.xlu0 %395, %v370
      %v397 = vpop.permute.xlu0 %396
      %400 = vset.pattern.permute.xlu0 0
      %401 = vperm.xlu0 %400, %v371
      %v402 = vpop.permute.xlu0 %401
      %405 = vset.pattern.permute.xlu0 0
      %406 = vperm.xlu0 %405, %v372
      %v407 = vpop.permute.xlu0 %406
      %410 = vset.pattern.permute.xlu0 0
      %411 = vperm.xlu0 %410, %v373
      %v412 = vpop.permute.xlu0 %411
      %415 = vset.pattern.permute.xlu0 0
      %416 = vperm.xlu0 %415, %v374
      %v417 = vpop.permute.xlu0 %416
      %420 = vset.pattern.permute.xlu0 0
      %421 = vperm.xlu0 %420, %v375
      %v422 = vpop.permute.xlu0 %421
      %425 = vset.pattern.permute.xlu0 0
      %426 = vperm.xlu0 %425, %v376
      %v427 = vpop.permute.xlu0 %426
      %430 = vset.pattern.permute.xlu0 0
      %431 = vperm.xlu0 %430, %v377
      %v432 = vpop.permute.xlu0 %431
      %435 = vset.pattern.permute.xlu0 0
      %436 = vperm.xlu0 %435, %v378
      %v437 = vpop.permute.xlu0 %436
      %440 = vset.pattern.permute.xlu0 0
      %441 = vperm.xlu0 %440, %v379
      %v442 = vpop.permute.xlu0 %441
      %445 = vset.pattern.permute.xlu0 0
      %446 = vperm.xlu0 %445, %v380
      %v447 = vpop.permute.xlu0 %446
      %450 = vset.pattern.permute.xlu0 0
      %451 = vperm.xlu0 %450, %v381
      %v452 = vpop.permute.xlu0 %451
      %455 = vset.pattern.permute.xlu0 0
      %456 = vperm.xlu0 %455, %v382
      %v457 = vpop.permute.xlu0 %456
      %460 = vset.pattern.permute.xlu0 0
      %461 = vperm.xlu0 %460, %v383
      %v462 = vpop.permute.xlu0 %461
      %465 = vset.pattern.permute.xlu0 0
      %466 = vperm.xlu0 %465, %v384
      %v467 = vpop.permute.xlu0 %466
      %470 = vset.pattern.permute.xlu0 0
      %471 = vperm.xlu0 %470, %v385
      %v472 = vpop.permute.xlu0 %471
      %475 = vset.pattern.permute.xlu0 0
      %476 = vperm.xlu0 %475, %v386
      %v477 = vpop.permute.xlu0 %476
      %480 = vset.pattern.permute.xlu0 0
      %481 = vperm.xlu0 %480, %v387
      %v482 = vpop.permute.xlu0 %481
      %485 = vset.pattern.permute.xlu0 0
      %486 = vperm.xlu0 %485, %v388
      %v487 = vpop.permute.xlu0 %486
      %v489 = vmul.f32 %v349, %v392
      %v490 = vmul.f32 %v350, %v397
      %v491 = vmul.f32 %v351, %v402
      %v492 = vmul.f32 %v352, %v407
      %v493 = vmul.f32 %v353, %v412
      %v494 = vmul.f32 %v354, %v417
      %v495 = vmul.f32 %v355, %v422
      %v496 = vmul.f32 %v356, %v427
      %v497 = vmul.f32 %v357, %v432
      %v498 = vmul.f32 %v358, %v437
      %v499 = vmul.f32 %v359, %v442
      %v500 = vmul.f32 %v360, %v447
      %v501 = vmul.f32 %v361, %v452
      %v502 = vmul.f32 %v362, %v457
      %v503 = vmul.f32 %v363, %v462
      %v504 = vmul.f32 %v364, %v467
      %v505 = vmul.f32 %v365, %v472
      %v506 = vmul.f32 %v366, %v477
      %v507 = vmul.f32 %v367, %v482
      %v508 = vmul.f32 %v368, %v487
      %v509 = vpack.c.bf16 %v490, %v489
      %v510 = vpack.c.bf16 %v492, %v491
      %v511 = vpack.c.bf16 %v494, %v493
      %v512 = vpack.c.bf16 %v496, %v495
      %v513 = vpack.c.bf16 %v498, %v497
      %v514 = vpack.c.bf16 %v500, %v499
      %v515 = vpack.c.bf16 %v502, %v501
      %v516 = vpack.c.bf16 %v504, %v503
      %v517 = vpack.c.bf16 %v506, %v505
      %v518 = vpack.c.bf16 %v508, %v507
      %v519 = vld [vmem:[%s4] sm:$0xf]
      %v520 = vld [vmem:[%s4 + $0x4] sm:$0xf]
      %v521 = vld [vmem:[%s4 + $0x8] sm:$0xf]
      %v522 = vld [vmem:[%s4 + $0xc] sm:$0xf]
      %v523 = vld [vmem:[%s4 + $0x10] sm:$0xf]
      %v524 = vld [vmem:[%s4 + $0x14] sm:$0xf]
      %v525 = vld [vmem:[%s4 + $0x18] sm:$0xf]
      %v526 = vld [vmem:[%s4 + $0x1c] sm:$0xf]
      %v527 = vld [vmem:[%s4 + $0x20] sm:$0xf]
      %v528 = vld [vmem:[%s4 + $0x24] sm:$0xf]
      %v529 = vld [vmem:[%s4 + $0x28] sm:$0xf]
      %v530 = vld [vmem:[%s4 + $0x2c] sm:$0xf]
      %v531 = vld [vmem:[%s4 + $0x30] sm:$0xf]
      %v532 = vld [vmem:[%s4 + $0x34] sm:$0xf]
      %v533 = vld [vmem:[%s4 + $0x38] sm:$0xf]
      %v534 = vld [vmem:[%s4 + $0x3c] sm:$0xf]
      %v543 = vunpack.c.l.b16 %v509
      %v544 = vunpack.c.h.b16 %v509
      %v545 = vunpack.c.l.b16 %v510
      %v546 = vunpack.c.h.b16 %v510
      %v547 = vunpack.c.l.b16 %v511
      %v548 = vunpack.c.h.b16 %v511
      %v549 = vunpack.c.l.b16 %v512
      %v550 = vunpack.c.h.b16 %v512
      %v551 = vunpack.c.l.b16 %v513
      %v552 = vunpack.c.h.b16 %v513
      %v553 = vunpack.c.l.b16 %v514
      %v554 = vunpack.c.h.b16 %v514
      %v555 = vunpack.c.l.b16 %v515
      %v556 = vunpack.c.h.b16 %v515
      %v557 = vunpack.c.l.b16 %v516
      %v558 = vunpack.c.h.b16 %v516
      %v559 = vpack.c.b16 %v543, %v543
      %v560 = vpack.c.b16 %v544, %v544
      %v561 = vpack.c.b16 %v545, %v545
      %v562 = vpack.c.b16 %v546, %v546
      %v563 = vpack.c.b16 %v547, %v547
      %v564 = vpack.c.b16 %v548, %v548
      %v565 = vpack.c.b16 %v549, %v549
      %v566 = vpack.c.b16 %v550, %v550
      %v567 = vpack.c.b16 %v551, %v551
      %v568 = vpack.c.b16 %v552, %v552
      %v569 = vpack.c.b16 %v553, %v553
      %v570 = vpack.c.b16 %v554, %v554
      %v571 = vpack.c.b16 %v555, %v555
      %v572 = vpack.c.b16 %v556, %v556
      %v573 = vpack.c.b16 %v557, %v557
      %v574 = vpack.c.b16 %v558, %v558
      %vm575 = vsmask.f32 3328
      %vm576 = vsmask.f32 7440
      %vm577 = vmor %vm575, %vm576
      %v579 = vshrl.u32 %v559, 16
      %v581 = vrot.slane %v579, 4
      %v582 = vshll.u32 %v559, 16
      %v584 = vrot.slane %v582, 5
      %v585 = vor.u32 %v581, %v584
      %v586 = vrot.slane %v585, 4
      %v588 = vshll.u32 %v560, 16
      %v590 = vrot.slane %v588, 5
      %v591 = vsel %vm577, %v586, %v590
      %v593 = vshrl.u32 %v561, 16
      %v595 = vrot.slane %v593, 4
      %v596 = vshll.u32 %v561, 16
      %v598 = vrot.slane %v596, 5
      %v599 = vor.u32 %v595, %v598
      %v600 = vrot.slane %v599, 4
      %v602 = vshll.u32 %v562, 16
      %v604 = vrot.slane %v602, 5
      %v605 = vsel %vm577, %v600, %v604
      %v607 = vshrl.u32 %v563, 16
      %v609 = vrot.slane %v607, 4
      %v610 = vshll.u32 %v563, 16
      %v612 = vrot.slane %v610, 5
      %v613 = vor.u32 %v609, %v612
      %v614 = vrot.slane %v613, 4
      %v616 = vshll.u32 %v564, 16
      %v618 = vrot.slane %v616, 5
      %v619 = vsel %vm577, %v614, %v618
      %v621 = vshrl.u32 %v565, 16
      %v623 = vrot.slane %v621, 4
      %v624 = vshll.u32 %v565, 16
      %v626 = vrot.slane %v624, 5
      %v627 = vor.u32 %v623, %v626
      %v628 = vrot.slane %v627, 4
      %v630 = vshll.u32 %v566, 16
      %v632 = vrot.slane %v630, 5
      %v633 = vsel %vm577, %v628, %v632
      %v635 = vshrl.u32 %v567, 16
      %v637 = vrot.slane %v635, 4
      %v638 = vshll.u32 %v567, 16
      %v640 = vrot.slane %v638, 5
      %v641 = vor.u32 %v637, %v640
      %v642 = vrot.slane %v641, 4
      %v644 = vshll.u32 %v568, 16
      %v646 = vrot.slane %v644, 5
      %v647 = vsel %vm577, %v642, %v646
      %v649 = vshrl.u32 %v569, 16
      %v651 = vrot.slane %v649, 4
      %v652 = vshll.u32 %v569, 16
      %v654 = vrot.slane %v652, 5
      %v655 = vor.u32 %v651, %v654
      %v656 = vrot.slane %v655, 4
      %v658 = vshll.u32 %v570, 16
      %v660 = vrot.slane %v658, 5
      %v661 = vsel %vm577, %v656, %v660
      %v663 = vshrl.u32 %v571, 16
      %v665 = vrot.slane %v663, 4
      %v666 = vshll.u32 %v571, 16
      %v668 = vrot.slane %v666, 5
      %v669 = vor.u32 %v665, %v668
      %v670 = vrot.slane %v669, 4
      %v672 = vshll.u32 %v572, 16
      %v674 = vrot.slane %v672, 5
      %v675 = vsel %vm577, %v670, %v674
      %v677 = vshrl.u32 %v573, 16
      %v679 = vrot.slane %v677, 4
      %v680 = vshll.u32 %v573, 16
      %v682 = vrot.slane %v680, 5
      %v683 = vor.u32 %v679, %v682
      %v684 = vrot.slane %v683, 4
      %v686 = vshll.u32 %v574, 16
      %v688 = vrot.slane %v686, 5
      %v689 = vsel %vm577, %v684, %v688
      %s690 = scalar_lea.vmem %s4, 64
      %v691 = vld [vmem:[%s690] sm:$0xf]
      %v692 = vld [vmem:[%s690 + $0x4] sm:$0xf]
      %v693 = vld [vmem:[%s690 + $0x8] sm:$0xf]
      %v694 = vld [vmem:[%s690 + $0xc] sm:$0xf]
      %v695 = vld [vmem:[%s690 + $0x10] sm:$0xf]
      %v696 = vld [vmem:[%s690 + $0x14] sm:$0xf]
      %v697 = vld [vmem:[%s690 + $0x18] sm:$0xf]
      %v698 = vld [vmem:[%s690 + $0x1c] sm:$0xf]
      %v699 = vld [vmem:[%s690 + $0x20] sm:$0xf]
      %v700 = vld [vmem:[%s690 + $0x24] sm:$0xf]
      %v701 = vld [vmem:[%s690 + $0x28] sm:$0xf]
      %v702 = vld [vmem:[%s690 + $0x2c] sm:$0xf]
      %v703 = vld [vmem:[%s690 + $0x30] sm:$0xf]
      %v704 = vld [vmem:[%s690 + $0x34] sm:$0xf]
      %v705 = vld [vmem:[%s690 + $0x38] sm:$0xf]
      %v706 = vld [vmem:[%s690 + $0x3c] sm:$0xf]
      %v707 = vunpack.c.l.b16 %v591
      %v708 = vunpack.c.l.b16 %v605
      %v709 = vunpack.c.l.b16 %v619
      %v710 = vunpack.c.l.b16 %v633
      %v711 = vunpack.c.l.b16 %v647
      %v712 = vunpack.c.l.b16 %v661
      %v713 = vunpack.c.l.b16 %v675
      %v714 = vunpack.c.l.b16 %v689
      %v715 = vpack.c.b16 %v708, %v707
      %v716 = vpack.c.b16 %v710, %v709
      %v717 = vpack.c.b16 %v712, %v711
      %v718 = vpack.c.b16 %v714, %v713
      %v739 = vunpack.c.l.b16 %v691
      %v740 = vunpack.c.l.b16 %v692
      %v741 = vunpack.c.l.b16 %v693
      %v742 = vunpack.c.l.b16 %v694
      %v743 = vunpack.c.l.b16 %v695
      %v744 = vunpack.c.l.b16 %v696
      %v745 = vunpack.c.l.b16 %v697
      %v746 = vunpack.c.l.b16 %v698
      %v747 = vunpack.c.l.b16 %v699
      %v748 = vunpack.c.l.b16 %v700
      %v749 = vunpack.c.l.b16 %v701
      %v750 = vunpack.c.l.b16 %v702
      %v751 = vunpack.c.l.b16 %v703
      %v752 = vunpack.c.l.b16 %v704
      %v753 = vunpack.c.l.b16 %v705
      %v754 = vunpack.c.l.b16 %v706
      %v755 = vpack.c.b16 %v740, %v739
      %v756 = vpack.c.b16 %v742, %v741
      %v757 = vpack.c.b16 %v744, %v743
      %v758 = vpack.c.b16 %v746, %v745
      %v759 = vpack.c.b16 %v748, %v747
      %v760 = vpack.c.b16 %v750, %v749
      %v761 = vpack.c.b16 %v752, %v751
      %v762 = vpack.c.b16 %v754, %v753
      %771 = vmatprep.subr.bf16.mxu0 0
      %772 = vmatpush1.bf16.msra.mxu0 %v755
      %773 = vmatprep.subr.bf16.mxu0 0
      %774 = vmatpush1.bf16.msra.mxu0 %v756
      %775 = vmatprep.subr.bf16.mxu0 0
      %776 = vmatpush1.bf16.msra.mxu0 %v757
      %777 = vmatprep.subr.bf16.mxu0 0
      %778 = vmatpush1.bf16.msra.mxu0 %v758
      %779 = vmatprep.subr.bf16.mxu0 0
      %780 = vmatpush1.bf16.msra.mxu0 %v759
      %781 = vmatprep.subr.bf16.mxu0 0
      %782 = vmatpush1.bf16.msra.mxu0 %v760
      %783 = vmatprep.subr.bf16.mxu0 0
      %784 = vmatpush1.bf16.msra.mxu0 %v761
      %785 = vmatprep.subr.bf16.mxu0 0
      %786 = vmatpush1.bf16.msra.mxu0 %v762
      %787 = vmatprep.subr.bf16.mxu0 0
      %788 = vmatpush1.bf16.msra.mxu0 0
      %789 = vmatprep.subr.bf16.mxu0 0
      %790 = vmatpush1.bf16.msra.mxu0 0
      %791 = vmatprep.subr.bf16.mxu0 0
      %792 = vmatpush1.bf16.msra.mxu0 0
      %793 = vmatprep.subr.bf16.mxu0 0
      %794 = vmatpush1.bf16.msra.mxu0 0
      %795 = vmatprep.subr.bf16.mxu0 0
      %796 = vmatpush1.bf16.msra.mxu0 0
      %797 = vmatprep.subr.bf16.mxu0 0
      %798 = vmatpush1.bf16.msra.mxu0 0
      %799 = vmatprep.subr.bf16.mxu0 0
      %800 = vmatpush1.bf16.msra.mxu0 0
      %801 = vmatprep.subr.bf16.mxu0 0
      %802 = vmatpush1.bf16.msra.mxu0 0
      %803 = vmatprep.mubr.bf16.mxu0 0
      %804 = vmatmul.mubr.bf16.gmra.mrb[0].mxu0 %v715
      %v805 = vpop.f32.mrb[0].mxu0
      %v806 = vadd.f32 0.0, %v805
      %v807 = vpop.f32.mrb[0].mxu0
      %v808 = vpop.f32.mrb[0].mxu0
      %v809 = vadd.f32 0.0, %v808
      %v810 = vpop.f32.mrb[0].mxu0
      %811 = vmatprep.mubr.bf16.mxu0 0
      %812 = vmatmul.mubr.bf16.gmra.mrb[0].mxu0 %v716
      %v813 = vpop.f32.mrb[0].mxu0
      %v814 = vadd.f32 0.0, %v813
      %v815 = vpop.f32.mrb[0].mxu0
      %v816 = vpop.f32.mrb[0].mxu0
      %v817 = vadd.f32 0.0, %v816
      %v818 = vpop.f32.mrb[0].mxu0
      %819 = vmatprep.mubr.bf16.mxu0 0
      %820 = vmatmul.mubr.bf16.gmra.mrb[0].mxu0 %v717
      %v821 = vpop.f32.mrb[0].mxu0
      %v822 = vadd.f32 0.0, %v821
      %v823 = vpop.f32.mrb[0].mxu0
      %v824 = vpop.f32.mrb[0].mxu0
      %v825 = vadd.f32 0.0, %v824
      %v826 = vpop.f32.mrb[0].mxu0
      %827 = vmatprep.mubr.bf16.mxu0 0
      %828 = vmatmul.mubr.bf16.gmra.mrb[0].mxu0 %v718
      %v829 = vpop.f32.mrb[0].mxu0
      %v830 = vadd.f32 0.0, %v829
      %v831 = vpop.f32.mrb[0].mxu0
      %v832 = vpop.f32.mrb[0].mxu0
      %v833 = vadd.f32 0.0, %v832
      %v834 = vpop.f32.mrb[0].mxu0
      %835 = vdwg.mxu0
      %v836 = vpack.c.b16 %v545, %v543
      %v837 = vpack.c.b16 %v549, %v547
      %v838 = vpack.c.b16 %v553, %v551
      %v839 = vpack.c.b16 %v557, %v555
      %v860 = vunpack.c.l.b16 %v519
      %v861 = vunpack.c.l.b16 %v520
      %v862 = vunpack.c.l.b16 %v521
      %v863 = vunpack.c.l.b16 %v522
      %v864 = vunpack.c.l.b16 %v523
      %v865 = vunpack.c.l.b16 %v524
      %v866 = vunpack.c.l.b16 %v525
      %v867 = vunpack.c.l.b16 %v526
      %v868 = vunpack.c.l.b16 %v527
      %v869 = vunpack.c.l.b16 %v528
      %v870 = vunpack.c.l.b16 %v529
      %v871 = vunpack.c.l.b16 %v530
      %v872 = vunpack.c.l.b16 %v531
      %v873 = vunpack.c.l.b16 %v532
      %v874 = vunpack.c.l.b16 %v533
      %v875 = vunpack.c.l.b16 %v534
      %v876 = vpack.c.b16 %v861, %v860
      %v877 = vpack.c.b16 %v863, %v862
      %v878 = vpack.c.b16 %v865, %v864
      %v879 = vpack.c.b16 %v867, %v866
      %v880 = vpack.c.b16 %v869, %v868
      %v881 = vpack.c.b16 %v871, %v870
      %v882 = vpack.c.b16 %v873, %v872
      %v883 = vpack.c.b16 %v875, %v874
      %892 = vmatprep.subr.bf16.mxu0 0
      %893 = vmatpush1.bf16.msra.mxu0 %v876
      %894 = vmatprep.subr.bf16.mxu0 0
      %895 = vmatpush1.bf16.msra.mxu0 %v877
      %896 = vmatprep.subr.bf16.mxu0 0
      %897 = vmatpush1.bf16.msra.mxu0 %v878
      %898 = vmatprep.subr.bf16.mxu0 0
      %899 = vmatpush1.bf16.msra.mxu0 %v879
      %900 = vmatprep.subr.bf16.mxu0 0
      %901 = vmatpush1.bf16.msra.mxu0 %v880
      %902 = vmatprep.subr.bf16.mxu0 0
      %903 = vmatpush1.bf16.msra.mxu0 %v881
      %904 = vmatprep.subr.bf16.mxu0 0
      %905 = vmatpush1.bf16.msra.mxu0 %v882
      %906 = vmatprep.subr.bf16.mxu0 0
      %907 = vmatpush1.bf16.msra.mxu0 %v883
      %908 = vmatprep.subr.bf16.mxu0 0
      %909 = vmatpush1.bf16.msra.mxu0 0
      %910 = vmatprep.subr.bf16.mxu0 0
      %911 = vmatpush1.bf16.msra.mxu0 0
      %912 = vmatprep.subr.bf16.mxu0 0
      %913 = vmatpush1.bf16.msra.mxu0 0
      %914 = vmatprep.subr.bf16.mxu0 0
      %915 = vmatpush1.bf16.msra.mxu0 0
      %916 = vmatprep.subr.bf16.mxu0 0
      %917 = vmatpush1.bf16.msra.mxu0 0
      %918 = vmatprep.subr.bf16.mxu0 0
      %919 = vmatpush1.bf16.msra.mxu0 0
      %920 = vmatprep.subr.bf16.mxu0 0
      %921 = vmatpush1.bf16.msra.mxu0 0
      %922 = vmatprep.subr.bf16.mxu0 0
      %923 = vmatpush1.bf16.msra.mxu0 0
      %924 = vmatprep.mubr.bf16.mxu0 0
      %925 = vmatmul.mubr.bf16.gmra.mrb[0].mxu0 %v836
      %v926 = vpop.f32.mrb[0].mxu0
      %v927 = vadd.f32 %v806, %v926
      %v928 = vpop.f32.mrb[0].mxu0
      %v929 = vpop.f32.mrb[0].mxu0
      %v930 = vadd.f32 %v809, %v929
      %v931 = vpop.f32.mrb[0].mxu0
      %932 = vmatprep.mubr.bf16.mxu0 0
      %933 = vmatmul.mubr.bf16.gmra.mrb[0].mxu0 %v837
      %v934 = vpop.f32.mrb[0].mxu0
      %v935 = vadd.f32 %v814, %v934
      %v936 = vpop.f32.mrb[0].mxu0
      %v937 = vpop.f32.mrb[0].mxu0
      %v938 = vadd.f32 %v817, %v937
      %v939 = vpop.f32.mrb[0].mxu0
      %940 = vmatprep.mubr.bf16.mxu0 0
      %941 = vmatmul.mubr.bf16.gmra.mrb[0].mxu0 %v838
      %v942 = vpop.f32.mrb[0].mxu0
      %v943 = vadd.f32 %v822, %v942
      %v944 = vpop.f32.mrb[0].mxu0
      %v945 = vpop.f32.mrb[0].mxu0
      %v946 = vadd.f32 %v825, %v945
      %v947 = vpop.f32.mrb[0].mxu0
      %948 = vmatprep.mubr.bf16.mxu0 0
      %949 = vmatmul.mubr.bf16.gmra.mrb[0].mxu0 %v839
      %v950 = vpop.f32.mrb[0].mxu0
      %v951 = vadd.f32 %v830, %v950
      %v952 = vpop.f32.mrb[0].mxu0
      %v953 = vpop.f32.mrb[0].mxu0
      %v954 = vadd.f32 %v833, %v953
      %v955 = vpop.f32.mrb[0].mxu0
      %956 = vdwg.mxu0
      %vm957 = vcmask 1042432
      %vm958 = vcmask 1046532
      %vm959 = vmor %vm957, %vm958
      %v960 = vrot.slane %v559, 5
      %v961 = vrot.slane %v960, 4
      %v962 = vrot.slane %v560, 5
      %v963 = vsel %vm959, %v961, %v962
      %v964 = vrot.slane %v561, 5
      %v965 = vrot.slane %v964, 4
      %v966 = vrot.slane %v562, 5
      %v967 = vsel %vm959, %v965, %v966
      %v968 = vrot.slane %v563, 5
      %v969 = vrot.slane %v968, 4
      %v970 = vrot.slane %v564, 5
      %v971 = vsel %vm959, %v969, %v970
      %v972 = vrot.slane %v565, 5
      %v973 = vrot.slane %v972, 4
      %v974 = vrot.slane %v566, 5
      %v975 = vsel %vm959, %v973, %v974
      %v976 = vrot.slane %v567, 5
      %v977 = vrot.slane %v976, 4
      %v978 = vrot.slane %v568, 5
      %v979 = vsel %vm959, %v977, %v978
      %v980 = vrot.slane %v569, 5
      %v981 = vrot.slane %v980, 4
      %v982 = vrot.slane %v570, 5
      %v983 = vsel %vm959, %v981, %v982
      %v984 = vrot.slane %v571, 5
      %v985 = vrot.slane %v984, 4
      %v986 = vrot.slane %v572, 5
      %v987 = vsel %vm959, %v985, %v986
      %v988 = vrot.slane %v573, 5
      %v989 = vrot.slane %v988, 4
      %v990 = vrot.slane %v574, 5
      %v991 = vsel %vm959, %v989, %v990
      %s992 = scalar_lea.vmem %s4, 128
      %v993 = vld [vmem:[%s992] sm:$0xf]
      %v994 = vld [vmem:[%s992 + $0x4] sm:$0xf]
      %v995 = vld [vmem:[%s992 + $0x8] sm:$0xf]
      %v996 = vld [vmem:[%s992 + $0xc] sm:$0xf]
      %v997 = vld [vmem:[%s992 + $0x10] sm:$0xf]
      %v998 = vld [vmem:[%s992 + $0x14] sm:$0xf]
      %v999 = vld [vmem:[%s992 + $0x18] sm:$0xf]
      %v1000 = vld [vmem:[%s992 + $0x1c] sm:$0xf]
      %v1001 = vld [vmem:[%s992 + $0x20] sm:$0xf]
      %v1002 = vld [vmem:[%s992 + $0x24] sm:$0xf]
      %v1003 = vld [vmem:[%s992 + $0x28] sm:$0xf]
      %v1004 = vld [vmem:[%s992 + $0x2c] sm:$0xf]
      %v1005 = vld [vmem:[%s992 + $0x30] sm:$0xf]
      %v1006 = vld [vmem:[%s992 + $0x34] sm:$0xf]
      %v1007 = vld [vmem:[%s992 + $0x38] sm:$0xf]
      %v1008 = vld [vmem:[%s992 + $0x3c] sm:$0xf]
      %v1009 = vunpack.c.l.b16 %v963
      %v1010 = vunpack.c.l.b16 %v967
      %v1011 = vunpack.c.l.b16 %v971
      %v1012 = vunpack.c.l.b16 %v975
      %v1013 = vunpack.c.l.b16 %v979
      %v1014 = vunpack.c.l.b16 %v983
      %v1015 = vunpack.c.l.b16 %v987
      %v1016 = vunpack.c.l.b16 %v991
      %v1017 = vpack.c.b16 %v1010, %v1009
      %v1018 = vpack.c.b16 %v1012, %v1011
      %v1019 = vpack.c.b16 %v1014, %v1013
      %v1020 = vpack.c.b16 %v1016, %v1015
      %v1041 = vunpack.c.l.b16 %v993
      %v1042 = vunpack.c.l.b16 %v994
      %v1043 = vunpack.c.l.b16 %v995
      %v1044 = vunpack.c.l.b16 %v996
      %v1045 = vunpack.c.l.b16 %v997
      %v1046 = vunpack.c.l.b16 %v998
      %v1047 = vunpack.c.l.b16 %v999
      %v1048 = vunpack.c.l.b16 %v1000
      %v1049 = vunpack.c.l.b16 %v1001
      %v1050 = vunpack.c.l.b16 %v1002
      %v1051 = vunpack.c.l.b16 %v1003
      %v1052 = vunpack.c.l.b16 %v1004
      %v1053 = vunpack.c.l.b16 %v1005
      %v1054 = vunpack.c.l.b16 %v1006
      %v1055 = vunpack.c.l.b16 %v1007
      %v1056 = vunpack.c.l.b16 %v1008
      %v1057 = vpack.c.b16 %v1042, %v1041
      %v1058 = vpack.c.b16 %v1044, %v1043
      %v1059 = vpack.c.b16 %v1046, %v1045
      %v1060 = vpack.c.b16 %v1048, %v1047
      %v1061 = vpack.c.b16 %v1050, %v1049
      %v1062 = vpack.c.b16 %v1052, %v1051
      %v1063 = vpack.c.b16 %v1054, %v1053
      %v1064 = vpack.c.b16 %v1056, %v1055
      %1073 = vmatprep.subr.bf16.mxu0 0
      %1074 = vmatpush1.bf16.msra.mxu0 %v1057
      %1075 = vmatprep.subr.bf16.mxu0 0
      %1076 = vmatpush1.bf16.msra.mxu0 %v1058
      %1077 = vmatprep.subr.bf16.mxu0 0
      %1078 = vmatpush1.bf16.msra.mxu0 %v1059
      %1079 = vmatprep.subr.bf16.mxu0 0
      %1080 = vmatpush1.bf16.msra.mxu0 %v1060
      %1081 = vmatprep.subr.bf16.mxu0 0
      %1082 = vmatpush1.bf16.msra.mxu0 %v1061
      %1083 = vmatprep.subr.bf16.mxu0 0
      %1084 = vmatpush1.bf16.msra.mxu0 %v1062
      %1085 = vmatprep.subr.bf16.mxu0 0
      %1086 = vmatpush1.bf16.msra.mxu0 %v1063
      %1087 = vmatprep.subr.bf16.mxu0 0
      %1088 = vmatpush1.bf16.msra.mxu0 %v1064
      %1089 = vmatprep.subr.bf16.mxu0 0
      %1090 = vmatpush1.bf16.msra.mxu0 0
      %1091 = vmatprep.subr.bf16.mxu0 0
      %1092 = vmatpush1.bf16.msra.mxu0 0
      %1093 = vmatprep.subr.bf16.mxu0 0
      %1094 = vmatpush1.bf16.msra.mxu0 0
      %1095 = vmatprep.subr.bf16.mxu0 0
      %1096 = vmatpush1.bf16.msra.mxu0 0
      %1097 = vmatprep.subr.bf16.mxu0 0
      %1098 = vmatpush1.bf16.msra.mxu0 0
      %1099 = vmatprep.subr.bf16.mxu0 0
      %1100 = vmatpush1.bf16.msra.mxu0 0
      %1101 = vmatprep.subr.bf16.mxu0 0
      %1102 = vmatpush1.bf16.msra.mxu0 0
      %1103 = vmatprep.subr.bf16.mxu0 0
      %1104 = vmatpush1.bf16.msra.mxu0 0
      %1105 = vmatprep.mubr.bf16.mxu0 0
      %1106 = vmatmul.mubr.bf16.gmra.mrb[0].mxu0 %v1017
      %v1107 = vpop.f32.mrb[0].mxu0
      %v1108 = vadd.f32 0.0, %v1107
      %v1109 = vpop.f32.mrb[0].mxu0
      %v1110 = vpop.f32.mrb[0].mxu0
      %v1111 = vadd.f32 0.0, %v1110
      %v1112 = vpop.f32.mrb[0].mxu0
      %1113 = vmatprep.mubr.bf16.mxu0 0
      %1114 = vmatmul.mubr.bf16.gmra.mrb[0].mxu0 %v1018
      %v1115 = vpop.f32.mrb[0].mxu0
      %v1116 = vadd.f32 0.0, %v1115
      %v1117 = vpop.f32.mrb[0].mxu0
      %v1118 = vpop.f32.mrb[0].mxu0
      %v1119 = vadd.f32 0.0, %v1118
      %v1120 = vpop.f32.mrb[0].mxu0
      %1121 = vmatprep.mubr.bf16.mxu0 0
      %1122 = vmatmul.mubr.bf16.gmra.mrb[0].mxu0 %v1019
      %v1123 = vpop.f32.mrb[0].mxu0
      %v1124 = vadd.f32 0.0, %v1123
      %v1125 = vpop.f32.mrb[0].mxu0
      %v1126 = vpop.f32.mrb[0].mxu0
      %v1127 = vadd.f32 0.0, %v1126
      %v1128 = vpop.f32.mrb[0].mxu0
      %1129 = vmatprep.mubr.bf16.mxu0 0
      %1130 = vmatmul.mubr.bf16.gmra.mrb[0].mxu0 %v1020
      %v1131 = vpop.f32.mrb[0].mxu0
      %v1132 = vadd.f32 0.0, %v1131
      %v1133 = vpop.f32.mrb[0].mxu0
      %v1134 = vpop.f32.mrb[0].mxu0
      %v1135 = vadd.f32 0.0, %v1134
      %v1136 = vpop.f32.mrb[0].mxu0
      %1137 = vdwg.mxu0
      %v1138 = vadd.f32 %v927, %v1108
      %v1139 = vadd.f32 %v930, %v1111
      %v1140 = vadd.f32 %v935, %v1116
      %v1141 = vadd.f32 %v938, %v1119
      %v1142 = vadd.f32 %v943, %v1124
      %v1143 = vadd.f32 %v946, %v1127
      %v1144 = vadd.f32 %v951, %v1132
      %v1145 = vadd.f32 %v954, %v1135
      %s1146 = scalar_lea.vmem %s4, 192
      %v1147 = vld [vmem:[%s1146] sm:$0xf]
      %v1148 = vld [vmem:[%s1146 + $0x4] sm:$0xf]
      %v1149 = vld [vmem:[%s1146 + $0x8] sm:$0xf]
      %v1150 = vld [vmem:[%s1146 + $0xc] sm:$0xf]
      %v1151 = vld [vmem:[%s1146 + $0x10] sm:$0xf]
      %v1152 = vld [vmem:[%s1146 + $0x14] sm:$0xf]
      %v1153 = vld [vmem:[%s1146 + $0x18] sm:$0xf]
      %v1154 = vld [vmem:[%s1146 + $0x1c] sm:$0xf]
      %v1155 = vld [vmem:[%s1146 + $0x20] sm:$0xf]
      %v1156 = vld [vmem:[%s1146 + $0x24] sm:$0xf]
      %v1157 = vld [vmem:[%s1146 + $0x28] sm:$0xf]
      %v1158 = vld [vmem:[%s1146 + $0x2c] sm:$0xf]
      %v1159 = vld [vmem:[%s1146 + $0x30] sm:$0xf]
      %v1160 = vld [vmem:[%s1146 + $0x34] sm:$0xf]
      %v1161 = vld [vmem:[%s1146 + $0x38] sm:$0xf]
      %v1162 = vld [vmem:[%s1146 + $0x3c] sm:$0xf]
      %v1164 = vunpack.c.l.b16 %v517
      %v1165 = vpack.c.b16 %v547, %v545
      %v1166 = vpack.c.b16 %v551, %v549
      %v1167 = vpack.c.b16 %v555, %v553
      %v1168 = vpack.c.b16 %v1164, %v557
      %v1189 = vunpack.c.l.b16 %v1147
      %v1190 = vunpack.c.l.b16 %v1148
      %v1191 = vunpack.c.l.b16 %v1149
      %v1192 = vunpack.c.l.b16 %v1150
      %v1193 = vunpack.c.l.b16 %v1151
      %v1194 = vunpack.c.l.b16 %v1152
      %v1195 = vunpack.c.l.b16 %v1153
      %v1196 = vunpack.c.l.b16 %v1154
      %v1197 = vunpack.c.l.b16 %v1155
      %v1198 = vunpack.c.l.b16 %v1156
      %v1199 = vunpack.c.l.b16 %v1157
      %v1200 = vunpack.c.l.b16 %v1158
      %v1201 = vunpack.c.l.b16 %v1159
      %v1202 = vunpack.c.l.b16 %v1160
      %v1203 = vunpack.c.l.b16 %v1161
      %v1204 = vunpack.c.l.b16 %v1162
      %v1205 = vpack.c.b16 %v1190, %v1189
      %v1206 = vpack.c.b16 %v1192, %v1191
      %v1207 = vpack.c.b16 %v1194, %v1193
      %v1208 = vpack.c.b16 %v1196, %v1195
      %v1209 = vpack.c.b16 %v1198, %v1197
      %v1210 = vpack.c.b16 %v1200, %v1199
      %v1211 = vpack.c.b16 %v1202, %v1201
      %v1212 = vpack.c.b16 %v1204, %v1203
      %1221 = vmatprep.subr.bf16.mxu0 0
      %1222 = vmatpush1.bf16.msra.mxu0 %v1205
      %1223 = vmatprep.subr.bf16.mxu0 0
      %1224 = vmatpush1.bf16.msra.mxu0 %v1206
      %1225 = vmatprep.subr.bf16.mxu0 0
      %1226 = vmatpush1.bf16.msra.mxu0 %v1207
      %1227 = vmatprep.subr.bf16.mxu0 0
      %1228 = vmatpush1.bf16.msra.mxu0 %v1208
      %1229 = vmatprep.subr.bf16.mxu0 0
      %1230 = vmatpush1.bf16.msra.mxu0 %v1209
      %1231 = vmatprep.subr.bf16.mxu0 0
      %1232 = vmatpush1.bf16.msra.mxu0 %v1210
      %1233 = vmatprep.subr.bf16.mxu0 0
      %1234 = vmatpush1.bf16.msra.mxu0 %v1211
      %1235 = vmatprep.subr.bf16.mxu0 0
      %1236 = vmatpush1.bf16.msra.mxu0 %v1212
      %1237 = vmatprep.subr.bf16.mxu0 0
      %1238 = vmatpush1.bf16.msra.mxu0 0
      %1239 = vmatprep.subr.bf16.mxu0 0
      %1240 = vmatpush1.bf16.msra.mxu0 0
      %1241 = vmatprep.subr.bf16.mxu0 0
      %1242 = vmatpush1.bf16.msra.mxu0 0
      %1243 = vmatprep.subr.bf16.mxu0 0
      %1244 = vmatpush1.bf16.msra.mxu0 0
      %1245 = vmatprep.subr.bf16.mxu0 0
      %1246 = vmatpush1.bf16.msra.mxu0 0
      %1247 = vmatprep.subr.bf16.mxu0 0
      %1248 = vmatpush1.bf16.msra.mxu0 0
      %1249 = vmatprep.subr.bf16.mxu0 0
      %1250 = vmatpush1.bf16.msra.mxu0 0
      %1251 = vmatprep.subr.bf16.mxu0 0
      %1252 = vmatpush1.bf16.msra.mxu0 0
      %1253 = vmatprep.mubr.bf16.mxu0 0
      %1254 = vmatmul.mubr.bf16.gmra.mrb[0].mxu0 %v1165
      %v1255 = vpop.f32.mrb[0].mxu0
      %v1256 = vadd.f32 0.0, %v1255
      %v1257 = vpop.f32.mrb[0].mxu0
      %v1258 = vpop.f32.mrb[0].mxu0
      %v1259 = vadd.f32 0.0, %v1258
      %v1260 = vpop.f32.mrb[0].mxu0
      %1261 = vmatprep.mubr.bf16.mxu0 0
      %1262 = vmatmul.mubr.bf16.gmra.mrb[0].mxu0 %v1166
      %v1263 = vpop.f32.mrb[0].mxu0
      %v1264 = vadd.f32 0.0, %v1263
      %v1265 = vpop.f32.mrb[0].mxu0
      %v1266 = vpop.f32.mrb[0].mxu0
      %v1267 = vadd.f32 0.0, %v1266
      %v1268 = vpop.f32.mrb[0].mxu0
      %1269 = vmatprep.mubr.bf16.mxu0 0
      %1270 = vmatmul.mubr.bf16.gmra.mrb[0].mxu0 %v1167
      %v1271 = vpop.f32.mrb[0].mxu0
      %v1272 = vadd.f32 0.0, %v1271
      %v1273 = vpop.f32.mrb[0].mxu0
      %v1274 = vpop.f32.mrb[0].mxu0
      %v1275 = vadd.f32 0.0, %v1274
      %v1276 = vpop.f32.mrb[0].mxu0
      %1277 = vmatprep.mubr.bf16.mxu0 0
      %1278 = vmatmul.mubr.bf16.gmra.mrb[0].mxu0 %v1168
      %v1279 = vpop.f32.mrb[0].mxu0
      %v1280 = vadd.f32 0.0, %v1279
      %v1281 = vpop.f32.mrb[0].mxu0
      %v1282 = vpop.f32.mrb[0].mxu0
      %v1283 = vadd.f32 0.0, %v1282
      %v1284 = vpop.f32.mrb[0].mxu0
      %1285 = vdwg.mxu0
      %v1286 = vadd.f32 %v1138, %v1256
      %v1287 = vadd.f32 %v1139, %v1259
      %v1288 = vadd.f32 %v1140, %v1264
      %v1289 = vadd.f32 %v1141, %v1267
      %v1290 = vadd.f32 %v1142, %v1272
      %v1291 = vadd.f32 %v1143, %v1275
      %v1292 = vadd.f32 %v1144, %v1280
      %v1293 = vadd.f32 %v1145, %v1283
      %v1294 = vunpack.c.h.b16 %v517
      %v1295 = vpack.c.b16 %v1164, %v1164
      %v1296 = vpack.c.b16 %v1294, %v1294
      %v1298 = vshrl.u32 %v1295, 16
      %v1300 = vrot.slane %v1298, 4
      %v1301 = vshll.u32 %v1295, 16
      %v1303 = vrot.slane %v1301, 5
      %v1304 = vor.u32 %v1300, %v1303
      %v1305 = vrot.slane %v1304, 4
      %v1307 = vshll.u32 %v1296, 16
      %v1309 = vrot.slane %v1307, 5
      %v1310 = vsel %vm577, %v1305, %v1309
      %s1311 = scalar_lea.vmem %s4, 256
      %v1312 = vld [vmem:[%s1311] sm:$0xf]
      %v1313 = vld [vmem:[%s1311 + $0x4] sm:$0xf]
      %v1314 = vld [vmem:[%s1311 + $0x8] sm:$0xf]
      %v1315 = vld [vmem:[%s1311 + $0xc] sm:$0xf]
      %v1316 = vld [vmem:[%s1311 + $0x10] sm:$0xf]
      %v1317 = vld [vmem:[%s1311 + $0x14] sm:$0xf]
      %v1318 = vld [vmem:[%s1311 + $0x18] sm:$0xf]
      %v1319 = vld [vmem:[%s1311 + $0x1c] sm:$0xf]
      %v1320 = vld [vmem:[%s1311 + $0x20] sm:$0xf]
      %v1321 = vld [vmem:[%s1311 + $0x24] sm:$0xf]
      %v1322 = vld [vmem:[%s1311 + $0x28] sm:$0xf]
      %v1323 = vld [vmem:[%s1311 + $0x2c] sm:$0xf]
      %v1324 = vld [vmem:[%s1311 + $0x30] sm:$0xf]
      %v1325 = vld [vmem:[%s1311 + $0x34] sm:$0xf]
      %v1326 = vld [vmem:[%s1311 + $0x38] sm:$0xf]
      %v1327 = vld [vmem:[%s1311 + $0x3c] sm:$0xf]
      %v1328 = vunpack.c.l.b16 %v1310
      %v1329 = vpack.c.b16 %v709, %v708
      %v1330 = vpack.c.b16 %v711, %v710
      %v1331 = vpack.c.b16 %v713, %v712
      %v1332 = vpack.c.b16 %v1328, %v714
      %v1353 = vunpack.c.l.b16 %v1312
      %v1354 = vunpack.c.l.b16 %v1313
      %v1355 = vunpack.c.l.b16 %v1314
      %v1356 = vunpack.c.l.b16 %v1315
      %v1357 = vunpack.c.l.b16 %v1316
      %v1358 = vunpack.c.l.b16 %v1317
      %v1359 = vunpack.c.l.b16 %v1318
      %v1360 = vunpack.c.l.b16 %v1319
      %v1361 = vunpack.c.l.b16 %v1320
      %v1362 = vunpack.c.l.b16 %v1321
      %v1363 = vunpack.c.l.b16 %v1322
      %v1364 = vunpack.c.l.b16 %v1323
      %v1365 = vunpack.c.l.b16 %v1324
      %v1366 = vunpack.c.l.b16 %v1325
      %v1367 = vunpack.c.l.b16 %v1326
      %v1368 = vunpack.c.l.b16 %v1327
      %v1369 = vpack.c.b16 %v1354, %v1353
      %v1370 = vpack.c.b16 %v1356, %v1355
      %v1371 = vpack.c.b16 %v1358, %v1357
      %v1372 = vpack.c.b16 %v1360, %v1359
      %v1373 = vpack.c.b16 %v1362, %v1361
      %v1374 = vpack.c.b16 %v1364, %v1363
      %v1375 = vpack.c.b16 %v1366, %v1365
      %v1376 = vpack.c.b16 %v1368, %v1367
      %1385 = vmatprep.subr.bf16.mxu0 0
      %1386 = vmatpush1.bf16.msra.mxu0 %v1369
      %1387 = vmatprep.subr.bf16.mxu0 0
      %1388 = vmatpush1.bf16.msra.mxu0 %v1370
      %1389 = vmatprep.subr.bf16.mxu0 0
      %1390 = vmatpush1.bf16.msra.mxu0 %v1371
      %1391 = vmatprep.subr.bf16.mxu0 0
      %1392 = vmatpush1.bf16.msra.mxu0 %v1372
      %1393 = vmatprep.subr.bf16.mxu0 0
      %1394 = vmatpush1.bf16.msra.mxu0 %v1373
      %1395 = vmatprep.subr.bf16.mxu0 0
      %1396 = vmatpush1.bf16.msra.mxu0 %v1374
      %1397 = vmatprep.subr.bf16.mxu0 0
      %1398 = vmatpush1.bf16.msra.mxu0 %v1375
      %1399 = vmatprep.subr.bf16.mxu0 0
      %1400 = vmatpush1.bf16.msra.mxu0 %v1376
      %1401 = vmatprep.subr.bf16.mxu0 0
      %1402 = vmatpush1.bf16.msra.mxu0 0
      %1403 = vmatprep.subr.bf16.mxu0 0
      %1404 = vmatpush1.bf16.msra.mxu0 0
      %1405 = vmatprep.subr.bf16.mxu0 0
      %1406 = vmatpush1.bf16.msra.mxu0 0
      %1407 = vmatprep.subr.bf16.mxu0 0
      %1408 = vmatpush1.bf16.msra.mxu0 0
      %1409 = vmatprep.subr.bf16.mxu0 0
      %1410 = vmatpush1.bf16.msra.mxu0 0
      %1411 = vmatprep.subr.bf16.mxu0 0
      %1412 = vmatpush1.bf16.msra.mxu0 0
      %1413 = vmatprep.subr.bf16.mxu0 0
      %1414 = vmatpush1.bf16.msra.mxu0 0
      %1415 = vmatprep.subr.bf16.mxu0 0
      %1416 = vmatpush1.bf16.msra.mxu0 0
      %1417 = vmatprep.mubr.bf16.mxu0 0
      %1418 = vmatmul.mubr.bf16.gmra.mrb[0].mxu0 %v1329
      %v1419 = vpop.f32.mrb[0].mxu0
      %v1420 = vadd.f32 0.0, %v1419
      %v1421 = vpop.f32.mrb[0].mxu0
      %v1422 = vpop.f32.mrb[0].mxu0
      %v1423 = vadd.f32 0.0, %v1422
      %v1424 = vpop.f32.mrb[0].mxu0
      %1425 = vmatprep.mubr.bf16.mxu0 0
      %1426 = vmatmul.mubr.bf16.gmra.mrb[0].mxu0 %v1330
      %v1427 = vpop.f32.mrb[0].mxu0
      %v1428 = vadd.f32 0.0, %v1427
      %v1429 = vpop.f32.mrb[0].mxu0
      %v1430 = vpop.f32.mrb[0].mxu0
      %v1431 = vadd.f32 0.0, %v1430
      %v1432 = vpop.f32.mrb[0].mxu0
      %1433 = vmatprep.mubr.bf16.mxu0 0
      %1434 = vmatmul.mubr.bf16.gmra.mrb[0].mxu0 %v1331
      %v1435 = vpop.f32.mrb[0].mxu0
      %v1436 = vadd.f32 0.0, %v1435
      %v1437 = vpop.f32.mrb[0].mxu0
      %v1438 = vpop.f32.mrb[0].mxu0
      %v1439 = vadd.f32 0.0, %v1438
      %v1440 = vpop.f32.mrb[0].mxu0
      %1441 = vmatprep.mubr.bf16.mxu0 0
      %1442 = vmatmul.mubr.bf16.gmra.mrb[0].mxu0 %v1332
      %v1443 = vpop.f32.mrb[0].mxu0
      %v1444 = vadd.f32 0.0, %v1443
      %v1445 = vpop.f32.mrb[0].mxu0
      %v1446 = vpop.f32.mrb[0].mxu0
      %v1447 = vadd.f32 0.0, %v1446
      %v1448 = vpop.f32.mrb[0].mxu0
      %1449 = vdwg.mxu0
      %v1450 = vadd.f32 %v1286, %v1420
      %v1451 = vadd.f32 %v1287, %v1423
      %v1452 = vadd.f32 %v1288, %v1428
      %v1453 = vadd.f32 %v1289, %v1431
      %v1454 = vadd.f32 %v1290, %v1436
      %v1455 = vadd.f32 %v1291, %v1439
      %v1456 = vadd.f32 %v1292, %v1444
      %v1457 = vadd.f32 %v1293, %v1447
      %v1458 = vrot.slane %v1295, 5
      %v1459 = vrot.slane %v1458, 4
      %v1460 = vrot.slane %v1296, 5
      %v1461 = vsel %vm959, %v1459, %v1460
      %s1462 = scalar_lea.vmem %s4, 320
      %v1463 = vld [vmem:[%s1462] sm:$0xf]
      %v1464 = vld [vmem:[%s1462 + $0x4] sm:$0xf]
      %v1465 = vld [vmem:[%s1462 + $0x8] sm:$0xf]
      %v1466 = vld [vmem:[%s1462 + $0xc] sm:$0xf]
      %v1467 = vld [vmem:[%s1462 + $0x10] sm:$0xf]
      %v1468 = vld [vmem:[%s1462 + $0x14] sm:$0xf]
      %v1469 = vld [vmem:[%s1462 + $0x18] sm:$0xf]
      %v1470 = vld [vmem:[%s1462 + $0x1c] sm:$0xf]
      %v1471 = vld [vmem:[%s1462 + $0x20] sm:$0xf]
      %v1472 = vld [vmem:[%s1462 + $0x24] sm:$0xf]
      %v1473 = vld [vmem:[%s1462 + $0x28] sm:$0xf]
      %v1474 = vld [vmem:[%s1462 + $0x2c] sm:$0xf]
      %v1475 = vld [vmem:[%s1462 + $0x30] sm:$0xf]
      %v1476 = vld [vmem:[%s1462 + $0x34] sm:$0xf]
      %v1477 = vld [vmem:[%s1462 + $0x38] sm:$0xf]
      %v1478 = vld [vmem:[%s1462 + $0x3c] sm:$0xf]
      %v1479 = vunpack.c.l.b16 %v1461
      %v1480 = vpack.c.b16 %v1011, %v1010
      %v1481 = vpack.c.b16 %v1013, %v1012
      %v1482 = vpack.c.b16 %v1015, %v1014
      %v1483 = vpack.c.b16 %v1479, %v1016
      %v1504 = vunpack.c.l.b16 %v1463
      %v1505 = vunpack.c.l.b16 %v1464
      %v1506 = vunpack.c.l.b16 %v1465
      %v1507 = vunpack.c.l.b16 %v1466
      %v1508 = vunpack.c.l.b16 %v1467
      %v1509 = vunpack.c.l.b16 %v1468
      %v1510 = vunpack.c.l.b16 %v1469
      %v1511 = vunpack.c.l.b16 %v1470
      %v1512 = vunpack.c.l.b16 %v1471
      %v1513 = vunpack.c.l.b16 %v1472
      %v1514 = vunpack.c.l.b16 %v1473
      %v1515 = vunpack.c.l.b16 %v1474
      %v1516 = vunpack.c.l.b16 %v1475
      %v1517 = vunpack.c.l.b16 %v1476
      %v1518 = vunpack.c.l.b16 %v1477
      %v1519 = vunpack.c.l.b16 %v1478
      %v1520 = vpack.c.b16 %v1505, %v1504
      %v1521 = vpack.c.b16 %v1507, %v1506
      %v1522 = vpack.c.b16 %v1509, %v1508
      %v1523 = vpack.c.b16 %v1511, %v1510
      %v1524 = vpack.c.b16 %v1513, %v1512
      %v1525 = vpack.c.b16 %v1515, %v1514
      %v1526 = vpack.c.b16 %v1517, %v1516
      %v1527 = vpack.c.b16 %v1519, %v1518
      %1536 = vmatprep.subr.bf16.mxu0 0
      %1537 = vmatpush1.bf16.msra.mxu0 %v1520
      %1538 = vmatprep.subr.bf16.mxu0 0
      %1539 = vmatpush1.bf16.msra.mxu0 %v1521
      %1540 = vmatprep.subr.bf16.mxu0 0
      %1541 = vmatpush1.bf16.msra.mxu0 %v1522
      %1542 = vmatprep.subr.bf16.mxu0 0
      %1543 = vmatpush1.bf16.msra.mxu0 %v1523
      %1544 = vmatprep.subr.bf16.mxu0 0
      %1545 = vmatpush1.bf16.msra.mxu0 %v1524
      %1546 = vmatprep.subr.bf16.mxu0 0
      %1547 = vmatpush1.bf16.msra.mxu0 %v1525
      %1548 = vmatprep.subr.bf16.mxu0 0
      %1549 = vmatpush1.bf16.msra.mxu0 %v1526
      %1550 = vmatprep.subr.bf16.mxu0 0
      %1551 = vmatpush1.bf16.msra.mxu0 %v1527
      %1552 = vmatprep.subr.bf16.mxu0 0
      %1553 = vmatpush1.bf16.msra.mxu0 0
      %1554 = vmatprep.subr.bf16.mxu0 0
      %1555 = vmatpush1.bf16.msra.mxu0 0
      %1556 = vmatprep.subr.bf16.mxu0 0
      %1557 = vmatpush1.bf16.msra.mxu0 0
      %1558 = vmatprep.subr.bf16.mxu0 0
      %1559 = vmatpush1.bf16.msra.mxu0 0
      %1560 = vmatprep.subr.bf16.mxu0 0
      %1561 = vmatpush1.bf16.msra.mxu0 0
      %1562 = vmatprep.subr.bf16.mxu0 0
      %1563 = vmatpush1.bf16.msra.mxu0 0
      %1564 = vmatprep.subr.bf16.mxu0 0
      %1565 = vmatpush1.bf16.msra.mxu0 0
      %1566 = vmatprep.subr.bf16.mxu0 0
      %1567 = vmatpush1.bf16.msra.mxu0 0
      %1568 = vmatprep.mubr.bf16.mxu0 0
      %1569 = vmatmul.mubr.bf16.gmra.mrb[0].mxu0 %v1480
      %v1570 = vpop.f32.mrb[0].mxu0
      %v1571 = vadd.f32 0.0, %v1570
      %v1572 = vpop.f32.mrb[0].mxu0
      %v1573 = vpop.f32.mrb[0].mxu0
      %v1574 = vadd.f32 0.0, %v1573
      %v1575 = vpop.f32.mrb[0].mxu0
      %1576 = vmatprep.mubr.bf16.mxu0 0
      %1577 = vmatmul.mubr.bf16.gmra.mrb[0].mxu0 %v1481
      %v1578 = vpop.f32.mrb[0].mxu0
      %v1579 = vadd.f32 0.0, %v1578
      %v1580 = vpop.f32.mrb[0].mxu0
      %v1581 = vpop.f32.mrb[0].mxu0
      %v1582 = vadd.f32 0.0, %v1581
      %v1583 = vpop.f32.mrb[0].mxu0
      %1584 = vmatprep.mubr.bf16.mxu0 0
      %1585 = vmatmul.mubr.bf16.gmra.mrb[0].mxu0 %v1482
      %v1586 = vpop.f32.mrb[0].mxu0
      %v1587 = vadd.f32 0.0, %v1586
      %v1588 = vpop.f32.mrb[0].mxu0
      %v1589 = vpop.f32.mrb[0].mxu0
      %v1590 = vadd.f32 0.0, %v1589
      %v1591 = vpop.f32.mrb[0].mxu0
      %1592 = vmatprep.mubr.bf16.mxu0 0
      %1593 = vmatmul.mubr.bf16.gmra.mrb[0].mxu0 %v1483
      %v1594 = vpop.f32.mrb[0].mxu0
      %v1595 = vadd.f32 0.0, %v1594
      %v1596 = vpop.f32.mrb[0].mxu0
      %v1597 = vpop.f32.mrb[0].mxu0
      %v1598 = vadd.f32 0.0, %v1597
      %v1599 = vpop.f32.mrb[0].mxu0
      %1600 = vdwg.mxu0
      %v1601 = vadd.f32 %v1450, %v1571
      %v1602 = vadd.f32 %v1451, %v1574
      %v1603 = vadd.f32 %v1452, %v1579
      %v1604 = vadd.f32 %v1453, %v1582
      %v1605 = vadd.f32 %v1454, %v1587
      %v1606 = vadd.f32 %v1455, %v1590
      %v1607 = vadd.f32 %v1456, %v1595
      %v1608 = vadd.f32 %v1457, %v1598
      %s1609 = scalar_lea.vmem %s4, 384
      %v1610 = vld [vmem:[%s1609] sm:$0xf]
      %v1611 = vld [vmem:[%s1609 + $0x4] sm:$0xf]
      %v1612 = vld [vmem:[%s1609 + $0x8] sm:$0xf]
      %v1613 = vld [vmem:[%s1609 + $0xc] sm:$0xf]
      %v1614 = vld [vmem:[%s1609 + $0x10] sm:$0xf]
      %v1615 = vld [vmem:[%s1609 + $0x14] sm:$0xf]
      %v1616 = vld [vmem:[%s1609 + $0x18] sm:$0xf]
      %v1617 = vld [vmem:[%s1609 + $0x1c] sm:$0xf]
      %v1618 = vld [vmem:[%s1609 + $0x20] sm:$0xf]
      %v1619 = vld [vmem:[%s1609 + $0x24] sm:$0xf]
      %v1620 = vld [vmem:[%s1609 + $0x28] sm:$0xf]
      %v1621 = vld [vmem:[%s1609 + $0x2c] sm:$0xf]
      %v1622 = vld [vmem:[%s1609 + $0x30] sm:$0xf]
      %v1623 = vld [vmem:[%s1609 + $0x34] sm:$0xf]
      %v1624 = vld [vmem:[%s1609 + $0x38] sm:$0xf]
      %v1625 = vld [vmem:[%s1609 + $0x3c] sm:$0xf]
      %v1627 = vunpack.c.l.b16 %v518
      %v1628 = vpack.c.b16 %v1627, %v1164
      %v1646 = vunpack.c.l.b16 %v1610
      %v1647 = vunpack.c.l.b16 %v1611
      %v1648 = vunpack.c.l.b16 %v1612
      %v1649 = vunpack.c.l.b16 %v1613
      %v1650 = vunpack.c.l.b16 %v1614
      %v1651 = vunpack.c.l.b16 %v1615
      %v1652 = vunpack.c.l.b16 %v1616
      %v1653 = vunpack.c.l.b16 %v1617
      %v1654 = vunpack.c.l.b16 %v1618
      %v1655 = vunpack.c.l.b16 %v1619
      %v1656 = vunpack.c.l.b16 %v1620
      %v1657 = vunpack.c.l.b16 %v1621
      %v1658 = vunpack.c.l.b16 %v1622
      %v1659 = vunpack.c.l.b16 %v1623
      %v1660 = vunpack.c.l.b16 %v1624
      %v1661 = vunpack.c.l.b16 %v1625
      %v1662 = vpack.c.b16 %v1647, %v1646
      %v1663 = vpack.c.b16 %v1649, %v1648
      %v1664 = vpack.c.b16 %v1651, %v1650
      %v1665 = vpack.c.b16 %v1653, %v1652
      %v1666 = vpack.c.b16 %v1655, %v1654
      %v1667 = vpack.c.b16 %v1657, %v1656
      %v1668 = vpack.c.b16 %v1659, %v1658
      %v1669 = vpack.c.b16 %v1661, %v1660
      %1678 = vmatprep.subr.bf16.mxu0 0
      %1679 = vmatpush1.bf16.msra.mxu0 %v1662
      %1680 = vmatprep.subr.bf16.mxu0 0
      %1681 = vmatpush1.bf16.msra.mxu0 %v1663
      %1682 = vmatprep.subr.bf16.mxu0 0
      %1683 = vmatpush1.bf16.msra.mxu0 %v1664
      %1684 = vmatprep.subr.bf16.mxu0 0
      %1685 = vmatpush1.bf16.msra.mxu0 %v1665
      %1686 = vmatprep.subr.bf16.mxu0 0
      %1687 = vmatpush1.bf16.msra.mxu0 %v1666
      %1688 = vmatprep.subr.bf16.mxu0 0
      %1689 = vmatpush1.bf16.msra.mxu0 %v1667
      %1690 = vmatprep.subr.bf16.mxu0 0
      %1691 = vmatpush1.bf16.msra.mxu0 %v1668
      %1692 = vmatprep.subr.bf16.mxu0 0
      %1693 = vmatpush1.bf16.msra.mxu0 %v1669
      %1694 = vmatprep.subr.bf16.mxu0 0
      %1695 = vmatpush1.bf16.msra.mxu0 0
      %1696 = vmatprep.subr.bf16.mxu0 0
      %1697 = vmatpush1.bf16.msra.mxu0 0
      %1698 = vmatprep.subr.bf16.mxu0 0
      %1699 = vmatpush1.bf16.msra.mxu0 0
      %1700 = vmatprep.subr.bf16.mxu0 0
      %1701 = vmatpush1.bf16.msra.mxu0 0
      %1702 = vmatprep.subr.bf16.mxu0 0
      %1703 = vmatpush1.bf16.msra.mxu0 0
      %1704 = vmatprep.subr.bf16.mxu0 0
      %1705 = vmatpush1.bf16.msra.mxu0 0
      %1706 = vmatprep.subr.bf16.mxu0 0
      %1707 = vmatpush1.bf16.msra.mxu0 0
      %1708 = vmatprep.subr.bf16.mxu0 0
      %1709 = vmatpush1.bf16.msra.mxu0 0
      %1710 = vmatprep.mubr.bf16.mxu0 0
      %1711 = vmatmul.mubr.bf16.gmra.mrb[0].mxu0 %v837
      %v1712 = vpop.f32.mrb[0].mxu0
      %v1713 = vadd.f32 0.0, %v1712
      %v1714 = vpop.f32.mrb[0].mxu0
      %v1715 = vpop.f32.mrb[0].mxu0
      %v1716 = vadd.f32 0.0, %v1715
      %v1717 = vpop.f32.mrb[0].mxu0
      %1718 = vmatprep.mubr.bf16.mxu0 0
      %1719 = vmatmul.mubr.bf16.gmra.mrb[0].mxu0 %v838
      %v1720 = vpop.f32.mrb[0].mxu0
      %v1721 = vadd.f32 0.0, %v1720
      %v1722 = vpop.f32.mrb[0].mxu0
      %v1723 = vpop.f32.mrb[0].mxu0
      %v1724 = vadd.f32 0.0, %v1723
      %v1725 = vpop.f32.mrb[0].mxu0
      %1726 = vmatprep.mubr.bf16.mxu0 0
      %1727 = vmatmul.mubr.bf16.gmra.mrb[0].mxu0 %v839
      %v1728 = vpop.f32.mrb[0].mxu0
      %v1729 = vadd.f32 0.0, %v1728
      %v1730 = vpop.f32.mrb[0].mxu0
      %v1731 = vpop.f32.mrb[0].mxu0
      %v1732 = vadd.f32 0.0, %v1731
      %v1733 = vpop.f32.mrb[0].mxu0
      %1734 = vmatprep.mubr.bf16.mxu0 0
      %1735 = vmatmul.mubr.bf16.gmra.mrb[0].mxu0 %v1628
      %v1736 = vpop.f32.mrb[0].mxu0
      %v1737 = vadd.f32 0.0, %v1736
      %v1738 = vpop.f32.mrb[0].mxu0
      %v1739 = vpop.f32.mrb[0].mxu0
      %v1740 = vadd.f32 0.0, %v1739
      %v1741 = vpop.f32.mrb[0].mxu0
      %1742 = vdwg.mxu0
      %v1743 = vadd.f32 %v1601, %v1713
      %v1744 = vadd.f32 %v1602, %v1716
      %v1745 = vadd.f32 %v1603, %v1721
      %v1746 = vadd.f32 %v1604, %v1724
      %v1747 = vadd.f32 %v1605, %v1729
      %v1748 = vadd.f32 %v1606, %v1732
      %v1749 = vadd.f32 %v1607, %v1737
      %v1750 = vadd.f32 %v1608, %v1740
      %v1751 = vunpack.c.h.b16 %v518
      %v1752 = vpack.c.b16 %v1627, %v1627
      %v1753 = vpack.c.b16 %v1751, %v1751
      %v1755 = vshrl.u32 %v1752, 16
      %v1757 = vrot.slane %v1755, 4
      %v1758 = vshll.u32 %v1752, 16
      %v1760 = vrot.slane %v1758, 5
      %v1761 = vor.u32 %v1757, %v1760
      %v1762 = vrot.slane %v1761, 4
      %v1764 = vshll.u32 %v1753, 16
      %v1766 = vrot.slane %v1764, 5
      %v1767 = vsel %vm577, %v1762, %v1766
      %s1768 = scalar_lea.vmem %s4, 448
      %v1769 = vld [vmem:[%s1768] sm:$0xf]
      %v1770 = vld [vmem:[%s1768 + $0x4] sm:$0xf]
      %v1771 = vld [vmem:[%s1768 + $0x8] sm:$0xf]
      %v1772 = vld [vmem:[%s1768 + $0xc] sm:$0xf]
      %v1773 = vld [vmem:[%s1768 + $0x10] sm:$0xf]
      %v1774 = vld [vmem:[%s1768 + $0x14] sm:$0xf]
      %v1775 = vld [vmem:[%s1768 + $0x18] sm:$0xf]
      %v1776 = vld [vmem:[%s1768 + $0x1c] sm:$0xf]
      %v1777 = vld [vmem:[%s1768 + $0x20] sm:$0xf]
      %v1778 = vld [vmem:[%s1768 + $0x24] sm:$0xf]
      %v1779 = vld [vmem:[%s1768 + $0x28] sm:$0xf]
      %v1780 = vld [vmem:[%s1768 + $0x2c] sm:$0xf]
      %v1781 = vld [vmem:[%s1768 + $0x30] sm:$0xf]
      %v1782 = vld [vmem:[%s1768 + $0x34] sm:$0xf]
      %v1783 = vld [vmem:[%s1768 + $0x38] sm:$0xf]
      %v1784 = vld [vmem:[%s1768 + $0x3c] sm:$0xf]
      %v1785 = vunpack.c.l.b16 %v1767
      %v1786 = vpack.c.b16 %v1785, %v1328
      %v1804 = vunpack.c.l.b16 %v1769
      %v1805 = vunpack.c.l.b16 %v1770
      %v1806 = vunpack.c.l.b16 %v1771
      %v1807 = vunpack.c.l.b16 %v1772
      %v1808 = vunpack.c.l.b16 %v1773
      %v1809 = vunpack.c.l.b16 %v1774
      %v1810 = vunpack.c.l.b16 %v1775
      %v1811 = vunpack.c.l.b16 %v1776
      %v1812 = vunpack.c.l.b16 %v1777
      %v1813 = vunpack.c.l.b16 %v1778
      %v1814 = vunpack.c.l.b16 %v1779
      %v1815 = vunpack.c.l.b16 %v1780
      %v1816 = vunpack.c.l.b16 %v1781
      %v1817 = vunpack.c.l.b16 %v1782
      %v1818 = vunpack.c.l.b16 %v1783
      %v1819 = vunpack.c.l.b16 %v1784
      %v1820 = vpack.c.b16 %v1805, %v1804
      %v1821 = vpack.c.b16 %v1807, %v1806
      %v1822 = vpack.c.b16 %v1809, %v1808
      %v1823 = vpack.c.b16 %v1811, %v1810
      %v1824 = vpack.c.b16 %v1813, %v1812
      %v1825 = vpack.c.b16 %v1815, %v1814
      %v1826 = vpack.c.b16 %v1817, %v1816
      %v1827 = vpack.c.b16 %v1819, %v1818
      %1836 = vmatprep.subr.bf16.mxu0 0
      %1837 = vmatpush1.bf16.msra.mxu0 %v1820
      %1838 = vmatprep.subr.bf16.mxu0 0
      %1839 = vmatpush1.bf16.msra.mxu0 %v1821
      %1840 = vmatprep.subr.bf16.mxu0 0
      %1841 = vmatpush1.bf16.msra.mxu0 %v1822
      %1842 = vmatprep.subr.bf16.mxu0 0
      %1843 = vmatpush1.bf16.msra.mxu0 %v1823
      %1844 = vmatprep.subr.bf16.mxu0 0
      %1845 = vmatpush1.bf16.msra.mxu0 %v1824
      %1846 = vmatprep.subr.bf16.mxu0 0
      %1847 = vmatpush1.bf16.msra.mxu0 %v1825
      %1848 = vmatprep.subr.bf16.mxu0 0
      %1849 = vmatpush1.bf16.msra.mxu0 %v1826
      %1850 = vmatprep.subr.bf16.mxu0 0
      %1851 = vmatpush1.bf16.msra.mxu0 %v1827
      %1852 = vmatprep.subr.bf16.mxu0 0
      %1853 = vmatpush1.bf16.msra.mxu0 0
      %1854 = vmatprep.subr.bf16.mxu0 0
      %1855 = vmatpush1.bf16.msra.mxu0 0
      %1856 = vmatprep.subr.bf16.mxu0 0
      %1857 = vmatpush1.bf16.msra.mxu0 0
      %1858 = vmatprep.subr.bf16.mxu0 0
      %1859 = vmatpush1.bf16.msra.mxu0 0
      %1860 = vmatprep.subr.bf16.mxu0 0
      %1861 = vmatpush1.bf16.msra.mxu0 0
      %1862 = vmatprep.subr.bf16.mxu0 0
      %1863 = vmatpush1.bf16.msra.mxu0 0
      %1864 = vmatprep.subr.bf16.mxu0 0
      %1865 = vmatpush1.bf16.msra.mxu0 0
      %1866 = vmatprep.subr.bf16.mxu0 0
      %1867 = vmatpush1.bf16.msra.mxu0 0
      %1868 = vmatprep.mubr.bf16.mxu0 0
      %1869 = vmatmul.mubr.bf16.gmra.mrb[0].mxu0 %v716
      %v1870 = vpop.f32.mrb[0].mxu0
      %v1871 = vadd.f32 0.0, %v1870
      %v1872 = vpop.f32.mrb[0].mxu0
      %v1873 = vpop.f32.mrb[0].mxu0
      %v1874 = vadd.f32 0.0, %v1873
      %v1875 = vpop.f32.mrb[0].mxu0
      %1876 = vmatprep.mubr.bf16.mxu0 0
      %1877 = vmatmul.mubr.bf16.gmra.mrb[0].mxu0 %v717
      %v1878 = vpop.f32.mrb[0].mxu0
      %v1879 = vadd.f32 0.0, %v1878
      %v1880 = vpop.f32.mrb[0].mxu0
      %v1881 = vpop.f32.mrb[0].mxu0
      %v1882 = vadd.f32 0.0, %v1881
      %v1883 = vpop.f32.mrb[0].mxu0
      %1884 = vmatprep.mubr.bf16.mxu0 0
      %1885 = vmatmul.mubr.bf16.gmra.mrb[0].mxu0 %v718
      %v1886 = vpop.f32.mrb[0].mxu0
      %v1887 = vadd.f32 0.0, %v1886
      %v1888 = vpop.f32.mrb[0].mxu0
      %v1889 = vpop.f32.mrb[0].mxu0
      %v1890 = vadd.f32 0.0, %v1889
      %v1891 = vpop.f32.mrb[0].mxu0
      %1892 = vmatprep.mubr.bf16.mxu0 0
      %1893 = vmatmul.mubr.bf16.gmra.mrb[0].mxu0 %v1786
      %v1894 = vpop.f32.mrb[0].mxu0
      %v1895 = vadd.f32 0.0, %v1894
      %v1896 = vpop.f32.mrb[0].mxu0
      %v1897 = vpop.f32.mrb[0].mxu0
      %v1898 = vadd.f32 0.0, %v1897
      %v1899 = vpop.f32.mrb[0].mxu0
      %1900 = vdwg.mxu0
      %v1901 = vadd.f32 %v1743, %v1871
      %v1902 = vadd.f32 %v1744, %v1874
      %v1903 = vadd.f32 %v1745, %v1879
      %v1904 = vadd.f32 %v1746, %v1882
      %v1905 = vadd.f32 %v1747, %v1887
      %v1906 = vadd.f32 %v1748, %v1890
      %v1907 = vadd.f32 %v1749, %v1895
      %v1908 = vadd.f32 %v1750, %v1898
      %v1909 = vrot.slane %v1752, 5
      %v1910 = vrot.slane %v1909, 4
      %v1911 = vrot.slane %v1753, 5
      %v1912 = vsel %vm959, %v1910, %v1911
      %s1913 = scalar_lea.vmem %s4, 512
      %v1914 = vld [vmem:[%s1913] sm:$0xf]
      %v1915 = vld [vmem:[%s1913 + $0x4] sm:$0xf]
      %v1916 = vld [vmem:[%s1913 + $0x8] sm:$0xf]
      %v1917 = vld [vmem:[%s1913 + $0xc] sm:$0xf]
      %v1918 = vld [vmem:[%s1913 + $0x10] sm:$0xf]
      %v1919 = vld [vmem:[%s1913 + $0x14] sm:$0xf]
      %v1920 = vld [vmem:[%s1913 + $0x18] sm:$0xf]
      %v1921 = vld [vmem:[%s1913 + $0x1c] sm:$0xf]
      %v1922 = vld [vmem:[%s1913 + $0x20] sm:$0xf]
      %v1923 = vld [vmem:[%s1913 + $0x24] sm:$0xf]
      %v1924 = vld [vmem:[%s1913 + $0x28] sm:$0xf]
      %v1925 = vld [vmem:[%s1913 + $0x2c] sm:$0xf]
      %v1926 = vld [vmem:[%s1913 + $0x30] sm:$0xf]
      %v1927 = vld [vmem:[%s1913 + $0x34] sm:$0xf]
      %v1928 = vld [vmem:[%s1913 + $0x38] sm:$0xf]
      %v1929 = vld [vmem:[%s1913 + $0x3c] sm:$0xf]
      %v1930 = vunpack.c.l.b16 %v1912
      %v1931 = vpack.c.b16 %v1930, %v1479
      %v1949 = vunpack.c.l.b16 %v1914
      %v1950 = vunpack.c.l.b16 %v1915
      %v1951 = vunpack.c.l.b16 %v1916
      %v1952 = vunpack.c.l.b16 %v1917
      %v1953 = vunpack.c.l.b16 %v1918
      %v1954 = vunpack.c.l.b16 %v1919
      %v1955 = vunpack.c.l.b16 %v1920
      %v1956 = vunpack.c.l.b16 %v1921
      %v1957 = vunpack.c.l.b16 %v1922
      %v1958 = vunpack.c.l.b16 %v1923
      %v1959 = vunpack.c.l.b16 %v1924
      %v1960 = vunpack.c.l.b16 %v1925
      %v1961 = vunpack.c.l.b16 %v1926
      %v1962 = vunpack.c.l.b16 %v1927
      %v1963 = vunpack.c.l.b16 %v1928
      %v1964 = vunpack.c.l.b16 %v1929
      %v1965 = vpack.c.b16 %v1950, %v1949
      %v1966 = vpack.c.b16 %v1952, %v1951
      %v1967 = vpack.c.b16 %v1954, %v1953
      %v1968 = vpack.c.b16 %v1956, %v1955
      %v1969 = vpack.c.b16 %v1958, %v1957
      %v1970 = vpack.c.b16 %v1960, %v1959
      %v1971 = vpack.c.b16 %v1962, %v1961
      %v1972 = vpack.c.b16 %v1964, %v1963
      %1981 = vmatprep.subr.bf16.mxu0 0
      %1982 = vmatpush1.bf16.msra.mxu0 %v1965
      %1983 = vmatprep.subr.bf16.mxu0 0
      %1984 = vmatpush1.bf16.msra.mxu0 %v1966
      %1985 = vmatprep.subr.bf16.mxu0 0
      %1986 = vmatpush1.bf16.msra.mxu0 %v1967
      %1987 = vmatprep.subr.bf16.mxu0 0
      %1988 = vmatpush1.bf16.msra.mxu0 %v1968
      %1989 = vmatprep.subr.bf16.mxu0 0
      %1990 = vmatpush1.bf16.msra.mxu0 %v1969
      %1991 = vmatprep.subr.bf16.mxu0 0
      %1992 = vmatpush1.bf16.msra.mxu0 %v1970
      %1993 = vmatprep.subr.bf16.mxu0 0
      %1994 = vmatpush1.bf16.msra.mxu0 %v1971
      %1995 = vmatprep.subr.bf16.mxu0 0
      %1996 = vmatpush1.bf16.msra.mxu0 %v1972
      %1997 = vmatprep.subr.bf16.mxu0 0
      %1998 = vmatpush1.bf16.msra.mxu0 0
      %1999 = vmatprep.subr.bf16.mxu0 0
      %2000 = vmatpush1.bf16.msra.mxu0 0
      %2001 = vmatprep.subr.bf16.mxu0 0
      %2002 = vmatpush1.bf16.msra.mxu0 0
      %2003 = vmatprep.subr.bf16.mxu0 0
      %2004 = vmatpush1.bf16.msra.mxu0 0
      %2005 = vmatprep.subr.bf16.mxu0 0
      %2006 = vmatpush1.bf16.msra.mxu0 0
      %2007 = vmatprep.subr.bf16.mxu0 0
      %2008 = vmatpush1.bf16.msra.mxu0 0
      %2009 = vmatprep.subr.bf16.mxu0 0
      %2010 = vmatpush1.bf16.msra.mxu0 0
      %2011 = vmatprep.subr.bf16.mxu0 0
      %2012 = vmatpush1.bf16.msra.mxu0 0
      %2013 = vmatprep.mubr.bf16.mxu0 0
      %2014 = vmatmul.mubr.bf16.gmra.mrb[0].mxu0 %v1018
      %v2015 = vpop.f32.mrb[0].mxu0
      %v2016 = vadd.f32 0.0, %v2015
      %v2017 = vpop.f32.mrb[0].mxu0
      %v2018 = vpop.f32.mrb[0].mxu0
      %v2019 = vadd.f32 0.0, %v2018
      %v2020 = vpop.f32.mrb[0].mxu0
      %2021 = vmatprep.mubr.bf16.mxu0 0
      %2022 = vmatmul.mubr.bf16.gmra.mrb[0].mxu0 %v1019
      %v2023 = vpop.f32.mrb[0].mxu0
      %v2024 = vadd.f32 0.0, %v2023
      %v2025 = vpop.f32.mrb[0].mxu0
      %v2026 = vpop.f32.mrb[0].mxu0
      %v2027 = vadd.f32 0.0, %v2026
      %v2028 = vpop.f32.mrb[0].mxu0
      %2029 = vmatprep.mubr.bf16.mxu0 0
      %2030 = vmatmul.mubr.bf16.gmra.mrb[0].mxu0 %v1020
      %v2031 = vpop.f32.mrb[0].mxu0
      %v2032 = vadd.f32 0.0, %v2031
      %v2033 = vpop.f32.mrb[0].mxu0
      %v2034 = vpop.f32.mrb[0].mxu0
      %v2035 = vadd.f32 0.0, %v2034
      %v2036 = vpop.f32.mrb[0].mxu0
      %2037 = vmatprep.mubr.bf16.mxu0 0
      %2038 = vmatmul.mubr.bf16.gmra.mrb[0].mxu0 %v1931
      %v2039 = vpop.f32.mrb[0].mxu0
      %v2040 = vadd.f32 0.0, %v2039
      %v2041 = vpop.f32.mrb[0].mxu0
      %v2042 = vpop.f32.mrb[0].mxu0
      %v2043 = vadd.f32 0.0, %v2042
      %v2044 = vpop.f32.mrb[0].mxu0
      %2045 = vdwg.mxu0
      %v2046 = vadd.f32 %v1901, %v2016
      %v2047 = vadd.f32 %v1902, %v2019
      %v2048 = vadd.f32 %v1903, %v2024
      %v2049 = vadd.f32 %v1904, %v2027
      %v2050 = vadd.f32 %v1905, %v2032
      %v2051 = vadd.f32 %v1906, %v2035
      %v2052 = vadd.f32 %v1907, %v2040
      %v2053 = vadd.f32 %v1908, %v2043
      %2054 = vst [vmem:[%s273] sm:$0xff] %v2046
      %2055 = vst [vmem:[%s273 + $0x8] sm:$0xff] %v2047
      %2056 = vst [vmem:[%s273 + $0x10] sm:$0xff] %v2048
      %2057 = vst [vmem:[%s273 + $0x18] sm:$0xff] %v2049
      %2058 = vst [vmem:[%s273 + $0x20] sm:$0xff] %v2050
      %2059 = vst [vmem:[%s273 + $0x28] sm:$0xff] %v2051
      %2060 = vst [vmem:[%s273 + $0x30] sm:$0xff] %v2052
      %2061 = vst [vmem:[%s273 + $0x38] sm:$0xff] %v2053
      %p2062 = scmp.eq.s32.totalorder %s19, 0
      // Predicated region
      $region41: #{resnet_block_forward.5} parent=39 // pred_check
        %p2063 = pneg %p2062
      $region42: #{resnet_block_forward.5} parent=39 // pred_check_branch
        %2065 = sbr.rel (%p2063) target = $region44
      $region43: #{resnet_block_forward.5} parent=39 // pred_region
        %2066 = vst [vmem:[%s6] sm:$0x1] 0.0
        %2067 = vst [vmem:[%s7] sm:$0x1] 0.0
      $region44: #{resnet_block_forward.5} parent=39 // pred_fallthru
        _
      %v2068 = vld [vmem:[%s6] sm:$0x1]
      %v2069 = vadd.f32 %v2046, %v2047
      %v2070 = vadd.f32 %v2069, %v2048
      %v2071 = vadd.f32 %v2070, %v2049
      %v2072 = vadd.f32 %v2071, %v2050
      %v2073 = vadd.f32 %v2072, %v2051
      %v2074 = vadd.f32 %v2073, %v2052
      %v2075 = vadd.f32 %v2074, %v2053
      %v2076 = vrot.slane %v2075, 4
      %v2077 = vadd.f32 %v2075, %v2076
      %v2078 = vrot.slane %v2077, 2
      %v2079 = vadd.f32 %v2077, %v2078
      %v2080 = vrot.slane %v2079, 1
      %v2081 = vadd.f32 %v2079, %v2080
      %v2082 = vadd.f32 %v2068, %v2081
      %2083 = vst [vmem:[%s6] sm:$0x1] %v2082
      %v2084 = vld [vmem:[%s7] sm:$0x1]
      %v2085 = vmul.f32 %v2046, %v2046
      %v2086 = vmul.f32 %v2047, %v2047
      %v2087 = vmul.f32 %v2048, %v2048
      %v2088 = vmul.f32 %v2049, %v2049
      %v2089 = vmul.f32 %v2050, %v2050
      %v2090 = vmul.f32 %v2051, %v2051
      %v2091 = vmul.f32 %v2052, %v2052
      %v2092 = vmul.f32 %v2053, %v2053
      %v2093 = vadd.f32 %v2085, %v2086
      %v2094 = vadd.f32 %v2093, %v2087
      %v2095 = vadd.f32 %v2094, %v2088
      %v2096 = vadd.f32 %v2095, %v2089
      %v2097 = vadd.f32 %v2096, %v2090
      %v2098 = vadd.f32 %v2097, %v2091
      %v2099 = vadd.f32 %v2098, %v2092
      %v2100 = vrot.slane %v2099, 4
      %v2101 = vadd.f32 %v2099, %v2100
      %v2102 = vrot.slane %v2101, 2
      %v2103 = vadd.f32 %v2101, %v2102
      %v2104 = vrot.slane %v2103, 1
      %v2105 = vadd.f32 %v2103, %v2104
      %v2106 = vadd.f32 %v2084, %v2105
      %2107 = vst [vmem:[%s7] sm:$0x1] %v2106
      %p2108 = scmp.lt.s32.totalorder %s19, 1
      %s2109 = scalar_select %p2108, %s19, 1
      %s2110 = smul.addr %s2109, 8
      %s2111 = smul.addr %s2110, 8
      %s2112 = scalar_lea.vmem %s5, %s2111
      // Predicated region
      $region45: #{resnet_block_forward.5} parent=39 // pred_check
        %p2113 = pneg %p147
      $region46: #{resnet_block_forward.5} parent=39 // pred_check_branch
        %2115 = sbr.rel (%p2113) target = $region48
      $region47: #{resnet_block_forward.5} parent=39 // pred_region
        _
      $region48: #{resnet_block_forward.5} parent=39 // pred_fallthru
        _
      // Predicated region
      $region49: #{resnet_block_forward.5} parent=39 // pred_check
        %p2116 = pneg %p168
      $region50: #{resnet_block_forward.5} parent=39 // pred_check_branch
        %2118 = sbr.rel (%p2116) target = $region52
      $region51: #{resnet_block_forward.5} parent=39 // pred_region
        _
      $region52: #{resnet_block_forward.5} parent=39 // pred_fallthru
        _
      // Predicated region
      $region53: #{resnet_block_forward.5} parent=39 // pred_check
        %p2119 = pneg %p189
      $region54: #{resnet_block_forward.5} parent=39 // pred_check_branch
        %2121 = sbr.rel (%p2119) target = $region56
      $region55: #{resnet_block_forward.5} parent=39 // pred_region
        _
      $region56: #{resnet_block_forward.5} parent=39 // pred_fallthru
        _
      // Predicated region
      $region57: #{resnet_block_forward.5} parent=39 // pred_check
        %p2122 = pneg %p168
      $region58: #{resnet_block_forward.5} parent=39 // pred_check_branch
        %2124 = sbr.rel (%p2122) target = $region60
      $region59: #{resnet_block_forward.5} parent=39 // pred_region
        _
      $region60: #{resnet_block_forward.5} parent=39 // pred_fallthru
        _
      // Predicated region
      $region61: #{resnet_block_forward.5} parent=39 // pred_check
        %p2125 = pneg %p189
      $region62: #{resnet_block_forward.5} parent=39 // pred_check_branch
        %2127 = sbr.rel (%p2125) target = $region64
      $region63: #{resnet_block_forward.5} parent=39 // pred_region
        _
      $region64: #{resnet_block_forward.5} parent=39 // pred_fallthru
        _
    $region40: #{resnet_block_forward.5} parent=5 // pred_fallthru
      _
    %p2128 = scmp.le.s32.totalorder 2, %s14
    // Predicated region
    $region65: #{resnet_block_forward.5} parent=5 // pred_check
      %p2129 = pneg %p2128
    $region66: #{resnet_block_forward.5} parent=5 // pred_check_branch
      %2131 = sbr.rel (%p2129) target = $region68
    $region67: #{resnet_block_forward.5} parent=5 // pred_region
      %s2132 = ssub.s32 %s14, 2
      // Predicated region
      $region69: #{resnet_block_forward.5} parent=67 // pred_check
        %p2133 = pneg %p153
      $region70: #{resnet_block_forward.5} parent=67 // pred_check_branch
        %2135 = sbr.rel (%p2133) target = $region72
      $region71: #{resnet_block_forward.5} parent=67 // pred_region
        %p2136 = scmp.lt.s32.totalorder %s20, 1
        %s2137 = scalar_select %p2136, %s20, 1
        %s2138 = smul.addr %s2137, 8
        %s2139 = smul.addr %s2138, 8
        %s2140 = scalar_lea.vmem %s5, %s2139
      $region72: #{resnet_block_forward.5} parent=67 // pred_fallthru
        _
    $region68: #{resnet_block_forward.5} parent=5 // pred_fallthru
      _
  $region6: #{resnet_block_forward.5} parent=0 // loop_footer
    %s18 = sadd.s32 1, %s14
  $region7: #{resnet_block_forward.5} parent=0 // loop_footer_branch
    %13 = sbr.rel target = $region3
  $region8: #{resnet_block_forward.5} parent=0 // loop_exit
    _

</llo_original>
